<compile_context>
chip_gen: v7x
topology: tpu7x:2x2x1
jax: 0.10.0
libtpu: 0.0.40
codegen_flags: <defaults>
</compile_context>

<pallas_src>
import jax
import jax.numpy as jnp
from jax import lax
from jax.experimental import pallas as pl
from jax.experimental.pallas import tpu as pltpu

# ---------------- synthetic "bert_config" (small) ----------------
VOCAB = 100
TYPE_VOCAB = 2
MAX_POS = 64
HIDDEN = 32
N_HEADS = 2
HEAD_DIM = HIDDEN // N_HEADS
INTERMEDIATE = 64
N_LAYERS = 2
NUM_LABELS = 3
LN_EPS = 1e-12
ATTN_SCALE = 1.0 / (HEAD_DIM ** 0.5)

_VMEM = pl.BlockSpec(memory_space=pltpu.MemorySpace.VMEM)


# ---------------- in-kernel helpers (traced inside the fused kernel) ----------------
def _layernorm(x, g, b):
    mu = jnp.mean(x, axis=-1, keepdims=True)
    xc = x - mu
    var = jnp.mean(xc * xc, axis=-1, keepdims=True)
    return xc * lax.rsqrt(var + LN_EPS) * g + b


def _gelu(x):  # exact (erf) GELU, as in BERT — keeps reference semantics
    return 0.5 * x * (1.0 + lax.erf(x * jnp.float32(0.7071067811865476)))


# ---------------- fused forward kernel ----------------
def _bert_fused_kernel(
    x_ref, mask_ref,
    emb_g_ref, emb_b_ref,
    wqkv_ref, bqkv_ref, wo_ref, bo_ref, ln1g_ref, ln1b_ref,
    wi_ref, bi_ref, wf_ref, bf_ref, ln2g_ref, ln2b_ref,
    pool_w_ref, pool_b_ref, cls_w_ref, cls_b_ref,
    o_ref,
):
    B, _, S = mask_ref.shape

    # Hoisted: broadcast the additive mask ONCE (JAX does not CSE broadcast_in_dim, so doing
    # this inside the per-layer/per-head loop would emit N_LAYERS*N_HEADS broadcasts).
    mask = jnp.broadcast_to(mask_ref[...], (B, S, S))               # (B, S, S) additive

    # Embedding LayerNorm (no residual -> no zero slab materialized / DMA'd).
    x = _layernorm(x_ref[...], emb_g_ref[...], emb_b_ref[...])      # (B*S, H) f32

    for l in range(N_LAYERS):
        # ---- fused QKV projection: single (H, 3H) MXU matmul.  ATTN_SCALE is already folded
        #      into the Q columns of wqkv / bqkv host-side, so no score scaling below. ----
        qkv = jnp.dot(x, wqkv_ref[l], preferred_element_type=jnp.float32) + bqkv_ref[l]

        # ---- attention per head; contexts stay in vregs, merged by a lane-concat (no scratch,
        #      no masked partial stores, no VMEM round-trip before the wo matmul). ----
        ctx_parts = []
        for h in range(N_HEADS):
            q = qkv[:, h * HEAD_DIM:(h + 1) * HEAD_DIM].reshape(B, S, HEAD_DIM)
            k = qkv[:, HIDDEN + h * HEAD_DIM:HIDDEN + (h + 1) * HEAD_DIM].reshape(B, S, HEAD_DIM)
            v = qkv[:, 2 * HIDDEN + h * HEAD_DIM:2 * HIDDEN + (h + 1) * HEAD_DIM].reshape(B, S, HEAD_DIM)

            s = jnp.einsum("bqd,bkd->bqk", q, k, preferred_element_type=jnp.float32) + mask
            m = jnp.max(s, axis=-1, keepdims=True)
            p = jnp.exp(s - m)
            # After max-subtraction at least one term is exp(0)=1, so the denominator is >= 1
            # even for a fully-masked row -> approx (EUP) reciprocal is safe.
            p = p * pl.reciprocal(jnp.sum(p, axis=-1, keepdims=True), approx=True)
            ctx = jnp.einsum("bqk,bkd->bqd", p, v, preferred_element_type=jnp.float32)
            ctx_parts.append(ctx.reshape(B * S, HEAD_DIM))
        ctx_all = jnp.concatenate(ctx_parts, axis=-1)               # (B*S, H), in vregs

        # ---- attn-out projection + residual + LayerNorm ----
        attn_out = jnp.dot(ctx_all, wo_ref[l], preferred_element_type=jnp.float32) + bo_ref[l]
        x = _layernorm(attn_out + x, ln1g_ref[l], ln1b_ref[l])

        # ---- FFN (wi + GELU + wf) + residual + LayerNorm, intermediate stays in vregs ----
        inter = _gelu(jnp.dot(x, wi_ref[l], preferred_element_type=jnp.float32) + bi_ref[l])
        ffn = jnp.dot(inter, wf_ref[l], preferred_element_type=jnp.float32) + bf_ref[l]
        x = _layernorm(ffn + x, ln2g_ref[l], ln2b_ref[l])

    # ---- pooler: CLS token (token 0 per sequence), dense + tanh ----
    cls = x.reshape(B, S, HIDDEN)[:, 0, :]                          # (B, H)
    pooled = jnp.tanh(
        jnp.dot(cls, pool_w_ref[...], preferred_element_type=jnp.float32) + pool_b_ref[...])

    # Dropout(p=0) is identity.  Classifier + softmax over labels (exact division for accuracy).
    logits = jnp.dot(pooled, cls_w_ref[...], preferred_element_type=jnp.float32) + cls_b_ref[...]
    m = jnp.max(logits, axis=-1, keepdims=True)
    e = jnp.exp(logits - m)
    o_ref[...] = (e / jnp.sum(e, axis=-1, keepdims=True)).astype(o_ref.dtype)


# ---------------- deterministic parameter init (synthetic, no checkpoint) ----------------
def init_params(key):
    def nrm(k, shape):
        return 0.02 * jax.random.normal(k, shape, dtype=jnp.float32)

    keys = iter(jax.random.split(key, 16 * N_LAYERS + 16))
    p = {
        "word_emb": nrm(next(keys), (VOCAB, HIDDEN)),
        "pos_emb": nrm(next(keys), (MAX_POS, HIDDEN)),
        "type_emb": nrm(next(keys), (TYPE_VOCAB, HIDDEN)),
        "emb_ln_g": jnp.ones((HIDDEN,), jnp.float32),
        "emb_ln_b": jnp.zeros((HIDDEN,), jnp.float32),
        "layers": [],
        "pooler_w": nrm(next(keys), (HIDDEN, HIDDEN)),
        "pooler_b": jnp.zeros((HIDDEN,), jnp.float32),
        "cls_w": nrm(next(keys), (HIDDEN, NUM_LABELS)),
        "cls_b": jnp.zeros((NUM_LABELS,), jnp.float32),
    }
    for _ in range(N_LAYERS):
        p["layers"].append(dict(
            wq=nrm(next(keys), (HIDDEN, HIDDEN)), bq=jnp.zeros((HIDDEN,), jnp.float32),
            wk=nrm(next(keys), (HIDDEN, HIDDEN)), bk=jnp.zeros((HIDDEN,), jnp.float32),
            wv=nrm(next(keys), (HIDDEN, HIDDEN)), bv=jnp.zeros((HIDDEN,), jnp.float32),
            wo=nrm(next(keys), (HIDDEN, HIDDEN)), bo=jnp.zeros((HIDDEN,), jnp.float32),
            ln1_g=jnp.ones((HIDDEN,), jnp.float32), ln1_b=jnp.zeros((HIDDEN,), jnp.float32),
            wi=nrm(next(keys), (HIDDEN, INTERMEDIATE)), bi=jnp.zeros((INTERMEDIATE,), jnp.float32),
            wf=nrm(next(keys), (INTERMEDIATE, HIDDEN)), bf=jnp.zeros((HIDDEN,), jnp.float32),
            ln2_g=jnp.ones((HIDDEN,), jnp.float32), ln2_b=jnp.zeros((HIDDEN,), jnp.float32),
        ))
    # Pre-stack per-layer weights once (QKV concatenated -> one MXU matmul per layer;
    # 1/sqrt(HEAD_DIM) folded into the Q projection so no in-kernel score scaling).
    p["stacked"] = _stack_layer_params(p["layers"])
    return p


def _stack_layer_params(layers):
    def cat_wqkv(l):
        # ATTN_SCALE folded into Q weight columns (host-side, zero runtime cost).
        return jnp.concatenate([l["wq"] * ATTN_SCALE, l["wk"], l["wv"]], axis=1)    # (H, 3H)

    def cat_bqkv(l):
        return jnp.concatenate([l["bq"] * ATTN_SCALE, l["bk"], l["bv"]], axis=0)    # (3H,)

    return {
        "wqkv": jnp.stack([cat_wqkv(l) for l in layers]),                              # (L, H, 3H)
        "bqkv": jnp.stack([cat_bqkv(l).reshape(1, 3 * HIDDEN) for l in layers]),       # (L, 1, 3H)
        "wo":   jnp.stack([l["wo"] for l in layers]),                                  # (L, H, H)
        "bo":   jnp.stack([l["bo"].reshape(1, HIDDEN) for l in layers]),
        "ln1_g": jnp.stack([l["ln1_g"].reshape(1, HIDDEN) for l in layers]),
        "ln1_b": jnp.stack([l["ln1_b"].reshape(1, HIDDEN) for l in layers]),
        "wi":   jnp.stack([l["wi"] for l in layers]),                                  # (L, H, I)
        "bi":   jnp.stack([l["bi"].reshape(1, INTERMEDIATE) for l in layers]),
        "wf":   jnp.stack([l["wf"] for l in layers]),                                  # (L, I, H)
        "bf":   jnp.stack([l["bf"].reshape(1, HIDDEN) for l in layers]),
        "ln2_g": jnp.stack([l["ln2_g"].reshape(1, HIDDEN) for l in layers]),
        "ln2_b": jnp.stack([l["ln2_b"].reshape(1, HIDDEN) for l in layers]),
    }


# ---------------- forward (BertClassifier.forward equivalent) ----------------
def bert_classifier_forward(params, input_ids, attention_mask, token_type_ids):
    B, S = input_ids.shape

    # Embedding gathers stay in plain JAX (glue); everything else is one fused Pallas kernel.
    x = (jnp.take(params["word_emb"], input_ids, axis=0)
         + params["pos_emb"][None, :S, :]
         + jnp.take(params["type_emb"], token_type_ids, axis=0))
    x2 = x.reshape(B * S, HIDDEN).astype(jnp.float32)

    # Additive attention mask: 0 where attended, -1e9 where masked; (B, 1, S), broadcast ONCE
    # in-kernel (outside the layer/head loops).
    mask_add = ((1.0 - attention_mask.astype(jnp.float32)) * -1e9).reshape(B, 1, S)

    stk = params["stacked"]
    return pl.pallas_call(
        _bert_fused_kernel,
        out_shape=jax.ShapeDtypeStruct((B, NUM_LABELS), jnp.float32),
        in_specs=[_VMEM] * 20,
        out_specs=_VMEM,
    )(
        x2, mask_add,
        params["emb_ln_g"].reshape(1, HIDDEN), params["emb_ln_b"].reshape(1, HIDDEN),
        stk["wqkv"], stk["bqkv"], stk["wo"], stk["bo"], stk["ln1_g"], stk["ln1_b"],
        stk["wi"], stk["bi"], stk["wf"], stk["bf"], stk["ln2_g"], stk["ln2_b"],
        params["pooler_w"], params["pooler_b"].reshape(1, HIDDEN),
        params["cls_w"], params["cls_b"].reshape(1, NUM_LABELS),
    )


if __name__ == "__main__":
    B, S = 2, 8
    key = jax.random.PRNGKey(0)
    pkey, ikey = jax.random.split(key)
    params = init_params(pkey)

    input_ids = jax.random.randint(ikey, (B, S), 0, VOCAB, dtype=jnp.int32)
    attention_mask = jnp.ones((B, S), jnp.int32).at[1, 6:].set(0)          # pad tail of row 1
    token_type_ids = jnp.zeros((B, S), jnp.int32)

    probs = bert_classifier_forward(params, input_ids, attention_mask, token_type_ids)
    probs = jax.block_until_ready(probs)

    assert probs.shape == (B, NUM_LABELS)
    assert bool(jnp.all(jnp.isfinite(probs)))
    assert bool(jnp.allclose(jnp.sum(probs, axis=1), 1.0, atol=1e-5))
    print("KERNEL_OK")
</pallas_src>

<mosaic_0001>
module attributes {stable_mosaic.version = 11 : i64} {
  func.func @_bert_fused_kernel(%arg0: memref<16x32xf32, #tpu.memory_space<vmem>>, %arg1: memref<2x1x8xf32, #tpu.memory_space<vmem>>, %arg2: memref<1x32xf32, #tpu.memory_space<vmem>>, %arg3: memref<1x32xf32, #tpu.memory_space<vmem>>, %arg4: memref<2x32x96xf32, #tpu.memory_space<vmem>>, %arg5: memref<2x1x96xf32, #tpu.memory_space<vmem>>, %arg6: memref<2x32x32xf32, #tpu.memory_space<vmem>>, %arg7: memref<2x1x32xf32, #tpu.memory_space<vmem>>, %arg8: memref<2x1x32xf32, #tpu.memory_space<vmem>>, %arg9: memref<2x1x32xf32, #tpu.memory_space<vmem>>, %arg10: memref<2x32x64xf32, #tpu.memory_space<vmem>>, %arg11: memref<2x1x64xf32, #tpu.memory_space<vmem>>, %arg12: memref<2x64x32xf32, #tpu.memory_space<vmem>>, %arg13: memref<2x1x32xf32, #tpu.memory_space<vmem>>, %arg14: memref<2x1x32xf32, #tpu.memory_space<vmem>>, %arg15: memref<2x1x32xf32, #tpu.memory_space<vmem>>, %arg16: memref<32x32xf32, #tpu.memory_space<vmem>>, %arg17: memref<1x32xf32, #tpu.memory_space<vmem>>, %arg18: memref<32x3xf32, #tpu.memory_space<vmem>>, %arg19: memref<1x3xf32, #tpu.memory_space<vmem>>, %arg20: memref<2x3xf32, #tpu.memory_space<vmem>>) attributes {dimension_semantics = [], scalar_prefetch = 0 : i64, scratch_operands = 0 : i64, tpu.core_type = #tpu.core_type<tc>} {
    %c0 = arith.constant 0 : index
    %c0_0 = arith.constant 0 : index
    %c0_1 = arith.constant 0 : index
    %0 = vector.load %arg1[%c0, %c0_0, %c0_1] : memref<2x1x8xf32, #tpu.memory_space<vmem>>, vector<2x1x8xf32>
    %1 = vector.shape_cast %0 : vector<2x1x8xf32> to vector<2x1x8xf32>
    %2 = vector.broadcast %1 : vector<2x1x8xf32> to vector<2x8x8xf32>
    %c0_2 = arith.constant 0 : index
    %c0_3 = arith.constant 0 : index
    %3 = vector.load %arg0[%c0_2, %c0_3] : memref<16x32xf32, #tpu.memory_space<vmem>>, vector<16x32xf32>
    %c0_4 = arith.constant 0 : index
    %c0_5 = arith.constant 0 : index
    %4 = vector.load %arg2[%c0_4, %c0_5] : memref<1x32xf32, #tpu.memory_space<vmem>>, vector<1x32xf32>
    %c0_6 = arith.constant 0 : index
    %c0_7 = arith.constant 0 : index
    %5 = vector.load %arg3[%c0_6, %c0_7] : memref<1x32xf32, #tpu.memory_space<vmem>>, vector<1x32xf32>
    %cst = arith.constant dense<0.000000e+00> : vector<16xf32>
    %6 = vector.multi_reduction <add>, %3, %cst [1] : vector<16x32xf32> to vector<16xf32>
    %7 = vector.shape_cast %6 : vector<16xf32> to vector<16x1xf32>
    %cst_8 = arith.constant 3.200000e+01 : f32
    %8 = vector.broadcast %cst_8 : f32 to vector<16x1xf32>
    %9 = arith.divf %7, %8 : vector<16x1xf32>
    %10 = vector.broadcast %9 : vector<16x1xf32> to vector<16x32xf32>
    %11 = arith.subf %3, %10 : vector<16x32xf32>
    %12 = arith.mulf %11, %11 : vector<16x32xf32>
    %cst_9 = arith.constant dense<0.000000e+00> : vector<16xf32>
    %13 = vector.multi_reduction <add>, %12, %cst_9 [1] : vector<16x32xf32> to vector<16xf32>
    %14 = vector.shape_cast %13 : vector<16xf32> to vector<16x1xf32>
    %cst_10 = arith.constant 3.200000e+01 : f32
    %15 = vector.broadcast %cst_10 : f32 to vector<16x1xf32>
    %16 = arith.divf %14, %15 : vector<16x1xf32>
    %cst_11 = arith.constant 9.99999996E-13 : f32
    %17 = vector.broadcast %cst_11 : f32 to vector<16x1xf32>
    %18 = arith.addf %16, %17 : vector<16x1xf32>
    %19 = math.rsqrt %18 : vector<16x1xf32>
    %20 = vector.broadcast %19 : vector<16x1xf32> to vector<16x32xf32>
    %21 = arith.mulf %11, %20 : vector<16x32xf32>
    %22 = vector.broadcast %4 : vector<1x32xf32> to vector<16x32xf32>
    %23 = arith.mulf %21, %22 : vector<16x32xf32>
    %24 = vector.broadcast %5 : vector<1x32xf32> to vector<16x32xf32>
    %25 = arith.addf %23, %24 : vector<16x32xf32>
    %c0_12 = arith.constant 0 : index
    %c0_13 = arith.constant 0 : index
    %c0_14 = arith.constant 0 : index
    %26 = vector.load %arg4[%c0_12, %c0_13, %c0_14] : memref<2x32x96xf32, #tpu.memory_space<vmem>>, vector<1x32x96xf32>
    %27 = vector.shape_cast %26 : vector<1x32x96xf32> to vector<32x96xf32>
    %cst_15 = arith.constant dense<0.000000e+00> : vector<16x96xf32>
    %28 = tpu.matmul %25, %27, %cst_15 {dimension_numbers = #tpu.dot_dimension_numbers<[1], [0], [0], [1], [0, 0, 1, 1], [], []>} : vector<16x32xf32>, vector<32x96xf32>, vector<16x96xf32> -> vector<16x96xf32>
    %c0_16 = arith.constant 0 : index
    %c0_17 = arith.constant 0 : index
    %c0_18 = arith.constant 0 : index
    %29 = vector.load %arg5[%c0_16, %c0_17, %c0_18] : memref<2x1x96xf32, #tpu.memory_space<vmem>>, vector<1x1x96xf32>
    %30 = vector.shape_cast %29 : vector<1x1x96xf32> to vector<1x96xf32>
    %31 = vector.broadcast %30 : vector<1x96xf32> to vector<16x96xf32>
    %32 = arith.addf %28, %31 : vector<16x96xf32>
    %33 = vector.extract_strided_slice %32 {offsets = [0, 0], sizes = [16, 16], strides = [1, 1]} : vector<16x96xf32> to vector<16x16xf32>
    %34 = vector.shape_cast %33 : vector<16x16xf32> to vector<2x8x16xf32>
    %35 = vector.extract_strided_slice %32 {offsets = [0, 32], sizes = [16, 16], strides = [1, 1]} : vector<16x96xf32> to vector<16x16xf32>
    %36 = vector.shape_cast %35 : vector<16x16xf32> to vector<2x8x16xf32>
    %37 = vector.extract_strided_slice %32 {offsets = [0, 64], sizes = [16, 16], strides = [1, 1]} : vector<16x96xf32> to vector<16x16xf32>
    %38 = vector.shape_cast %37 : vector<16x16xf32> to vector<2x8x16xf32>
    "tpu.trace_start"() <{level = 10 : i32, message = "bqd,bkd->bqk"}> : () -> ()
    %cst_19 = arith.constant dense<0.000000e+00> : vector<2x8x8xf32>
    %39 = tpu.matmul %34, %36, %cst_19 {dimension_numbers = #tpu.dot_dimension_numbers<[2], [2], [1], [1], [0, 0, 0, 1, 1, 1], [0], [0]>} : vector<2x8x16xf32>, vector<2x8x16xf32>, vector<2x8x8xf32> -> vector<2x8x8xf32>
    "tpu.trace_stop"() : () -> ()
    %40 = arith.addf %39, %2 : vector<2x8x8xf32>
    %cst_20 = arith.constant dense<0xFF800000> : vector<2x8xf32>
    %41 = vector.multi_reduction <maximumf>, %40, %cst_20 [2] : vector<2x8x8xf32> to vector<2x8xf32>
    %42 = vector.shape_cast %41 : vector<2x8xf32> to vector<2x8x1xf32>
    %43 = vector.broadcast %42 : vector<2x8x1xf32> to vector<2x8x8xf32>
    %44 = arith.subf %40, %43 : vector<2x8x8xf32>
    %45 = math.exp %44 : vector<2x8x8xf32>
    %cst_21 = arith.constant dense<0.000000e+00> : vector<2x8xf32>
    %46 = vector.multi_reduction <add>, %45, %cst_21 [2] : vector<2x8x8xf32> to vector<2x8xf32>
    %47 = vector.shape_cast %46 : vector<2x8xf32> to vector<2x8x1xf32>
    %48 = tpu.reciprocal %47 {approx = true} : vector<2x8x1xf32> -> vector<2x8x1xf32>
    %49 = vector.broadcast %48 : vector<2x8x1xf32> to vector<2x8x8xf32>
    %50 = arith.mulf %45, %49 : vector<2x8x8xf32>
    "tpu.trace_start"() <{level = 10 : i32, message = "bqk,bkd->bqd"}> : () -> ()
    %cst_22 = arith.constant dense<0.000000e+00> : vector<2x8x16xf32>
    %51 = tpu.matmul %50, %38, %cst_22 {dimension_numbers = #tpu.dot_dimension_numbers<[2], [1], [1], [2], [0, 0, 0, 1, 1, 2], [0], [0]>} : vector<2x8x8xf32>, vector<2x8x16xf32>, vector<2x8x16xf32> -> vector<2x8x16xf32>
    "tpu.trace_stop"() : () -> ()
    %52 = vector.shape_cast %51 : vector<2x8x16xf32> to vector<16x16xf32>
    %53 = vector.extract_strided_slice %32 {offsets = [0, 16], sizes = [16, 16], strides = [1, 1]} : vector<16x96xf32> to vector<16x16xf32>
    %54 = vector.shape_cast %53 : vector<16x16xf32> to vector<2x8x16xf32>
    %55 = vector.extract_strided_slice %32 {offsets = [0, 48], sizes = [16, 16], strides = [1, 1]} : vector<16x96xf32> to vector<16x16xf32>
    %56 = vector.shape_cast %55 : vector<16x16xf32> to vector<2x8x16xf32>
    %57 = vector.extract_strided_slice %32 {offsets = [0, 80], sizes = [16, 16], strides = [1, 1]} : vector<16x96xf32> to vector<16x16xf32>
    %58 = vector.shape_cast %57 : vector<16x16xf32> to vector<2x8x16xf32>
    "tpu.trace_start"() <{level = 10 : i32, message = "bqd,bkd->bqk"}> : () -> ()
    %cst_23 = arith.constant dense<0.000000e+00> : vector<2x8x8xf32>
    %59 = tpu.matmul %54, %56, %cst_23 {dimension_numbers = #tpu.dot_dimension_numbers<[2], [2], [1], [1], [0, 0, 0, 1, 1, 1], [0], [0]>} : vector<2x8x16xf32>, vector<2x8x16xf32>, vector<2x8x8xf32> -> vector<2x8x8xf32>
    "tpu.trace_stop"() : () -> ()
    %60 = arith.addf %59, %2 : vector<2x8x8xf32>
    %cst_24 = arith.constant dense<0xFF800000> : vector<2x8xf32>
    %61 = vector.multi_reduction <maximumf>, %60, %cst_24 [2] : vector<2x8x8xf32> to vector<2x8xf32>
    %62 = vector.shape_cast %61 : vector<2x8xf32> to vector<2x8x1xf32>
    %63 = vector.broadcast %62 : vector<2x8x1xf32> to vector<2x8x8xf32>
    %64 = arith.subf %60, %63 : vector<2x8x8xf32>
    %65 = math.exp %64 : vector<2x8x8xf32>
    %cst_25 = arith.constant dense<0.000000e+00> : vector<2x8xf32>
    %66 = vector.multi_reduction <add>, %65, %cst_25 [2] : vector<2x8x8xf32> to vector<2x8xf32>
    %67 = vector.shape_cast %66 : vector<2x8xf32> to vector<2x8x1xf32>
    %68 = tpu.reciprocal %67 {approx = true} : vector<2x8x1xf32> -> vector<2x8x1xf32>
    %69 = vector.broadcast %68 : vector<2x8x1xf32> to vector<2x8x8xf32>
    %70 = arith.mulf %65, %69 : vector<2x8x8xf32>
    "tpu.trace_start"() <{level = 10 : i32, message = "bqk,bkd->bqd"}> : () -> ()
    %cst_26 = arith.constant dense<0.000000e+00> : vector<2x8x16xf32>
    %71 = tpu.matmul %70, %58, %cst_26 {dimension_numbers = #tpu.dot_dimension_numbers<[2], [1], [1], [2], [0, 0, 0, 1, 1, 2], [0], [0]>} : vector<2x8x8xf32>, vector<2x8x16xf32>, vector<2x8x16xf32> -> vector<2x8x16xf32>
    "tpu.trace_stop"() : () -> ()
    %72 = vector.shape_cast %71 : vector<2x8x16xf32> to vector<16x16xf32>
    %73 = tpu.concatenate %52, %72 in 1 : vector<16x16xf32>, vector<16x16xf32> -> vector<16x32xf32>
    %c0_27 = arith.constant 0 : index
    %c0_28 = arith.constant 0 : index
    %c0_29 = arith.constant 0 : index
    %74 = vector.load %arg6[%c0_27, %c0_28, %c0_29] : memref<2x32x32xf32, #tpu.memory_space<vmem>>, vector<1x32x32xf32>
    %75 = vector.shape_cast %74 : vector<1x32x32xf32> to vector<32x32xf32>
    %cst_30 = arith.constant dense<0.000000e+00> : vector<16x32xf32>
    %76 = tpu.matmul %73, %75, %cst_30 {dimension_numbers = #tpu.dot_dimension_numbers<[1], [0], [0], [1], [0, 0, 1, 1], [], []>} : vector<16x32xf32>, vector<32x32xf32>, vector<16x32xf32> -> vector<16x32xf32>
    %c0_31 = arith.constant 0 : index
    %c0_32 = arith.constant 0 : index
    %c0_33 = arith.constant 0 : index
    %77 = vector.load %arg7[%c0_31, %c0_32, %c0_33] : memref<2x1x32xf32, #tpu.memory_space<vmem>>, vector<1x1x32xf32>
    %78 = vector.shape_cast %77 : vector<1x1x32xf32> to vector<1x32xf32>
    %79 = vector.broadcast %78 : vector<1x32xf32> to vector<16x32xf32>
    %80 = arith.addf %76, %79 : vector<16x32xf32>
    %81 = arith.addf %80, %25 : vector<16x32xf32>
    %c0_34 = arith.constant 0 : index
    %c0_35 = arith.constant 0 : index
    %c0_36 = arith.constant 0 : index
    %82 = vector.load %arg8[%c0_34, %c0_35, %c0_36] : memref<2x1x32xf32, #tpu.memory_space<vmem>>, vector<1x1x32xf32>
    %83 = vector.shape_cast %82 : vector<1x1x32xf32> to vector<1x32xf32>
    %c0_37 = arith.constant 0 : index
    %c0_38 = arith.constant 0 : index
    %c0_39 = arith.constant 0 : index
    %84 = vector.load %arg9[%c0_37, %c0_38, %c0_39] : memref<2x1x32xf32, #tpu.memory_space<vmem>>, vector<1x1x32xf32>
    %85 = vector.shape_cast %84 : vector<1x1x32xf32> to vector<1x32xf32>
    %cst_40 = arith.constant dense<0.000000e+00> : vector<16xf32>
    %86 = vector.multi_reduction <add>, %81, %cst_40 [1] : vector<16x32xf32> to vector<16xf32>
    %87 = vector.shape_cast %86 : vector<16xf32> to vector<16x1xf32>
    %cst_41 = arith.constant 3.200000e+01 : f32
    %88 = vector.broadcast %cst_41 : f32 to vector<16x1xf32>
    %89 = arith.divf %87, %88 : vector<16x1xf32>
    %90 = vector.broadcast %89 : vector<16x1xf32> to vector<16x32xf32>
    %91 = arith.subf %81, %90 : vector<16x32xf32>
    %92 = arith.mulf %91, %91 : vector<16x32xf32>
    %cst_42 = arith.constant dense<0.000000e+00> : vector<16xf32>
    %93 = vector.multi_reduction <add>, %92, %cst_42 [1] : vector<16x32xf32> to vector<16xf32>
    %94 = vector.shape_cast %93 : vector<16xf32> to vector<16x1xf32>
    %cst_43 = arith.constant 3.200000e+01 : f32
    %95 = vector.broadcast %cst_43 : f32 to vector<16x1xf32>
    %96 = arith.divf %94, %95 : vector<16x1xf32>
    %cst_44 = arith.constant 9.99999996E-13 : f32
    %97 = vector.broadcast %cst_44 : f32 to vector<16x1xf32>
    %98 = arith.addf %96, %97 : vector<16x1xf32>
    %99 = math.rsqrt %98 : vector<16x1xf32>
    %100 = vector.broadcast %99 : vector<16x1xf32> to vector<16x32xf32>
    %101 = arith.mulf %91, %100 : vector<16x32xf32>
    %102 = vector.broadcast %83 : vector<1x32xf32> to vector<16x32xf32>
    %103 = arith.mulf %101, %102 : vector<16x32xf32>
    %104 = vector.broadcast %85 : vector<1x32xf32> to vector<16x32xf32>
    %105 = arith.addf %103, %104 : vector<16x32xf32>
    %c0_45 = arith.constant 0 : index
    %c0_46 = arith.constant 0 : index
    %c0_47 = arith.constant 0 : index
    %106 = vector.load %arg10[%c0_45, %c0_46, %c0_47] : memref<2x32x64xf32, #tpu.memory_space<vmem>>, vector<1x32x64xf32>
    %107 = vector.shape_cast %106 : vector<1x32x64xf32> to vector<32x64xf32>
    %cst_48 = arith.constant dense<0.000000e+00> : vector<16x64xf32>
    %108 = tpu.matmul %105, %107, %cst_48 {dimension_numbers = #tpu.dot_dimension_numbers<[1], [0], [0], [1], [0, 0, 1, 1], [], []>} : vector<16x32xf32>, vector<32x64xf32>, vector<16x64xf32> -> vector<16x64xf32>
    %c0_49 = arith.constant 0 : index
    %c0_50 = arith.constant 0 : index
    %c0_51 = arith.constant 0 : index
    %109 = vector.load %arg11[%c0_49, %c0_50, %c0_51] : memref<2x1x64xf32, #tpu.memory_space<vmem>>, vector<1x1x64xf32>
    %110 = vector.shape_cast %109 : vector<1x1x64xf32> to vector<1x64xf32>
    %111 = vector.broadcast %110 : vector<1x64xf32> to vector<16x64xf32>
    %112 = arith.addf %108, %111 : vector<16x64xf32>
    %cst_52 = arith.constant 5.000000e-01 : f32
    %113 = vector.broadcast %cst_52 : f32 to vector<16x64xf32>
    %114 = arith.mulf %113, %112 : vector<16x64xf32>
    %cst_53 = arith.constant 0.707106769 : f32
    %115 = vector.broadcast %cst_53 : f32 to vector<16x64xf32>
    %116 = arith.mulf %112, %115 : vector<16x64xf32>
    %117 = math.erf %116 : vector<16x64xf32>
    %cst_54 = arith.constant 1.000000e+00 : f32
    %118 = vector.broadcast %cst_54 : f32 to vector<16x64xf32>
    %119 = arith.addf %118, %117 : vector<16x64xf32>
    %120 = arith.mulf %114, %119 : vector<16x64xf32>
    %c0_55 = arith.constant 0 : index
    %c0_56 = arith.constant 0 : index
    %c0_57 = arith.constant 0 : index
    %121 = vector.load %arg12[%c0_55, %c0_56, %c0_57] : memref<2x64x32xf32, #tpu.memory_space<vmem>>, vector<1x64x32xf32>
    %122 = vector.shape_cast %121 : vector<1x64x32xf32> to vector<64x32xf32>
    %cst_58 = arith.constant dense<0.000000e+00> : vector<16x32xf32>
    %123 = tpu.matmul %120, %122, %cst_58 {dimension_numbers = #tpu.dot_dimension_numbers<[1], [0], [0], [1], [0, 0, 1, 1], [], []>} : vector<16x64xf32>, vector<64x32xf32>, vector<16x32xf32> -> vector<16x32xf32>
    %c0_59 = arith.constant 0 : index
    %c0_60 = arith.constant 0 : index
    %c0_61 = arith.constant 0 : index
    %124 = vector.load %arg13[%c0_59, %c0_60, %c0_61] : memref<2x1x32xf32, #tpu.memory_space<vmem>>, vector<1x1x32xf32>
    %125 = vector.shape_cast %124 : vector<1x1x32xf32> to vector<1x32xf32>
    %126 = vector.broadcast %125 : vector<1x32xf32> to vector<16x32xf32>
    %127 = arith.addf %123, %126 : vector<16x32xf32>
    %128 = arith.addf %127, %105 : vector<16x32xf32>
    %c0_62 = arith.constant 0 : index
    %c0_63 = arith.constant 0 : index
    %c0_64 = arith.constant 0 : index
    %129 = vector.load %arg14[%c0_62, %c0_63, %c0_64] : memref<2x1x32xf32, #tpu.memory_space<vmem>>, vector<1x1x32xf32>
    %130 = vector.shape_cast %129 : vector<1x1x32xf32> to vector<1x32xf32>
    %c0_65 = arith.constant 0 : index
    %c0_66 = arith.constant 0 : index
    %c0_67 = arith.constant 0 : index
    %131 = vector.load %arg15[%c0_65, %c0_66, %c0_67] : memref<2x1x32xf32, #tpu.memory_space<vmem>>, vector<1x1x32xf32>
    %132 = vector.shape_cast %131 : vector<1x1x32xf32> to vector<1x32xf32>
    %cst_68 = arith.constant dense<0.000000e+00> : vector<16xf32>
    %133 = vector.multi_reduction <add>, %128, %cst_68 [1] : vector<16x32xf32> to vector<16xf32>
    %134 = vector.shape_cast %133 : vector<16xf32> to vector<16x1xf32>
    %cst_69 = arith.constant 3.200000e+01 : f32
    %135 = vector.broadcast %cst_69 : f32 to vector<16x1xf32>
    %136 = arith.divf %134, %135 : vector<16x1xf32>
    %137 = vector.broadcast %136 : vector<16x1xf32> to vector<16x32xf32>
    %138 = arith.subf %128, %137 : vector<16x32xf32>
    %139 = arith.mulf %138, %138 : vector<16x32xf32>
    %cst_70 = arith.constant dense<0.000000e+00> : vector<16xf32>
    %140 = vector.multi_reduction <add>, %139, %cst_70 [1] : vector<16x32xf32> to vector<16xf32>
    %141 = vector.shape_cast %140 : vector<16xf32> to vector<16x1xf32>
    %cst_71 = arith.constant 3.200000e+01 : f32
    %142 = vector.broadcast %cst_71 : f32 to vector<16x1xf32>
    %143 = arith.divf %141, %142 : vector<16x1xf32>
    %cst_72 = arith.constant 9.99999996E-13 : f32
    %144 = vector.broadcast %cst_72 : f32 to vector<16x1xf32>
    %145 = arith.addf %143, %144 : vector<16x1xf32>
    %146 = math.rsqrt %145 : vector<16x1xf32>
    %147 = vector.broadcast %146 : vector<16x1xf32> to vector<16x32xf32>
    %148 = arith.mulf %138, %147 : vector<16x32xf32>
    %149 = vector.broadcast %130 : vector<1x32xf32> to vector<16x32xf32>
    %150 = arith.mulf %148, %149 : vector<16x32xf32>
    %151 = vector.broadcast %132 : vector<1x32xf32> to vector<16x32xf32>
    %152 = arith.addf %150, %151 : vector<16x32xf32>
    %c1 = arith.constant 1 : index
    %c0_73 = arith.constant 0 : index
    %c0_74 = arith.constant 0 : index
    %153 = vector.load %arg4[%c1, %c0_73, %c0_74] : memref<2x32x96xf32, #tpu.memory_space<vmem>>, vector<1x32x96xf32>
    %154 = vector.shape_cast %153 : vector<1x32x96xf32> to vector<32x96xf32>
    %cst_75 = arith.constant dense<0.000000e+00> : vector<16x96xf32>
    %155 = tpu.matmul %152, %154, %cst_75 {dimension_numbers = #tpu.dot_dimension_numbers<[1], [0], [0], [1], [0, 0, 1, 1], [], []>} : vector<16x32xf32>, vector<32x96xf32>, vector<16x96xf32> -> vector<16x96xf32>
    %c1_76 = arith.constant 1 : index
    %c0_77 = arith.constant 0 : index
    %c0_78 = arith.constant 0 : index
    %156 = vector.load %arg5[%c1_76, %c0_77, %c0_78] : memref<2x1x96xf32, #tpu.memory_space<vmem>>, vector<1x1x96xf32>
    %157 = vector.shape_cast %156 : vector<1x1x96xf32> to vector<1x96xf32>
    %158 = vector.broadcast %157 : vector<1x96xf32> to vector<16x96xf32>
    %159 = arith.addf %155, %158 : vector<16x96xf32>
    %160 = vector.extract_strided_slice %159 {offsets = [0, 0], sizes = [16, 16], strides = [1, 1]} : vector<16x96xf32> to vector<16x16xf32>
    %161 = vector.shape_cast %160 : vector<16x16xf32> to vector<2x8x16xf32>
    %162 = vector.extract_strided_slice %159 {offsets = [0, 32], sizes = [16, 16], strides = [1, 1]} : vector<16x96xf32> to vector<16x16xf32>
    %163 = vector.shape_cast %162 : vector<16x16xf32> to vector<2x8x16xf32>
    %164 = vector.extract_strided_slice %159 {offsets = [0, 64], sizes = [16, 16], strides = [1, 1]} : vector<16x96xf32> to vector<16x16xf32>
    %165 = vector.shape_cast %164 : vector<16x16xf32> to vector<2x8x16xf32>
    "tpu.trace_start"() <{level = 10 : i32, message = "bqd,bkd->bqk"}> : () -> ()
    %cst_79 = arith.constant dense<0.000000e+00> : vector<2x8x8xf32>
    %166 = tpu.matmul %161, %163, %cst_79 {dimension_numbers = #tpu.dot_dimension_numbers<[2], [2], [1], [1], [0, 0, 0, 1, 1, 1], [0], [0]>} : vector<2x8x16xf32>, vector<2x8x16xf32>, vector<2x8x8xf32> -> vector<2x8x8xf32>
    "tpu.trace_stop"() : () -> ()
    %167 = arith.addf %166, %2 : vector<2x8x8xf32>
    %cst_80 = arith.constant dense<0xFF800000> : vector<2x8xf32>
    %168 = vector.multi_reduction <maximumf>, %167, %cst_80 [2] : vector<2x8x8xf32> to vector<2x8xf32>
    %169 = vector.shape_cast %168 : vector<2x8xf32> to vector<2x8x1xf32>
    %170 = vector.broadcast %169 : vector<2x8x1xf32> to vector<2x8x8xf32>
    %171 = arith.subf %167, %170 : vector<2x8x8xf32>
    %172 = math.exp %171 : vector<2x8x8xf32>
    %cst_81 = arith.constant dense<0.000000e+00> : vector<2x8xf32>
    %173 = vector.multi_reduction <add>, %172, %cst_81 [2] : vector<2x8x8xf32> to vector<2x8xf32>
    %174 = vector.shape_cast %173 : vector<2x8xf32> to vector<2x8x1xf32>
    %175 = tpu.reciprocal %174 {approx = true} : vector<2x8x1xf32> -> vector<2x8x1xf32>
    %176 = vector.broadcast %175 : vector<2x8x1xf32> to vector<2x8x8xf32>
    %177 = arith.mulf %172, %176 : vector<2x8x8xf32>
    "tpu.trace_start"() <{level = 10 : i32, message = "bqk,bkd->bqd"}> : () -> ()
    %cst_82 = arith.constant dense<0.000000e+00> : vector<2x8x16xf32>
    %178 = tpu.matmul %177, %165, %cst_82 {dimension_numbers = #tpu.dot_dimension_numbers<[2], [1], [1], [2], [0, 0, 0, 1, 1, 2], [0], [0]>} : vector<2x8x8xf32>, vector<2x8x16xf32>, vector<2x8x16xf32> -> vector<2x8x16xf32>
    "tpu.trace_stop"() : () -> ()
    %179 = vector.shape_cast %178 : vector<2x8x16xf32> to vector<16x16xf32>
    %180 = vector.extract_strided_slice %159 {offsets = [0, 16], sizes = [16, 16], strides = [1, 1]} : vector<16x96xf32> to vector<16x16xf32>
    %181 = vector.shape_cast %180 : vector<16x16xf32> to vector<2x8x16xf32>
    %182 = vector.extract_strided_slice %159 {offsets = [0, 48], sizes = [16, 16], strides = [1, 1]} : vector<16x96xf32> to vector<16x16xf32>
    %183 = vector.shape_cast %182 : vector<16x16xf32> to vector<2x8x16xf32>
    %184 = vector.extract_strided_slice %159 {offsets = [0, 80], sizes = [16, 16], strides = [1, 1]} : vector<16x96xf32> to vector<16x16xf32>
    %185 = vector.shape_cast %184 : vector<16x16xf32> to vector<2x8x16xf32>
    "tpu.trace_start"() <{level = 10 : i32, message = "bqd,bkd->bqk"}> : () -> ()
    %cst_83 = arith.constant dense<0.000000e+00> : vector<2x8x8xf32>
    %186 = tpu.matmul %181, %183, %cst_83 {dimension_numbers = #tpu.dot_dimension_numbers<[2], [2], [1], [1], [0, 0, 0, 1, 1, 1], [0], [0]>} : vector<2x8x16xf32>, vector<2x8x16xf32>, vector<2x8x8xf32> -> vector<2x8x8xf32>
    "tpu.trace_stop"() : () -> ()
    %187 = arith.addf %186, %2 : vector<2x8x8xf32>
    %cst_84 = arith.constant dense<0xFF800000> : vector<2x8xf32>
    %188 = vector.multi_reduction <maximumf>, %187, %cst_84 [2] : vector<2x8x8xf32> to vector<2x8xf32>
    %189 = vector.shape_cast %188 : vector<2x8xf32> to vector<2x8x1xf32>
    %190 = vector.broadcast %189 : vector<2x8x1xf32> to vector<2x8x8xf32>
    %191 = arith.subf %187, %190 : vector<2x8x8xf32>
    %192 = math.exp %191 : vector<2x8x8xf32>
    %cst_85 = arith.constant dense<0.000000e+00> : vector<2x8xf32>
    %193 = vector.multi_reduction <add>, %192, %cst_85 [2] : vector<2x8x8xf32> to vector<2x8xf32>
    %194 = vector.shape_cast %193 : vector<2x8xf32> to vector<2x8x1xf32>
    %195 = tpu.reciprocal %194 {approx = true} : vector<2x8x1xf32> -> vector<2x8x1xf32>
    %196 = vector.broadcast %195 : vector<2x8x1xf32> to vector<2x8x8xf32>
    %197 = arith.mulf %192, %196 : vector<2x8x8xf32>
    "tpu.trace_start"() <{level = 10 : i32, message = "bqk,bkd->bqd"}> : () -> ()
    %cst_86 = arith.constant dense<0.000000e+00> : vector<2x8x16xf32>
    %198 = tpu.matmul %197, %185, %cst_86 {dimension_numbers = #tpu.dot_dimension_numbers<[2], [1], [1], [2], [0, 0, 0, 1, 1, 2], [0], [0]>} : vector<2x8x8xf32>, vector<2x8x16xf32>, vector<2x8x16xf32> -> vector<2x8x16xf32>
    "tpu.trace_stop"() : () -> ()
    %199 = vector.shape_cast %198 : vector<2x8x16xf32> to vector<16x16xf32>
    %200 = tpu.concatenate %179, %199 in 1 : vector<16x16xf32>, vector<16x16xf32> -> vector<16x32xf32>
    %c1_87 = arith.constant 1 : index
    %c0_88 = arith.constant 0 : index
    %c0_89 = arith.constant 0 : index
    %201 = vector.load %arg6[%c1_87, %c0_88, %c0_89] : memref<2x32x32xf32, #tpu.memory_space<vmem>>, vector<1x32x32xf32>
    %202 = vector.shape_cast %201 : vector<1x32x32xf32> to vector<32x32xf32>
    %cst_90 = arith.constant dense<0.000000e+00> : vector<16x32xf32>
    %203 = tpu.matmul %200, %202, %cst_90 {dimension_numbers = #tpu.dot_dimension_numbers<[1], [0], [0], [1], [0, 0, 1, 1], [], []>} : vector<16x32xf32>, vector<32x32xf32>, vector<16x32xf32> -> vector<16x32xf32>
    %c1_91 = arith.constant 1 : index
    %c0_92 = arith.constant 0 : index
    %c0_93 = arith.constant 0 : index
    %204 = vector.load %arg7[%c1_91, %c0_92, %c0_93] : memref<2x1x32xf32, #tpu.memory_space<vmem>>, vector<1x1x32xf32>
    %205 = vector.shape_cast %204 : vector<1x1x32xf32> to vector<1x32xf32>
    %206 = vector.broadcast %205 : vector<1x32xf32> to vector<16x32xf32>
    %207 = arith.addf %203, %206 : vector<16x32xf32>
    %208 = arith.addf %207, %152 : vector<16x32xf32>
    %c1_94 = arith.constant 1 : index
    %c0_95 = arith.constant 0 : index
    %c0_96 = arith.constant 0 : index
    %209 = vector.load %arg8[%c1_94, %c0_95, %c0_96] : memref<2x1x32xf32, #tpu.memory_space<vmem>>, vector<1x1x32xf32>
    %210 = vector.shape_cast %209 : vector<1x1x32xf32> to vector<1x32xf32>
    %c1_97 = arith.constant 1 : index
    %c0_98 = arith.constant 0 : index
    %c0_99 = arith.constant 0 : index
    %211 = vector.load %arg9[%c1_97, %c0_98, %c0_99] : memref<2x1x32xf32, #tpu.memory_space<vmem>>, vector<1x1x32xf32>
    %212 = vector.shape_cast %211 : vector<1x1x32xf32> to vector<1x32xf32>
    %cst_100 = arith.constant dense<0.000000e+00> : vector<16xf32>
    %213 = vector.multi_reduction <add>, %208, %cst_100 [1] : vector<16x32xf32> to vector<16xf32>
    %214 = vector.shape_cast %213 : vector<16xf32> to vector<16x1xf32>
    %cst_101 = arith.constant 3.200000e+01 : f32
    %215 = vector.broadcast %cst_101 : f32 to vector<16x1xf32>
    %216 = arith.divf %214, %215 : vector<16x1xf32>
    %217 = vector.broadcast %216 : vector<16x1xf32> to vector<16x32xf32>
    %218 = arith.subf %208, %217 : vector<16x32xf32>
    %219 = arith.mulf %218, %218 : vector<16x32xf32>
    %cst_102 = arith.constant dense<0.000000e+00> : vector<16xf32>
    %220 = vector.multi_reduction <add>, %219, %cst_102 [1] : vector<16x32xf32> to vector<16xf32>
    %221 = vector.shape_cast %220 : vector<16xf32> to vector<16x1xf32>
    %cst_103 = arith.constant 3.200000e+01 : f32
    %222 = vector.broadcast %cst_103 : f32 to vector<16x1xf32>
    %223 = arith.divf %221, %222 : vector<16x1xf32>
    %cst_104 = arith.constant 9.99999996E-13 : f32
    %224 = vector.broadcast %cst_104 : f32 to vector<16x1xf32>
    %225 = arith.addf %223, %224 : vector<16x1xf32>
    %226 = math.rsqrt %225 : vector<16x1xf32>
    %227 = vector.broadcast %226 : vector<16x1xf32> to vector<16x32xf32>
    %228 = arith.mulf %218, %227 : vector<16x32xf32>
    %229 = vector.broadcast %210 : vector<1x32xf32> to vector<16x32xf32>
    %230 = arith.mulf %228, %229 : vector<16x32xf32>
    %231 = vector.broadcast %212 : vector<1x32xf32> to vector<16x32xf32>
    %232 = arith.addf %230, %231 : vector<16x32xf32>
    %c1_105 = arith.constant 1 : index
    %c0_106 = arith.constant 0 : index
    %c0_107 = arith.constant 0 : index
    %233 = vector.load %arg10[%c1_105, %c0_106, %c0_107] : memref<2x32x64xf32, #tpu.memory_space<vmem>>, vector<1x32x64xf32>
    %234 = vector.shape_cast %233 : vector<1x32x64xf32> to vector<32x64xf32>
    %cst_108 = arith.constant dense<0.000000e+00> : vector<16x64xf32>
    %235 = tpu.matmul %232, %234, %cst_108 {dimension_numbers = #tpu.dot_dimension_numbers<[1], [0], [0], [1], [0, 0, 1, 1], [], []>} : vector<16x32xf32>, vector<32x64xf32>, vector<16x64xf32> -> vector<16x64xf32>
    %c1_109 = arith.constant 1 : index
    %c0_110 = arith.constant 0 : index
    %c0_111 = arith.constant 0 : index
    %236 = vector.load %arg11[%c1_109, %c0_110, %c0_111] : memref<2x1x64xf32, #tpu.memory_space<vmem>>, vector<1x1x64xf32>
    %237 = vector.shape_cast %236 : vector<1x1x64xf32> to vector<1x64xf32>
    %238 = vector.broadcast %237 : vector<1x64xf32> to vector<16x64xf32>
    %239 = arith.addf %235, %238 : vector<16x64xf32>
    %cst_112 = arith.constant 5.000000e-01 : f32
    %240 = vector.broadcast %cst_112 : f32 to vector<16x64xf32>
    %241 = arith.mulf %240, %239 : vector<16x64xf32>
    %cst_113 = arith.constant 0.707106769 : f32
    %242 = vector.broadcast %cst_113 : f32 to vector<16x64xf32>
    %243 = arith.mulf %239, %242 : vector<16x64xf32>
    %244 = math.erf %243 : vector<16x64xf32>
    %cst_114 = arith.constant 1.000000e+00 : f32
    %245 = vector.broadcast %cst_114 : f32 to vector<16x64xf32>
    %246 = arith.addf %245, %244 : vector<16x64xf32>
    %247 = arith.mulf %241, %246 : vector<16x64xf32>
    %c1_115 = arith.constant 1 : index
    %c0_116 = arith.constant 0 : index
    %c0_117 = arith.constant 0 : index
    %248 = vector.load %arg12[%c1_115, %c0_116, %c0_117] : memref<2x64x32xf32, #tpu.memory_space<vmem>>, vector<1x64x32xf32>
    %249 = vector.shape_cast %248 : vector<1x64x32xf32> to vector<64x32xf32>
    %cst_118 = arith.constant dense<0.000000e+00> : vector<16x32xf32>
    %250 = tpu.matmul %247, %249, %cst_118 {dimension_numbers = #tpu.dot_dimension_numbers<[1], [0], [0], [1], [0, 0, 1, 1], [], []>} : vector<16x64xf32>, vector<64x32xf32>, vector<16x32xf32> -> vector<16x32xf32>
    %c1_119 = arith.constant 1 : index
    %c0_120 = arith.constant 0 : index
    %c0_121 = arith.constant 0 : index
    %251 = vector.load %arg13[%c1_119, %c0_120, %c0_121] : memref<2x1x32xf32, #tpu.memory_space<vmem>>, vector<1x1x32xf32>
    %252 = vector.shape_cast %251 : vector<1x1x32xf32> to vector<1x32xf32>
    %253 = vector.broadcast %252 : vector<1x32xf32> to vector<16x32xf32>
    %254 = arith.addf %250, %253 : vector<16x32xf32>
    %255 = arith.addf %254, %232 : vector<16x32xf32>
    %c1_122 = arith.constant 1 : index
    %c0_123 = arith.constant 0 : index
    %c0_124 = arith.constant 0 : index
    %256 = vector.load %arg14[%c1_122, %c0_123, %c0_124] : memref<2x1x32xf32, #tpu.memory_space<vmem>>, vector<1x1x32xf32>
    %257 = vector.shape_cast %256 : vector<1x1x32xf32> to vector<1x32xf32>
    %c1_125 = arith.constant 1 : index
    %c0_126 = arith.constant 0 : index
    %c0_127 = arith.constant 0 : index
    %258 = vector.load %arg15[%c1_125, %c0_126, %c0_127] : memref<2x1x32xf32, #tpu.memory_space<vmem>>, vector<1x1x32xf32>
    %259 = vector.shape_cast %258 : vector<1x1x32xf32> to vector<1x32xf32>
    %cst_128 = arith.constant dense<0.000000e+00> : vector<16xf32>
    %260 = vector.multi_reduction <add>, %255, %cst_128 [1] : vector<16x32xf32> to vector<16xf32>
    %261 = vector.shape_cast %260 : vector<16xf32> to vector<16x1xf32>
    %cst_129 = arith.constant 3.200000e+01 : f32
    %262 = vector.broadcast %cst_129 : f32 to vector<16x1xf32>
    %263 = arith.divf %261, %262 : vector<16x1xf32>
    %264 = vector.broadcast %263 : vector<16x1xf32> to vector<16x32xf32>
    %265 = arith.subf %255, %264 : vector<16x32xf32>
    %266 = arith.mulf %265, %265 : vector<16x32xf32>
    %cst_130 = arith.constant dense<0.000000e+00> : vector<16xf32>
    %267 = vector.multi_reduction <add>, %266, %cst_130 [1] : vector<16x32xf32> to vector<16xf32>
    %268 = vector.shape_cast %267 : vector<16xf32> to vector<16x1xf32>
    %cst_131 = arith.constant 3.200000e+01 : f32
    %269 = vector.broadcast %cst_131 : f32 to vector<16x1xf32>
    %270 = arith.divf %268, %269 : vector<16x1xf32>
    %cst_132 = arith.constant 9.99999996E-13 : f32
    %271 = vector.broadcast %cst_132 : f32 to vector<16x1xf32>
    %272 = arith.addf %270, %271 : vector<16x1xf32>
    %273 = math.rsqrt %272 : vector<16x1xf32>
    %274 = vector.broadcast %273 : vector<16x1xf32> to vector<16x32xf32>
    %275 = arith.mulf %265, %274 : vector<16x32xf32>
    %276 = vector.broadcast %257 : vector<1x32xf32> to vector<16x32xf32>
    %277 = arith.mulf %275, %276 : vector<16x32xf32>
    %278 = vector.broadcast %259 : vector<1x32xf32> to vector<16x32xf32>
    %279 = arith.addf %277, %278 : vector<16x32xf32>
    %280 = vector.shape_cast %279 : vector<16x32xf32> to vector<2x8x32xf32>
    %281 = vector.extract_strided_slice %280 {offsets = [0, 0, 0], sizes = [2, 1, 32], strides = [1, 1, 1]} : vector<2x8x32xf32> to vector<2x1x32xf32>
    %282 = vector.shape_cast %281 : vector<2x1x32xf32> to vector<2x32xf32>
    %c0_133 = arith.constant 0 : index
    %c0_134 = arith.constant 0 : index
    %283 = vector.load %arg16[%c0_133, %c0_134] : memref<32x32xf32, #tpu.memory_space<vmem>>, vector<32x32xf32>
    %cst_135 = arith.constant dense<0.000000e+00> : vector<2x32xf32>
    %284 = tpu.matmul %282, %283, %cst_135 {dimension_numbers = #tpu.dot_dimension_numbers<[1], [0], [0], [1], [0, 0, 1, 1], [], []>} : vector<2x32xf32>, vector<32x32xf32>, vector<2x32xf32> -> vector<2x32xf32>
    %c0_136 = arith.constant 0 : index
    %c0_137 = arith.constant 0 : index
    %285 = vector.load %arg17[%c0_136, %c0_137] : memref<1x32xf32, #tpu.memory_space<vmem>>, vector<1x32xf32>
    %286 = vector.broadcast %285 : vector<1x32xf32> to vector<2x32xf32>
    %287 = arith.addf %284, %286 : vector<2x32xf32>
    %288 = math.tanh %287 : vector<2x32xf32>
    %c0_138 = arith.constant 0 : index
    %c0_139 = arith.constant 0 : index
    %289 = vector.load %arg18[%c0_138, %c0_139] : memref<32x3xf32, #tpu.memory_space<vmem>>, vector<32x3xf32>
    %cst_140 = arith.constant dense<0.000000e+00> : vector<2x3xf32>
    %290 = tpu.matmul %288, %289, %cst_140 {dimension_numbers = #tpu.dot_dimension_numbers<[1], [0], [0], [1], [0, 0, 1, 1], [], []>} : vector<2x32xf32>, vector<32x3xf32>, vector<2x3xf32> -> vector<2x3xf32>
    %c0_141 = arith.constant 0 : index
    %c0_142 = arith.constant 0 : index
    %291 = vector.load %arg19[%c0_141, %c0_142] : memref<1x3xf32, #tpu.memory_space<vmem>>, vector<1x3xf32>
    %292 = vector.broadcast %291 : vector<1x3xf32> to vector<2x3xf32>
    %293 = arith.addf %290, %292 : vector<2x3xf32>
    %cst_143 = arith.constant dense<0xFF800000> : vector<2xf32>
    %294 = vector.multi_reduction <maximumf>, %293, %cst_143 [1] : vector<2x3xf32> to vector<2xf32>
    %295 = vector.shape_cast %294 : vector<2xf32> to vector<2x1xf32>
    %296 = vector.broadcast %295 : vector<2x1xf32> to vector<2x3xf32>
    %297 = arith.subf %293, %296 : vector<2x3xf32>
    %298 = math.exp %297 : vector<2x3xf32>
    %cst_144 = arith.constant dense<0.000000e+00> : vector<2xf32>
    %299 = vector.multi_reduction <add>, %298, %cst_144 [1] : vector<2x3xf32> to vector<2xf32>
    %300 = vector.shape_cast %299 : vector<2xf32> to vector<2x1xf32>
    %301 = vector.broadcast %300 : vector<2x1xf32> to vector<2x3xf32>
    %302 = arith.divf %298, %301 : vector<2x3xf32>
    %c0_145 = arith.constant 0 : index
    %c0_146 = arith.constant 0 : index
    %303 = vector.load %arg20[%c0_145, %c0_146] : memref<2x3xf32, #tpu.memory_space<vmem>>, vector<2x3xf32>
    tpu.vector_store %arg20[%c0_145, %c0_146], %302 {strides = array<i32>} : memref<2x3xf32, #tpu.memory_space<vmem>>, vector<2x3xf32>,
    return
  }
}

</mosaic_0001>

<llo_original>
// kernel: tpu_custom_call.1
$region0: #{tpu_custom_call.1}
  #allocation0 [shape = 'u32[]', space=smem, size = 0x4, offset = 0x4, fixed_abs, tag = 'smem constant byte address 0x4 - core index']
  #allocation1 [shape = 'u32[144,128]{1,0:T(1,128)}', space=vmem, size = 0x12000, scoped, tag = 'internal scratch']
  %s0 = inlined_call_operand.hbm [shape: f32[16,32], index: 0, kind: input, shape index: {}]
  %s1 = inlined_call_operand.hbm [shape: f32[2,1,8], index: 1, kind: input, shape index: {}]
  %s2 = inlined_call_operand.hbm [shape: f32[1,32], index: 2, kind: input, shape index: {}]
  %s3 = inlined_call_operand.hbm [shape: f32[1,32], index: 3, kind: input, shape index: {}]
  %s4 = inlined_call_operand.vmem [shape: f32[2,32,96], index: 4, kind: input, shape index: {}]
  %s5 = inlined_call_operand.hbm [shape: f32[2,1,96], index: 5, kind: input, shape index: {}]
  %s6 = inlined_call_operand.vmem [shape: f32[2,32,32], index: 6, kind: input, shape index: {}]
  %s7 = inlined_call_operand.hbm [shape: f32[2,1,32], index: 7, kind: input, shape index: {}]
  %s8 = inlined_call_operand.hbm [shape: f32[2,1,32], index: 8, kind: input, shape index: {}]
  %s9 = inlined_call_operand.hbm [shape: f32[2,1,32], index: 9, kind: input, shape index: {}]
  %s10 = inlined_call_operand.vmem [shape: f32[2,32,64], index: 10, kind: input, shape index: {}]
  %s11 = inlined_call_operand.hbm [shape: f32[2,1,64], index: 11, kind: input, shape index: {}]
  %s12 = inlined_call_operand.vmem [shape: f32[2,64,32], index: 12, kind: input, shape index: {}]
  %s13 = inlined_call_operand.hbm [shape: f32[2,1,32], index: 13, kind: input, shape index: {}]
  %s14 = inlined_call_operand.hbm [shape: f32[2,1,32], index: 14, kind: input, shape index: {}]
  %s15 = inlined_call_operand.hbm [shape: f32[2,1,32], index: 15, kind: input, shape index: {}]
  %s16 = inlined_call_operand.vmem [shape: f32[32,32], index: 16, kind: input, shape index: {}]
  %s17 = inlined_call_operand.hbm [shape: f32[1,32], index: 17, kind: input, shape index: {}]
  %s18 = inlined_call_operand.vmem [shape: f32[32,3], index: 18, kind: input, shape index: {}]
  %s19 = inlined_call_operand.vmem [shape: f32[1,3], index: 19, kind: input, shape index: {}]
  %s20 = inlined_call_operand.hbm [shape: f32[2,3], index: 20, kind: output, shape index: {}]
  %s21 = sld [smem:[#allocation0]]
  $region142: #{tpu_custom_call.1} parent=0
    _
  %s23 = ssub.s32 1, %s21
  %s24 = scalar_select 0, %s23, %s21
  $region1: #{tpu_custom_call.1} parent=0
    #allocation2 [shape = 'u8[8192]{0}', space=vmem, size = 0x2000, scoped, tag = 'input window, operand 0, single buffered']
    #allocation3 [shape = 's32[1]{0}', space=sflag, size = 0x4, scoped, tag = 'scoped memory for tpu_custom_call.1']
    #allocation4 [shape = 's32[1]{0}', space=sflag, size = 0x4, scoped, tag = 'scoped memory for tpu_custom_call.1']
    #allocation5 [shape = 'u8[1024]{0}', space=vmem, size = 0x400, scoped, tag = 'input window, operand 1, single buffered']
    #allocation6 [shape = 's32[1]{0}', space=sflag, size = 0x4, scoped, tag = 'scoped memory for tpu_custom_call.1']
    #allocation7 [shape = 'u8[512]{0}', space=vmem, size = 0x400, scoped, tag = 'input window, operand 2, single buffered']
    #allocation8 [shape = 'u8[512]{0}', space=vmem, size = 0x400, scoped, tag = 'input window, operand 3, single buffered']
    #allocation9 [shape = 's32[1]{0}', space=sflag, size = 0x4, scoped, tag = 'scoped memory for tpu_custom_call.1']
    #allocation10 [shape = 'u8[1024]{0}', space=vmem, size = 0x400, scoped, tag = 'input window, operand 5, single buffered']
    #allocation11 [shape = 'u8[1024]{0}', space=vmem, size = 0x400, scoped, tag = 'input window, operand 7, single buffered']
    #allocation12 [shape = 's32[1]{0}', space=sflag, size = 0x4, scoped, tag = 'scoped memory for tpu_custom_call.1']
    #allocation13 [shape = 'u8[1024]{0}', space=vmem, size = 0x400, scoped, tag = 'input window, operand 8, single buffered']
    #allocation14 [shape = 'u8[1024]{0}', space=vmem, size = 0x400, scoped, tag = 'input window, operand 9, single buffered']
    #allocation15 [shape = 's32[1]{0}', space=sflag, size = 0x4, scoped, tag = 'scoped memory for tpu_custom_call.1']
    #allocation16 [shape = 'u8[1024]{0}', space=vmem, size = 0x400, scoped, tag = 'input window, operand 11, single buffered']
    #allocation17 [shape = 'u8[1024]{0}', space=vmem, size = 0x400, scoped, tag = 'input window, operand 13, single buffered']
    #allocation18 [shape = 's32[1]{0}', space=sflag, size = 0x4, scoped, tag = 'scoped memory for tpu_custom_call.1']
    #allocation19 [shape = 'u8[1024]{0}', space=vmem, size = 0x400, scoped, tag = 'input window, operand 14, single buffered']
    #allocation20 [shape = 'u8[1024]{0}', space=vmem, size = 0x400, scoped, tag = 'input window, operand 15, single buffered']
    #allocation21 [shape = 's32[1]{0}', space=sflag, size = 0x4, scoped, tag = 'scoped memory for tpu_custom_call.1']
    #allocation22 [shape = 'u8[512]{0}', space=vmem, size = 0x400, scoped, tag = 'input window, operand 17, single buffered']
    #allocation23 [shape = 'u8[1024]{0}', space=vmem, size = 0x400, scoped, tag = 'output window, operand 0, single buffered']
    %25 = vsyncpa [#allocation3], 0
    %26 = vsyncpa [#allocation6], 0
    %27 = vsyncpa [#allocation9], 0
    %28 = vsyncpa [#allocation12], 0
    %29 = vsyncpa [#allocation15], 0
    %30 = vsyncpa [#allocation18], 0
    %31 = vsyncpa [#allocation21], 0
    %32 = vsyncpa [#allocation4], 0
    // Predicated region
    $region2: #{tpu_custom_call.1} parent=1 // pred_check
      _
    $region3: #{tpu_custom_call.1} parent=1 // pred_check_branch
      %34 = sbr.rel (0) target = $region5
    $region4: #{tpu_custom_call.1} parent=1 // pred_region
      %s36 = ssub.s32 256, 256
      %37 = vsyncadd [#allocation3], %s36
      %s38 = sshll.u32 [#allocation2], 4
      %s39 = int_to_ptr.vmem [resolvable:$true] %s38
      %44 = dma.hbm_to_vmem [thread:$0]  %s0, 256, %s39, [#allocation3], 128, 128, 8
    $region5: #{tpu_custom_call.1} parent=1 // pred_fallthru
      _
    // Predicated region
    $region6: #{tpu_custom_call.1} parent=1 // pred_check
      _
    $region7: #{tpu_custom_call.1} parent=1 // pred_check_branch
      %46 = sbr.rel (0) target = $region9
    $region8: #{tpu_custom_call.1} parent=1 // pred_region
      %s48 = ssub.s32 32, 32
      %49 = vsyncadd [#allocation6], %s48
      %s50 = sshll.u32 [#allocation5], 4
      %s51 = int_to_ptr.vmem [resolvable:$true] %s50
      %56 = dma.hbm_to_vmem [thread:$0]  %s1, 32, %s51, [#allocation6], 16, 16, 1
    $region9: #{tpu_custom_call.1} parent=1 // pred_fallthru
      _
    // Predicated region
    $region10: #{tpu_custom_call.1} parent=1 // pred_check
      _
    $region11: #{tpu_custom_call.1} parent=1 // pred_check_branch
      %58 = sbr.rel (0) target = $region13
    $region12: #{tpu_custom_call.1} parent=1 // pred_region
      %s60 = ssub.s32 16, 16
      %61 = vsyncadd [#allocation6], %s60
      %s63 = sshll.u32 [#allocation7], 4
      %s64 = int_to_ptr.vmem [resolvable:$true] %s63
      %66 = dma.hbm_to_vmem [thread:$0]  %s2, 16, %s64, [#allocation6]
    $region13: #{tpu_custom_call.1} parent=1 // pred_fallthru
      _
    // Predicated region
    $region14: #{tpu_custom_call.1} parent=1 // pred_check
      _
    $region15: #{tpu_custom_call.1} parent=1 // pred_check_branch
      %68 = sbr.rel (0) target = $region17
    $region16: #{tpu_custom_call.1} parent=1 // pred_region
      %s70 = ssub.s32 16, 16
      %71 = vsyncadd [#allocation9], %s70
      %s73 = sshll.u32 [#allocation8], 4
      %s74 = int_to_ptr.vmem [resolvable:$true] %s73
      %76 = dma.hbm_to_vmem [thread:$0]  %s3, 16, %s74, [#allocation9]
    $region17: #{tpu_custom_call.1} parent=1 // pred_fallthru
      _
    // Predicated region
    $region18: #{tpu_custom_call.1} parent=1 // pred_check
      _
    $region19: #{tpu_custom_call.1} parent=1 // pred_check_branch
      %78 = sbr.rel (0) target = $region21
    $region20: #{tpu_custom_call.1} parent=1 // pred_region
      _
    $region21: #{tpu_custom_call.1} parent=1 // pred_fallthru
      _
    // Predicated region
    $region22: #{tpu_custom_call.1} parent=1 // pred_check
      _
    $region23: #{tpu_custom_call.1} parent=1 // pred_check_branch
      %80 = sbr.rel (0) target = $region25
    $region24: #{tpu_custom_call.1} parent=1 // pred_region
      %s82 = ssub.s32 32, 32
      %83 = vsyncadd [#allocation9], %s82
      %s84 = sshll.u32 [#allocation10], 4
      %s85 = int_to_ptr.vmem [resolvable:$true] %s84
      %90 = dma.hbm_to_vmem [thread:$0]  %s5, 32, %s85, [#allocation9], 16, 16, 1
    $region25: #{tpu_custom_call.1} parent=1 // pred_fallthru
      _
    // Predicated region
    $region26: #{tpu_custom_call.1} parent=1 // pred_check
      _
    $region27: #{tpu_custom_call.1} parent=1 // pred_check_branch
      %92 = sbr.rel (0) target = $region29
    $region28: #{tpu_custom_call.1} parent=1 // pred_region
      _
    $region29: #{tpu_custom_call.1} parent=1 // pred_fallthru
      _
    // Predicated region
    $region30: #{tpu_custom_call.1} parent=1 // pred_check
      _
    $region31: #{tpu_custom_call.1} parent=1 // pred_check_branch
      %94 = sbr.rel (0) target = $region33
    $region32: #{tpu_custom_call.1} parent=1 // pred_region
      %s96 = ssub.s32 32, 32
      %97 = vsyncadd [#allocation12], %s96
      %s98 = sshll.u32 [#allocation11], 4
      %s99 = int_to_ptr.vmem [resolvable:$true] %s98
      %104 = dma.hbm_to_vmem [thread:$0]  %s7, 32, %s99, [#allocation12], 16, 16, 1
    $region33: #{tpu_custom_call.1} parent=1 // pred_fallthru
      _
    // Predicated region
    $region34: #{tpu_custom_call.1} parent=1 // pred_check
      _
    $region35: #{tpu_custom_call.1} parent=1 // pred_check_branch
      %106 = sbr.rel (0) target = $region37
    $region36: #{tpu_custom_call.1} parent=1 // pred_region
      %s108 = ssub.s32 32, 32
      %109 = vsyncadd [#allocation12], %s108
      %s110 = sshll.u32 [#allocation13], 4
      %s111 = int_to_ptr.vmem [resolvable:$true] %s110
      %116 = dma.hbm_to_vmem [thread:$0]  %s8, 32, %s111, [#allocation12], 16, 16, 1
    $region37: #{tpu_custom_call.1} parent=1 // pred_fallthru
      _
    // Predicated region
    $region38: #{tpu_custom_call.1} parent=1 // pred_check
      _
    $region39: #{tpu_custom_call.1} parent=1 // pred_check_branch
      %118 = sbr.rel (0) target = $region41
    $region40: #{tpu_custom_call.1} parent=1 // pred_region
      %s120 = ssub.s32 32, 32
      %121 = vsyncadd [#allocation15], %s120
      %s122 = sshll.u32 [#allocation14], 4
      %s123 = int_to_ptr.vmem [resolvable:$true] %s122
      %128 = dma.hbm_to_vmem [thread:$0]  %s9, 32, %s123, [#allocation15], 16, 16, 1
    $region41: #{tpu_custom_call.1} parent=1 // pred_fallthru
      _
    // Predicated region
    $region42: #{tpu_custom_call.1} parent=1 // pred_check
      _
    $region43: #{tpu_custom_call.1} parent=1 // pred_check_branch
      %130 = sbr.rel (0) target = $region45
    $region44: #{tpu_custom_call.1} parent=1 // pred_region
      _
    $region45: #{tpu_custom_call.1} parent=1 // pred_fallthru
      _
    // Predicated region
    $region46: #{tpu_custom_call.1} parent=1 // pred_check
      _
    $region47: #{tpu_custom_call.1} parent=1 // pred_check_branch
      %132 = sbr.rel (0) target = $region49
    $region48: #{tpu_custom_call.1} parent=1 // pred_region
      %s134 = ssub.s32 32, 32
      %135 = vsyncadd [#allocation15], %s134
      %s136 = sshll.u32 [#allocation16], 4
      %s137 = int_to_ptr.vmem [resolvable:$true] %s136
      %142 = dma.hbm_to_vmem [thread:$0]  %s11, 32, %s137, [#allocation15], 16, 16, 1
    $region49: #{tpu_custom_call.1} parent=1 // pred_fallthru
      _
    // Predicated region
    $region50: #{tpu_custom_call.1} parent=1 // pred_check
      _
    $region51: #{tpu_custom_call.1} parent=1 // pred_check_branch
      %144 = sbr.rel (0) target = $region53
    $region52: #{tpu_custom_call.1} parent=1 // pred_region
      _
    $region53: #{tpu_custom_call.1} parent=1 // pred_fallthru
      _
    // Predicated region
    $region54: #{tpu_custom_call.1} parent=1 // pred_check
      _
    $region55: #{tpu_custom_call.1} parent=1 // pred_check_branch
      %146 = sbr.rel (0) target = $region57
    $region56: #{tpu_custom_call.1} parent=1 // pred_region
      %s148 = ssub.s32 32, 32
      %149 = vsyncadd [#allocation18], %s148
      %s150 = sshll.u32 [#allocation17], 4
      %s151 = int_to_ptr.vmem [resolvable:$true] %s150
      %156 = dma.hbm_to_vmem [thread:$0]  %s13, 32, %s151, [#allocation18], 16, 16, 1
    $region57: #{tpu_custom_call.1} parent=1 // pred_fallthru
      _
    // Predicated region
    $region58: #{tpu_custom_call.1} parent=1 // pred_check
      _
    $region59: #{tpu_custom_call.1} parent=1 // pred_check_branch
      %158 = sbr.rel (0) target = $region61
    $region60: #{tpu_custom_call.1} parent=1 // pred_region
      %s160 = ssub.s32 32, 32
      %161 = vsyncadd [#allocation18], %s160
      %s162 = sshll.u32 [#allocation19], 4
      %s163 = int_to_ptr.vmem [resolvable:$true] %s162
      %168 = dma.hbm_to_vmem [thread:$0]  %s14, 32, %s163, [#allocation18], 16, 16, 1
    $region61: #{tpu_custom_call.1} parent=1 // pred_fallthru
      _
    // Predicated region
    $region62: #{tpu_custom_call.1} parent=1 // pred_check
      _
    $region63: #{tpu_custom_call.1} parent=1 // pred_check_branch
      %170 = sbr.rel (0) target = $region65
    $region64: #{tpu_custom_call.1} parent=1 // pred_region
      %s172 = ssub.s32 32, 32
      %173 = vsyncadd [#allocation21], %s172
      %s174 = sshll.u32 [#allocation20], 4
      %s175 = int_to_ptr.vmem [resolvable:$true] %s174
      %180 = dma.hbm_to_vmem [thread:$0]  %s15, 32, %s175, [#allocation21], 16, 16, 1
    $region65: #{tpu_custom_call.1} parent=1 // pred_fallthru
      _
    // Predicated region
    $region66: #{tpu_custom_call.1} parent=1 // pred_check
      _
    $region67: #{tpu_custom_call.1} parent=1 // pred_check_branch
      %182 = sbr.rel (0) target = $region69
    $region68: #{tpu_custom_call.1} parent=1 // pred_region
      _
    $region69: #{tpu_custom_call.1} parent=1 // pred_fallthru
      _
    // Predicated region
    $region70: #{tpu_custom_call.1} parent=1 // pred_check
      _
    $region71: #{tpu_custom_call.1} parent=1 // pred_check_branch
      %184 = sbr.rel (0) target = $region73
    $region72: #{tpu_custom_call.1} parent=1 // pred_region
      %s186 = ssub.s32 16, 16
      %187 = vsyncadd [#allocation21], %s186
      %s189 = sshll.u32 [#allocation22], 4
      %s190 = int_to_ptr.vmem [resolvable:$true] %s189
      %192 = dma.hbm_to_vmem [thread:$0]  %s17, 16, %s190, [#allocation21]
    $region73: #{tpu_custom_call.1} parent=1 // pred_fallthru
      _
    // Predicated region
    $region74: #{tpu_custom_call.1} parent=1 // pred_check
      _
    $region75: #{tpu_custom_call.1} parent=1 // pred_check_branch
      %194 = sbr.rel (0) target = $region77
    $region76: #{tpu_custom_call.1} parent=1 // pred_region
      _
    $region77: #{tpu_custom_call.1} parent=1 // pred_fallthru
      _
    // Predicated region
    $region78: #{tpu_custom_call.1} parent=1 // pred_check
      _
    $region79: #{tpu_custom_call.1} parent=1 // pred_check_branch
      %196 = sbr.rel (0) target = $region81
    $region80: #{tpu_custom_call.1} parent=1 // pred_region
      _
    $region81: #{tpu_custom_call.1} parent=1 // pred_fallthru
      _
    // Predicated region
    $region82: #{tpu_custom_call.1} parent=1 // pred_check
      _
    $region83: #{tpu_custom_call.1} parent=1 // pred_check_branch
      %198 = sbr.rel (0) target = $region85
    $region84: #{tpu_custom_call.1} parent=1 // pred_region
      %199 = dma.done [#allocation3], 256
    $region85: #{tpu_custom_call.1} parent=1 // pred_fallthru
      _
    // Predicated region
    $region86: #{tpu_custom_call.1} parent=1 // pred_check
      _
    $region87: #{tpu_custom_call.1} parent=1 // pred_check_branch
      %201 = sbr.rel (0) target = $region89
    $region88: #{tpu_custom_call.1} parent=1 // pred_region
      %202 = dma.done [#allocation6], 32
    $region89: #{tpu_custom_call.1} parent=1 // pred_fallthru
      _
    // Predicated region
    $region90: #{tpu_custom_call.1} parent=1 // pred_check
      _
    $region91: #{tpu_custom_call.1} parent=1 // pred_check_branch
      %204 = sbr.rel (0) target = $region93
    $region92: #{tpu_custom_call.1} parent=1 // pred_region
      %205 = dma.done [#allocation6], 16
    $region93: #{tpu_custom_call.1} parent=1 // pred_fallthru
      _
    // Predicated region
    $region94: #{tpu_custom_call.1} parent=1 // pred_check
      _
    $region95: #{tpu_custom_call.1} parent=1 // pred_check_branch
      %207 = sbr.rel (0) target = $region97
    $region96: #{tpu_custom_call.1} parent=1 // pred_region
      %208 = dma.done [#allocation9], 16
    $region97: #{tpu_custom_call.1} parent=1 // pred_fallthru
      _
    // Predicated region
    $region98: #{tpu_custom_call.1} parent=1 // pred_check
      _
    $region99: #{tpu_custom_call.1} parent=1 // pred_check_branch
      %210 = sbr.rel (0) target = $region101
    $region100: #{tpu_custom_call.1} parent=1 // pred_region
      %211 = dma.done [#allocation9], 32
    $region101: #{tpu_custom_call.1} parent=1 // pred_fallthru
      _
    // Predicated region
    $region102: #{tpu_custom_call.1} parent=1 // pred_check
      _
    $region103: #{tpu_custom_call.1} parent=1 // pred_check_branch
      %213 = sbr.rel (0) target = $region105
    $region104: #{tpu_custom_call.1} parent=1 // pred_region
      %214 = dma.done [#allocation12], 32
    $region105: #{tpu_custom_call.1} parent=1 // pred_fallthru
      _
    // Predicated region
    $region106: #{tpu_custom_call.1} parent=1 // pred_check
      _
    $region107: #{tpu_custom_call.1} parent=1 // pred_check_branch
      %216 = sbr.rel (0) target = $region109
    $region108: #{tpu_custom_call.1} parent=1 // pred_region
      %217 = dma.done [#allocation12], 32
    $region109: #{tpu_custom_call.1} parent=1 // pred_fallthru
      _
    // Predicated region
    $region110: #{tpu_custom_call.1} parent=1 // pred_check
      _
    $region111: #{tpu_custom_call.1} parent=1 // pred_check_branch
      %219 = sbr.rel (0) target = $region113
    $region112: #{tpu_custom_call.1} parent=1 // pred_region
      %220 = dma.done [#allocation15], 32
    $region113: #{tpu_custom_call.1} parent=1 // pred_fallthru
      _
    // Predicated region
    $region114: #{tpu_custom_call.1} parent=1 // pred_check
      _
    $region115: #{tpu_custom_call.1} parent=1 // pred_check_branch
      %222 = sbr.rel (0) target = $region117
    $region116: #{tpu_custom_call.1} parent=1 // pred_region
      %223 = dma.done [#allocation15], 32
    $region117: #{tpu_custom_call.1} parent=1 // pred_fallthru
      _
    // Predicated region
    $region118: #{tpu_custom_call.1} parent=1 // pred_check
      _
    $region119: #{tpu_custom_call.1} parent=1 // pred_check_branch
      %225 = sbr.rel (0) target = $region121
    $region120: #{tpu_custom_call.1} parent=1 // pred_region
      %226 = dma.done [#allocation18], 32
    $region121: #{tpu_custom_call.1} parent=1 // pred_fallthru
      _
    // Predicated region
    $region122: #{tpu_custom_call.1} parent=1 // pred_check
      _
    $region123: #{tpu_custom_call.1} parent=1 // pred_check_branch
      %228 = sbr.rel (0) target = $region125
    $region124: #{tpu_custom_call.1} parent=1 // pred_region
      %229 = dma.done [#allocation18], 32
    $region125: #{tpu_custom_call.1} parent=1 // pred_fallthru
      _
    // Predicated region
    $region126: #{tpu_custom_call.1} parent=1 // pred_check
      _
    $region127: #{tpu_custom_call.1} parent=1 // pred_check_branch
      %231 = sbr.rel (0) target = $region129
    $region128: #{tpu_custom_call.1} parent=1 // pred_region
      %232 = dma.done [#allocation21], 32
    $region129: #{tpu_custom_call.1} parent=1 // pred_fallthru
      _
    // Predicated region
    $region130: #{tpu_custom_call.1} parent=1 // pred_check
      _
    $region131: #{tpu_custom_call.1} parent=1 // pred_check_branch
      %234 = sbr.rel (0) target = $region133
    $region132: #{tpu_custom_call.1} parent=1 // pred_region
      %235 = dma.done [#allocation21], 16
    $region133: #{tpu_custom_call.1} parent=1 // pred_fallthru
      _
    %v236 = vld [vmem:[#allocation5] sm:$0x1]
    %v237 = vld [vmem:[#allocation5 + $0x1] sm:$0x1]
    %v240 = vlaneseq
    %v241 = vshrl.u32 %v240, 7
    %v242 = vsub.s32 0, %v241
    %v243 = vrot.slane %v236, %v242
    %v244 = vlaneseq
    %v245 = vshrl.u32 %v244, 7
    %v246 = vsub.s32 0, %v245
    %v247 = vrot.slane %v237, %v246
    %v250 = vld [vmem:[#allocation2] sm:$0xff]
    %v251 = vld [vmem:[#allocation2 + $0x8] sm:$0xff]
    %v252 = vld [vmem:[#allocation7] sm:$0x1]
    %v253 = vld [vmem:[#allocation8] sm:$0x1]
    %vm254 = vcmask 261120
    %v255 = vsel %vm254, %v250, 0.0
    %256 = vadd.xlane.f32.xlu0 %v255
    %v257 = vpop.xlane.xlu0 %256
    %v258 = vsel %vm254, %v251, 0.0
    %259 = vadd.xlane.f32.xlu0 %v258
    %v260 = vpop.xlane.xlu0 %259
    %v261 = vrcp.pop 32.0
    %v262 = vmul.f32 %v257, %v261
    %v263 = vmul.f32 %v260, %v261
    %v264 = vsub.f32 %v250, %v262
    %v265 = vsub.f32 %v251, %v263
    %v266 = vmul.f32 %v264, %v264
    %v267 = vmul.f32 %v265, %v265
    %v268 = vsel %vm254, %v266, 0.0
    %269 = vadd.xlane.f32.xlu0 %v268
    %v270 = vpop.xlane.xlu0 %269
    %v271 = vsel %vm254, %v267, 0.0
    %272 = vadd.xlane.f32.xlu0 %v271
    %v273 = vpop.xlane.xlu0 %272
    %v274 = vmul.f32 %v270, %v261
    %v275 = vmul.f32 %v273, %v261
    %v276 = vadd.f32 %v274, 1e-12
    %v277 = vadd.f32 %v275, 1e-12
    %v278 = vrsqrt.pop %v276
    %v279 = vrsqrt.pop %v277
    %v280 = vmul.f32 %v264, %v278
    %v281 = vmul.f32 %v265, %v279
    %v283 = vlaneseq
    %v284 = vshrl.u32 %v283, 7
    %v285 = vsub.s32 0, %v284
    %v286 = vrot.slane %v252, %v285
    %v288 = vmul.f32 %v280, %v286
    %v289 = vmul.f32 %v281, %v286
    %v291 = vlaneseq
    %v292 = vshrl.u32 %v291, 7
    %v293 = vsub.s32 0, %v292
    %v294 = vrot.slane %v253, %v293
    %v296 = vadd.f32 %v288, %v294
    %v297 = vadd.f32 %v289, %v294
    %v298 = vld [vmem:[%s4] sm:$0xff]
    %v299 = vld [vmem:[%s4 + $0x8] sm:$0xff]
    %v300 = vld [vmem:[%s4 + $0x10] sm:$0xff]
    %v301 = vld [vmem:[%s4 + $0x18] sm:$0xff]
    %v302 = vld [vmem:[#allocation10] sm:$0x1]
    %v304 = vlaneseq
    %v305 = vshrl.u32 %v304, 7
    %v306 = vsub.s32 0, %v305
    %v307 = vrot.slane %v302, %v306
    %v310 = vsel %vm254, %v296, 0
    %v313 = vsel %vm254, %v297, 0
    %315 = vmatprep.subr.mxu0 0.0
    %316 = vmatpush1.msra.mxu0 %v298
    %317 = vmatprep.subr.mxu0 0.0
    %318 = vmatpush1.msra.mxu0 %v299
    %319 = vmatprep.subr.mxu0 0.0
    %320 = vmatpush1.msra.mxu0 %v300
    %321 = vmatprep.subr.mxu0 0.0
    %322 = vmatpush1.msra.mxu0 %v301
    %323 = vmatprep.subr.mxu0 0.0
    %324 = vmatpush1.msra.mxu0 0.0
    %325 = vmatprep.subr.mxu0 0.0
    %326 = vmatpush1.msra.mxu0 0.0
    %327 = vmatprep.subr.mxu0 0.0
    %328 = vmatpush1.msra.mxu0 0.0
    %329 = vmatprep.subr.mxu0 0.0
    %330 = vmatpush1.msra.mxu0 0.0
    %331 = vmatprep.subr.mxu0 0.0
    %332 = vmatpush1.msra.mxu0 0.0
    %333 = vmatprep.subr.mxu0 0.0
    %334 = vmatpush1.msra.mxu0 0.0
    %335 = vmatprep.subr.mxu0 0.0
    %336 = vmatpush1.msra.mxu0 0.0
    %337 = vmatprep.subr.mxu0 0.0
    %338 = vmatpush1.msra.mxu0 0.0
    %339 = vmatprep.subr.mxu0 0.0
    %340 = vmatpush1.msra.mxu0 0.0
    %341 = vmatprep.subr.mxu0 0.0
    %342 = vmatpush1.msra.mxu0 0.0
    %343 = vmatprep.subr.mxu0 0.0
    %344 = vmatpush1.msra.mxu0 0.0
    %345 = vmatprep.subr.mxu0 0.0
    %346 = vmatpush1.msra.mxu0 0.0
    %347 = vmatprep.subr.mxu0 0.0
    %348 = vmatpush1.msra.mxu0 0.0
    %349 = vmatprep.subr.mxu0 0.0
    %350 = vmatpush1.msra.mxu0 0.0
    %351 = vmatprep.subr.mxu0 0.0
    %352 = vmatpush1.msra.mxu0 0.0
    %353 = vmatprep.subr.mxu0 0.0
    %354 = vmatpush1.msra.mxu0 0.0
    %355 = vmatprep.subr.mxu0 0.0
    %356 = vmatpush1.msra.mxu0 0.0
    %357 = vmatprep.subr.mxu0 0.0
    %358 = vmatpush1.msra.mxu0 0.0
    %359 = vmatprep.subr.mxu0 0.0
    %360 = vmatpush1.msra.mxu0 0.0
    %361 = vmatprep.subr.mxu0 0.0
    %362 = vmatpush1.msra.mxu0 0.0
    %363 = vmatprep.subr.mxu0 0.0
    %364 = vmatpush1.msra.mxu0 0.0
    %365 = vmatprep.subr.mxu0 0.0
    %366 = vmatpush1.msra.mxu0 0.0
    %367 = vmatprep.subr.mxu0 0.0
    %368 = vmatpush1.msra.mxu0 0.0
    %369 = vmatprep.subr.mxu0 0.0
    %370 = vmatpush1.msra.mxu0 0.0
    %371 = vmatprep.subr.mxu0 0.0
    %372 = vmatpush1.msra.mxu0 0.0
    %373 = vmatprep.subr.mxu0 0.0
    %374 = vmatpush1.msra.mxu0 0.0
    %375 = vmatprep.subr.mxu0 0.0
    %376 = vmatpush1.msra.mxu0 0.0
    %377 = vmatprep.subr.mxu0 0.0
    %378 = vmatpush1.msra.mxu0 0.0
    %379 = vmatprep.mubr.f32.mxu0 0.0
    %380 = vmatmul.mubr.f32.gmra.mrb[0].mxu0 %v310
    %v381 = vpop.f32.mrb[0].mxu0
    %v382 = vadd.f32 %v307, %v381
    %v383 = vpop.f32.mrb[0].mxu0
    %384 = vmatprep.mubr.f32.mxu0 0.0
    %385 = vmatmul.mubr.f32.gmra.mrb[0].mxu0 %v313
    %v386 = vpop.f32.mrb[0].mxu0
    %v387 = vadd.f32 %v307, %v386
    %v388 = vpop.f32.mrb[0].mxu0
    %389 = vdwg.mxu0
    %391 = vrot.lane.b32.xlu0 %v382, 96
    %v392 = vpop.permute.xlu0 %391
    %vm393 = vcmask 130048
    %v394 = vsel %vm393, %v382, 0
    %v396 = vsel %vm393, %v392, 0
    %398 = vmatprep.subr.mxu0 0.0
    %399 = vmatpush1.xpose.msra.mxu0 %v396
    %400 = vmatprep.subr.mxu0 0.0
    %401 = vmatpush1.xpose.msra.mxu0 0.0
    %402 = vmatprep.subr.mxu0 0.0
    %403 = vmatpush1.xpose.msra.mxu0 0.0
    %404 = vmatprep.subr.mxu0 0.0
    %405 = vmatpush1.xpose.msra.mxu0 0.0
    %406 = vmatprep.subr.mxu0 0.0
    %407 = vmatpush1.xpose.msra.mxu0 0.0
    %408 = vmatprep.subr.mxu0 0.0
    %409 = vmatpush1.xpose.msra.mxu0 0.0
    %410 = vmatprep.subr.mxu0 0.0
    %411 = vmatpush1.xpose.msra.mxu0 0.0
    %412 = vmatprep.subr.mxu0 0.0
    %413 = vmatpush1.xpose.msra.mxu0 0.0
    %414 = vmatprep.subr.mxu0 0.0
    %415 = vmatpush1.xpose.msra.mxu0 0.0
    %416 = vmatprep.subr.mxu0 0.0
    %417 = vmatpush1.xpose.msra.mxu0 0.0
    %418 = vmatprep.subr.mxu0 0.0
    %419 = vmatpush1.xpose.msra.mxu0 0.0
    %420 = vmatprep.subr.mxu0 0.0
    %421 = vmatpush1.xpose.msra.mxu0 0.0
    %422 = vmatprep.subr.mxu0 0.0
    %423 = vmatpush1.xpose.msra.mxu0 0.0
    %424 = vmatprep.subr.mxu0 0.0
    %425 = vmatpush1.xpose.msra.mxu0 0.0
    %426 = vmatprep.subr.mxu0 0.0
    %427 = vmatpush1.xpose.msra.mxu0 0.0
    %428 = vmatprep.subr.mxu0 0.0
    %429 = vmatpush1.xpose.msra.mxu0 0.0
    %430 = vmatprep.subr.mxu0 0.0
    %431 = vmatpush1.xpose.msra.mxu0 0.0
    %432 = vmatprep.subr.mxu0 0.0
    %433 = vmatpush1.xpose.msra.mxu0 0.0
    %434 = vmatprep.subr.mxu0 0.0
    %435 = vmatpush1.xpose.msra.mxu0 0.0
    %436 = vmatprep.subr.mxu0 0.0
    %437 = vmatpush1.xpose.msra.mxu0 0.0
    %438 = vmatprep.subr.mxu0 0.0
    %439 = vmatpush1.xpose.msra.mxu0 0.0
    %440 = vmatprep.subr.mxu0 0.0
    %441 = vmatpush1.xpose.msra.mxu0 0.0
    %442 = vmatprep.subr.mxu0 0.0
    %443 = vmatpush1.xpose.msra.mxu0 0.0
    %444 = vmatprep.subr.mxu0 0.0
    %445 = vmatpush1.xpose.msra.mxu0 0.0
    %446 = vmatprep.subr.mxu0 0.0
    %447 = vmatpush1.xpose.msra.mxu0 0.0
    %448 = vmatprep.subr.mxu0 0.0
    %449 = vmatpush1.xpose.msra.mxu0 0.0
    %450 = vmatprep.subr.mxu0 0.0
    %451 = vmatpush1.xpose.msra.mxu0 0.0
    %452 = vmatprep.subr.mxu0 0.0
    %453 = vmatpush1.xpose.msra.mxu0 0.0
    %454 = vmatprep.subr.mxu0 0.0
    %455 = vmatpush1.xpose.msra.mxu0 0.0
    %456 = vmatprep.subr.mxu0 0.0
    %457 = vmatpush1.xpose.msra.mxu0 0.0
    %458 = vmatprep.subr.mxu0 0.0
    %459 = vmatpush1.xpose.msra.mxu0 0.0
    %460 = vmatprep.subr.mxu0 0.0
    %461 = vmatpush1.xpose.msra.mxu0 0.0
    %462 = vmatprep.mubr.f32.mxu0 0.0
    %463 = vmatmul.mubr.f32.gmra.mrb[0].mxu0 %v394
    %v464 = vpop.f32.mrb[0].mxu0
    %v465 = vadd.f32 %v243, %v464
    %v466 = vpop.f32.mrb[0].mxu0
    %467 = vdwg.mxu0
    %469 = vrot.lane.b32.xlu0 %v387, 96
    %v470 = vpop.permute.xlu0 %469
    %v471 = vsel %vm393, %v387, 0
    %v473 = vsel %vm393, %v470, 0
    %475 = vmatprep.subr.mxu0 0.0
    %476 = vmatpush1.xpose.msra.mxu0 %v473
    %477 = vmatprep.subr.mxu0 0.0
    %478 = vmatpush1.xpose.msra.mxu0 0.0
    %479 = vmatprep.subr.mxu0 0.0
    %480 = vmatpush1.xpose.msra.mxu0 0.0
    %481 = vmatprep.subr.mxu0 0.0
    %482 = vmatpush1.xpose.msra.mxu0 0.0
    %483 = vmatprep.subr.mxu0 0.0
    %484 = vmatpush1.xpose.msra.mxu0 0.0
    %485 = vmatprep.subr.mxu0 0.0
    %486 = vmatpush1.xpose.msra.mxu0 0.0
    %487 = vmatprep.subr.mxu0 0.0
    %488 = vmatpush1.xpose.msra.mxu0 0.0
    %489 = vmatprep.subr.mxu0 0.0
    %490 = vmatpush1.xpose.msra.mxu0 0.0
    %491 = vmatprep.subr.mxu0 0.0
    %492 = vmatpush1.xpose.msra.mxu0 0.0
    %493 = vmatprep.subr.mxu0 0.0
    %494 = vmatpush1.xpose.msra.mxu0 0.0
    %495 = vmatprep.subr.mxu0 0.0
    %496 = vmatpush1.xpose.msra.mxu0 0.0
    %497 = vmatprep.subr.mxu0 0.0
    %498 = vmatpush1.xpose.msra.mxu0 0.0
    %499 = vmatprep.subr.mxu0 0.0
    %500 = vmatpush1.xpose.msra.mxu0 0.0
    %501 = vmatprep.subr.mxu0 0.0
    %502 = vmatpush1.xpose.msra.mxu0 0.0
    %503 = vmatprep.subr.mxu0 0.0
    %504 = vmatpush1.xpose.msra.mxu0 0.0
    %505 = vmatprep.subr.mxu0 0.0
    %506 = vmatpush1.xpose.msra.mxu0 0.0
    %507 = vmatprep.subr.mxu0 0.0
    %508 = vmatpush1.xpose.msra.mxu0 0.0
    %509 = vmatprep.subr.mxu0 0.0
    %510 = vmatpush1.xpose.msra.mxu0 0.0
    %511 = vmatprep.subr.mxu0 0.0
    %512 = vmatpush1.xpose.msra.mxu0 0.0
    %513 = vmatprep.subr.mxu0 0.0
    %514 = vmatpush1.xpose.msra.mxu0 0.0
    %515 = vmatprep.subr.mxu0 0.0
    %516 = vmatpush1.xpose.msra.mxu0 0.0
    %517 = vmatprep.subr.mxu0 0.0
    %518 = vmatpush1.xpose.msra.mxu0 0.0
    %519 = vmatprep.subr.mxu0 0.0
    %520 = vmatpush1.xpose.msra.mxu0 0.0
    %521 = vmatprep.subr.mxu0 0.0
    %522 = vmatpush1.xpose.msra.mxu0 0.0
    %523 = vmatprep.subr.mxu0 0.0
    %524 = vmatpush1.xpose.msra.mxu0 0.0
    %525 = vmatprep.subr.mxu0 0.0
    %526 = vmatpush1.xpose.msra.mxu0 0.0
    %527 = vmatprep.subr.mxu0 0.0
    %528 = vmatpush1.xpose.msra.mxu0 0.0
    %529 = vmatprep.subr.mxu0 0.0
    %530 = vmatpush1.xpose.msra.mxu0 0.0
    %531 = vmatprep.subr.mxu0 0.0
    %532 = vmatpush1.xpose.msra.mxu0 0.0
    %533 = vmatprep.subr.mxu0 0.0
    %534 = vmatpush1.xpose.msra.mxu0 0.0
    %535 = vmatprep.subr.mxu0 0.0
    %536 = vmatpush1.xpose.msra.mxu0 0.0
    %537 = vmatprep.subr.mxu0 0.0
    %538 = vmatpush1.xpose.msra.mxu0 0.0
    %539 = vmatprep.mubr.f32.mxu0 0.0
    %540 = vmatmul.mubr.f32.gmra.mrb[0].mxu0 %v471
    %v541 = vpop.f32.mrb[0].mxu0
    %v542 = vadd.f32 %v247, %v541
    %v543 = vpop.f32.mrb[0].mxu0
    %544 = vdwg.mxu0
    %vm545 = vcmask 64512
    %v546 = vsel %vm545, %v465, -inf
    %547 = vmax.xlane.f32.xlu0 %v546
    %v548 = vpop.xlane.xlu0 %547
    %v549 = vsel %vm545, %v542, -inf
    %550 = vmax.xlane.f32.xlu0 %v549
    %v551 = vpop.xlane.xlu0 %550
    %v552 = vsub.f32 %v465, %v548
    %v553 = vsub.f32 %v542, %v551
    %v554 = vmul.f32 %v552, 1.442695
    %v555 = vpow.pop %v554
    %v556 = vmul.f32 %v553, 1.442695
    %v557 = vpow.pop %v556
    %v558 = vsel %vm545, %v555, 0.0
    %559 = vadd.xlane.f32.xlu0 %v558
    %v560 = vpop.xlane.xlu0 %559
    %v561 = vsel %vm545, %v557, 0.0
    %562 = vadd.xlane.f32.xlu0 %v561
    %v563 = vpop.xlane.xlu0 %562
    %v564 = vrcp.pop %v560
    %v565 = vrcp.pop %v563
    %v566 = vmul.f32 %v555, %v564
    %v567 = vmul.f32 %v557, %v565
    %568 = vrot.lane.b32.xlu0 %v382, 64
    %v569 = vpop.permute.xlu0 %568
    %v572 = vsel %vm545, %v566, 0
    %574 = vmatprep.subr.mxu0 0.0
    %575 = vmatpush1.msra.mxu0 %v569
    %576 = vmatprep.subr.mxu0 0.0
    %577 = vmatpush1.msra.mxu0 0.0
    %578 = vmatprep.subr.mxu0 0.0
    %579 = vmatpush1.msra.mxu0 0.0
    %580 = vmatprep.subr.mxu0 0.0
    %581 = vmatpush1.msra.mxu0 0.0
    %582 = vmatprep.subr.mxu0 0.0
    %583 = vmatpush1.msra.mxu0 0.0
    %584 = vmatprep.subr.mxu0 0.0
    %585 = vmatpush1.msra.mxu0 0.0
    %586 = vmatprep.subr.mxu0 0.0
    %587 = vmatpush1.msra.mxu0 0.0
    %588 = vmatprep.subr.mxu0 0.0
    %589 = vmatpush1.msra.mxu0 0.0
    %590 = vmatprep.subr.mxu0 0.0
    %591 = vmatpush1.msra.mxu0 0.0
    %592 = vmatprep.subr.mxu0 0.0
    %593 = vmatpush1.msra.mxu0 0.0
    %594 = vmatprep.subr.mxu0 0.0
    %595 = vmatpush1.msra.mxu0 0.0
    %596 = vmatprep.subr.mxu0 0.0
    %597 = vmatpush1.msra.mxu0 0.0
    %598 = vmatprep.subr.mxu0 0.0
    %599 = vmatpush1.msra.mxu0 0.0
    %600 = vmatprep.subr.mxu0 0.0
    %601 = vmatpush1.msra.mxu0 0.0
    %602 = vmatprep.subr.mxu0 0.0
    %603 = vmatpush1.msra.mxu0 0.0
    %604 = vmatprep.subr.mxu0 0.0
    %605 = vmatpush1.msra.mxu0 0.0
    %606 = vmatprep.subr.mxu0 0.0
    %607 = vmatpush1.msra.mxu0 0.0
    %608 = vmatprep.subr.mxu0 0.0
    %609 = vmatpush1.msra.mxu0 0.0
    %610 = vmatprep.subr.mxu0 0.0
    %611 = vmatpush1.msra.mxu0 0.0
    %612 = vmatprep.subr.mxu0 0.0
    %613 = vmatpush1.msra.mxu0 0.0
    %614 = vmatprep.subr.mxu0 0.0
    %615 = vmatpush1.msra.mxu0 0.0
    %616 = vmatprep.subr.mxu0 0.0
    %617 = vmatpush1.msra.mxu0 0.0
    %618 = vmatprep.subr.mxu0 0.0
    %619 = vmatpush1.msra.mxu0 0.0
    %620 = vmatprep.subr.mxu0 0.0
    %621 = vmatpush1.msra.mxu0 0.0
    %622 = vmatprep.subr.mxu0 0.0
    %623 = vmatpush1.msra.mxu0 0.0
    %624 = vmatprep.subr.mxu0 0.0
    %625 = vmatpush1.msra.mxu0 0.0
    %626 = vmatprep.subr.mxu0 0.0
    %627 = vmatpush1.msra.mxu0 0.0
    %628 = vmatprep.subr.mxu0 0.0
    %629 = vmatpush1.msra.mxu0 0.0
    %630 = vmatprep.subr.mxu0 0.0
    %631 = vmatpush1.msra.mxu0 0.0
    %632 = vmatprep.subr.mxu0 0.0
    %633 = vmatpush1.msra.mxu0 0.0
    %634 = vmatprep.subr.mxu0 0.0
    %635 = vmatpush1.msra.mxu0 0.0
    %636 = vmatprep.subr.mxu0 0.0
    %637 = vmatpush1.msra.mxu0 0.0
    %638 = vmatprep.mubr.f32.mxu0 0.0
    %639 = vmatmul.mubr.f32.gmra.mrb[0].mxu0 %v572
    %v640 = vpop.f32.mrb[0].mxu0
    %v641 = vadd.f32 0.0, %v640
    %v642 = vpop.f32.mrb[0].mxu0
    %643 = vdwg.mxu0
    %644 = vrot.lane.b32.xlu0 %v387, 64
    %v645 = vpop.permute.xlu0 %644
    %v648 = vsel %vm545, %v567, 0
    %650 = vmatprep.subr.mxu0 0.0
    %651 = vmatpush1.msra.mxu0 %v645
    %652 = vmatprep.subr.mxu0 0.0
    %653 = vmatpush1.msra.mxu0 0.0
    %654 = vmatprep.subr.mxu0 0.0
    %655 = vmatpush1.msra.mxu0 0.0
    %656 = vmatprep.subr.mxu0 0.0
    %657 = vmatpush1.msra.mxu0 0.0
    %658 = vmatprep.subr.mxu0 0.0
    %659 = vmatpush1.msra.mxu0 0.0
    %660 = vmatprep.subr.mxu0 0.0
    %661 = vmatpush1.msra.mxu0 0.0
    %662 = vmatprep.subr.mxu0 0.0
    %663 = vmatpush1.msra.mxu0 0.0
    %664 = vmatprep.subr.mxu0 0.0
    %665 = vmatpush1.msra.mxu0 0.0
    %666 = vmatprep.subr.mxu0 0.0
    %667 = vmatpush1.msra.mxu0 0.0
    %668 = vmatprep.subr.mxu0 0.0
    %669 = vmatpush1.msra.mxu0 0.0
    %670 = vmatprep.subr.mxu0 0.0
    %671 = vmatpush1.msra.mxu0 0.0
    %672 = vmatprep.subr.mxu0 0.0
    %673 = vmatpush1.msra.mxu0 0.0
    %674 = vmatprep.subr.mxu0 0.0
    %675 = vmatpush1.msra.mxu0 0.0
    %676 = vmatprep.subr.mxu0 0.0
    %677 = vmatpush1.msra.mxu0 0.0
    %678 = vmatprep.subr.mxu0 0.0
    %679 = vmatpush1.msra.mxu0 0.0
    %680 = vmatprep.subr.mxu0 0.0
    %681 = vmatpush1.msra.mxu0 0.0
    %682 = vmatprep.subr.mxu0 0.0
    %683 = vmatpush1.msra.mxu0 0.0
    %684 = vmatprep.subr.mxu0 0.0
    %685 = vmatpush1.msra.mxu0 0.0
    %686 = vmatprep.subr.mxu0 0.0
    %687 = vmatpush1.msra.mxu0 0.0
    %688 = vmatprep.subr.mxu0 0.0
    %689 = vmatpush1.msra.mxu0 0.0
    %690 = vmatprep.subr.mxu0 0.0
    %691 = vmatpush1.msra.mxu0 0.0
    %692 = vmatprep.subr.mxu0 0.0
    %693 = vmatpush1.msra.mxu0 0.0
    %694 = vmatprep.subr.mxu0 0.0
    %695 = vmatpush1.msra.mxu0 0.0
    %696 = vmatprep.subr.mxu0 0.0
    %697 = vmatpush1.msra.mxu0 0.0
    %698 = vmatprep.subr.mxu0 0.0
    %699 = vmatpush1.msra.mxu0 0.0
    %700 = vmatprep.subr.mxu0 0.0
    %701 = vmatpush1.msra.mxu0 0.0
    %702 = vmatprep.subr.mxu0 0.0
    %703 = vmatpush1.msra.mxu0 0.0
    %704 = vmatprep.subr.mxu0 0.0
    %705 = vmatpush1.msra.mxu0 0.0
    %706 = vmatprep.subr.mxu0 0.0
    %707 = vmatpush1.msra.mxu0 0.0
    %708 = vmatprep.subr.mxu0 0.0
    %709 = vmatpush1.msra.mxu0 0.0
    %710 = vmatprep.subr.mxu0 0.0
    %711 = vmatpush1.msra.mxu0 0.0
    %712 = vmatprep.subr.mxu0 0.0
    %713 = vmatpush1.msra.mxu0 0.0
    %714 = vmatprep.mubr.f32.mxu0 0.0
    %715 = vmatmul.mubr.f32.gmra.mrb[0].mxu0 %v648
    %v716 = vpop.f32.mrb[0].mxu0
    %v717 = vadd.f32 0.0, %v716
    %v718 = vpop.f32.mrb[0].mxu0
    %719 = vdwg.mxu0
    %720 = vrot.lane.b32.xlu0 %v382, 112
    %v721 = vpop.permute.xlu0 %720
    %722 = vrot.lane.b32.xlu0 %v382, 80
    %v723 = vpop.permute.xlu0 %722
    %v724 = vsel %vm393, %v721, 0
    %v726 = vsel %vm393, %v723, 0
    %728 = vmatprep.subr.mxu0 0.0
    %729 = vmatpush1.xpose.msra.mxu0 %v726
    %730 = vmatprep.subr.mxu0 0.0
    %731 = vmatpush1.xpose.msra.mxu0 0.0
    %732 = vmatprep.subr.mxu0 0.0
    %733 = vmatpush1.xpose.msra.mxu0 0.0
    %734 = vmatprep.subr.mxu0 0.0
    %735 = vmatpush1.xpose.msra.mxu0 0.0
    %736 = vmatprep.subr.mxu0 0.0
    %737 = vmatpush1.xpose.msra.mxu0 0.0
    %738 = vmatprep.subr.mxu0 0.0
    %739 = vmatpush1.xpose.msra.mxu0 0.0
    %740 = vmatprep.subr.mxu0 0.0
    %741 = vmatpush1.xpose.msra.mxu0 0.0
    %742 = vmatprep.subr.mxu0 0.0
    %743 = vmatpush1.xpose.msra.mxu0 0.0
    %744 = vmatprep.subr.mxu0 0.0
    %745 = vmatpush1.xpose.msra.mxu0 0.0
    %746 = vmatprep.subr.mxu0 0.0
    %747 = vmatpush1.xpose.msra.mxu0 0.0
    %748 = vmatprep.subr.mxu0 0.0
    %749 = vmatpush1.xpose.msra.mxu0 0.0
    %750 = vmatprep.subr.mxu0 0.0
    %751 = vmatpush1.xpose.msra.mxu0 0.0
    %752 = vmatprep.subr.mxu0 0.0
    %753 = vmatpush1.xpose.msra.mxu0 0.0
    %754 = vmatprep.subr.mxu0 0.0
    %755 = vmatpush1.xpose.msra.mxu0 0.0
    %756 = vmatprep.subr.mxu0 0.0
    %757 = vmatpush1.xpose.msra.mxu0 0.0
    %758 = vmatprep.subr.mxu0 0.0
    %759 = vmatpush1.xpose.msra.mxu0 0.0
    %760 = vmatprep.subr.mxu0 0.0
    %761 = vmatpush1.xpose.msra.mxu0 0.0
    %762 = vmatprep.subr.mxu0 0.0
    %763 = vmatpush1.xpose.msra.mxu0 0.0
    %764 = vmatprep.subr.mxu0 0.0
    %765 = vmatpush1.xpose.msra.mxu0 0.0
    %766 = vmatprep.subr.mxu0 0.0
    %767 = vmatpush1.xpose.msra.mxu0 0.0
    %768 = vmatprep.subr.mxu0 0.0
    %769 = vmatpush1.xpose.msra.mxu0 0.0
    %770 = vmatprep.subr.mxu0 0.0
    %771 = vmatpush1.xpose.msra.mxu0 0.0
    %772 = vmatprep.subr.mxu0 0.0
    %773 = vmatpush1.xpose.msra.mxu0 0.0
    %774 = vmatprep.subr.mxu0 0.0
    %775 = vmatpush1.xpose.msra.mxu0 0.0
    %776 = vmatprep.subr.mxu0 0.0
    %777 = vmatpush1.xpose.msra.mxu0 0.0
    %778 = vmatprep.subr.mxu0 0.0
    %779 = vmatpush1.xpose.msra.mxu0 0.0
    %780 = vmatprep.subr.mxu0 0.0
    %781 = vmatpush1.xpose.msra.mxu0 0.0
    %782 = vmatprep.subr.mxu0 0.0
    %783 = vmatpush1.xpose.msra.mxu0 0.0
    %784 = vmatprep.subr.mxu0 0.0
    %785 = vmatpush1.xpose.msra.mxu0 0.0
    %786 = vmatprep.subr.mxu0 0.0
    %787 = vmatpush1.xpose.msra.mxu0 0.0
    %788 = vmatprep.subr.mxu0 0.0
    %789 = vmatpush1.xpose.msra.mxu0 0.0
    %790 = vmatprep.subr.mxu0 0.0
    %791 = vmatpush1.xpose.msra.mxu0 0.0
    %792 = vmatprep.mubr.f32.mxu0 0.0
    %793 = vmatmul.mubr.f32.gmra.mrb[0].mxu0 %v724
    %v794 = vpop.f32.mrb[0].mxu0
    %v795 = vadd.f32 %v243, %v794
    %v796 = vpop.f32.mrb[0].mxu0
    %797 = vdwg.mxu0
    %798 = vrot.lane.b32.xlu0 %v387, 112
    %v799 = vpop.permute.xlu0 %798
    %800 = vrot.lane.b32.xlu0 %v387, 80
    %v801 = vpop.permute.xlu0 %800
    %v802 = vsel %vm393, %v799, 0
    %v804 = vsel %vm393, %v801, 0
    %806 = vmatprep.subr.mxu0 0.0
    %807 = vmatpush1.xpose.msra.mxu0 %v804
    %808 = vmatprep.subr.mxu0 0.0
    %809 = vmatpush1.xpose.msra.mxu0 0.0
    %810 = vmatprep.subr.mxu0 0.0
    %811 = vmatpush1.xpose.msra.mxu0 0.0
    %812 = vmatprep.subr.mxu0 0.0
    %813 = vmatpush1.xpose.msra.mxu0 0.0
    %814 = vmatprep.subr.mxu0 0.0
    %815 = vmatpush1.xpose.msra.mxu0 0.0
    %816 = vmatprep.subr.mxu0 0.0
    %817 = vmatpush1.xpose.msra.mxu0 0.0
    %818 = vmatprep.subr.mxu0 0.0
    %819 = vmatpush1.xpose.msra.mxu0 0.0
    %820 = vmatprep.subr.mxu0 0.0
    %821 = vmatpush1.xpose.msra.mxu0 0.0
    %822 = vmatprep.subr.mxu0 0.0
    %823 = vmatpush1.xpose.msra.mxu0 0.0
    %824 = vmatprep.subr.mxu0 0.0
    %825 = vmatpush1.xpose.msra.mxu0 0.0
    %826 = vmatprep.subr.mxu0 0.0
    %827 = vmatpush1.xpose.msra.mxu0 0.0
    %828 = vmatprep.subr.mxu0 0.0
    %829 = vmatpush1.xpose.msra.mxu0 0.0
    %830 = vmatprep.subr.mxu0 0.0
    %831 = vmatpush1.xpose.msra.mxu0 0.0
    %832 = vmatprep.subr.mxu0 0.0
    %833 = vmatpush1.xpose.msra.mxu0 0.0
    %834 = vmatprep.subr.mxu0 0.0
    %835 = vmatpush1.xpose.msra.mxu0 0.0
    %836 = vmatprep.subr.mxu0 0.0
    %837 = vmatpush1.xpose.msra.mxu0 0.0
    %838 = vmatprep.subr.mxu0 0.0
    %839 = vmatpush1.xpose.msra.mxu0 0.0
    %840 = vmatprep.subr.mxu0 0.0
    %841 = vmatpush1.xpose.msra.mxu0 0.0
    %842 = vmatprep.subr.mxu0 0.0
    %843 = vmatpush1.xpose.msra.mxu0 0.0
    %844 = vmatprep.subr.mxu0 0.0
    %845 = vmatpush1.xpose.msra.mxu0 0.0
    %846 = vmatprep.subr.mxu0 0.0
    %847 = vmatpush1.xpose.msra.mxu0 0.0
    %848 = vmatprep.subr.mxu0 0.0
    %849 = vmatpush1.xpose.msra.mxu0 0.0
    %850 = vmatprep.subr.mxu0 0.0
    %851 = vmatpush1.xpose.msra.mxu0 0.0
    %852 = vmatprep.subr.mxu0 0.0
    %853 = vmatpush1.xpose.msra.mxu0 0.0
    %854 = vmatprep.subr.mxu0 0.0
    %855 = vmatpush1.xpose.msra.mxu0 0.0
    %856 = vmatprep.subr.mxu0 0.0
    %857 = vmatpush1.xpose.msra.mxu0 0.0
    %858 = vmatprep.subr.mxu0 0.0
    %859 = vmatpush1.xpose.msra.mxu0 0.0
    %860 = vmatprep.subr.mxu0 0.0
    %861 = vmatpush1.xpose.msra.mxu0 0.0
    %862 = vmatprep.subr.mxu0 0.0
    %863 = vmatpush1.xpose.msra.mxu0 0.0
    %864 = vmatprep.subr.mxu0 0.0
    %865 = vmatpush1.xpose.msra.mxu0 0.0
    %866 = vmatprep.subr.mxu0 0.0
    %867 = vmatpush1.xpose.msra.mxu0 0.0
    %868 = vmatprep.subr.mxu0 0.0
    %869 = vmatpush1.xpose.msra.mxu0 0.0
    %870 = vmatprep.mubr.f32.mxu0 0.0
    %871 = vmatmul.mubr.f32.gmra.mrb[0].mxu0 %v802
    %v872 = vpop.f32.mrb[0].mxu0
    %v873 = vadd.f32 %v247, %v872
    %v874 = vpop.f32.mrb[0].mxu0
    %875 = vdwg.mxu0
    %v876 = vsel %vm545, %v795, -inf
    %877 = vmax.xlane.f32.xlu0 %v876
    %v878 = vpop.xlane.xlu0 %877
    %v879 = vsel %vm545, %v873, -inf
    %880 = vmax.xlane.f32.xlu0 %v879
    %v881 = vpop.xlane.xlu0 %880
    %v882 = vsub.f32 %v795, %v878
    %v883 = vsub.f32 %v873, %v881
    %v884 = vmul.f32 %v882, 1.442695
    %v885 = vpow.pop %v884
    %v886 = vmul.f32 %v883, 1.442695
    %v887 = vpow.pop %v886
    %v888 = vsel %vm545, %v885, 0.0
    %889 = vadd.xlane.f32.xlu0 %v888
    %v890 = vpop.xlane.xlu0 %889
    %v891 = vsel %vm545, %v887, 0.0
    %892 = vadd.xlane.f32.xlu0 %v891
    %v893 = vpop.xlane.xlu0 %892
    %v894 = vrcp.pop %v890
    %v895 = vrcp.pop %v893
    %v896 = vmul.f32 %v885, %v894
    %v897 = vmul.f32 %v887, %v895
    %898 = vrot.lane.b32.xlu0 %v382, 48
    %v899 = vpop.permute.xlu0 %898
    %v902 = vsel %vm545, %v896, 0
    %904 = vmatprep.subr.mxu0 0.0
    %905 = vmatpush1.msra.mxu0 %v899
    %906 = vmatprep.subr.mxu0 0.0
    %907 = vmatpush1.msra.mxu0 0.0
    %908 = vmatprep.subr.mxu0 0.0
    %909 = vmatpush1.msra.mxu0 0.0
    %910 = vmatprep.subr.mxu0 0.0
    %911 = vmatpush1.msra.mxu0 0.0
    %912 = vmatprep.subr.mxu0 0.0
    %913 = vmatpush1.msra.mxu0 0.0
    %914 = vmatprep.subr.mxu0 0.0
    %915 = vmatpush1.msra.mxu0 0.0
    %916 = vmatprep.subr.mxu0 0.0
    %917 = vmatpush1.msra.mxu0 0.0
    %918 = vmatprep.subr.mxu0 0.0
    %919 = vmatpush1.msra.mxu0 0.0
    %920 = vmatprep.subr.mxu0 0.0
    %921 = vmatpush1.msra.mxu0 0.0
    %922 = vmatprep.subr.mxu0 0.0
    %923 = vmatpush1.msra.mxu0 0.0
    %924 = vmatprep.subr.mxu0 0.0
    %925 = vmatpush1.msra.mxu0 0.0
    %926 = vmatprep.subr.mxu0 0.0
    %927 = vmatpush1.msra.mxu0 0.0
    %928 = vmatprep.subr.mxu0 0.0
    %929 = vmatpush1.msra.mxu0 0.0
    %930 = vmatprep.subr.mxu0 0.0
    %931 = vmatpush1.msra.mxu0 0.0
    %932 = vmatprep.subr.mxu0 0.0
    %933 = vmatpush1.msra.mxu0 0.0
    %934 = vmatprep.subr.mxu0 0.0
    %935 = vmatpush1.msra.mxu0 0.0
    %936 = vmatprep.subr.mxu0 0.0
    %937 = vmatpush1.msra.mxu0 0.0
    %938 = vmatprep.subr.mxu0 0.0
    %939 = vmatpush1.msra.mxu0 0.0
    %940 = vmatprep.subr.mxu0 0.0
    %941 = vmatpush1.msra.mxu0 0.0
    %942 = vmatprep.subr.mxu0 0.0
    %943 = vmatpush1.msra.mxu0 0.0
    %944 = vmatprep.subr.mxu0 0.0
    %945 = vmatpush1.msra.mxu0 0.0
    %946 = vmatprep.subr.mxu0 0.0
    %947 = vmatpush1.msra.mxu0 0.0
    %948 = vmatprep.subr.mxu0 0.0
    %949 = vmatpush1.msra.mxu0 0.0
    %950 = vmatprep.subr.mxu0 0.0
    %951 = vmatpush1.msra.mxu0 0.0
    %952 = vmatprep.subr.mxu0 0.0
    %953 = vmatpush1.msra.mxu0 0.0
    %954 = vmatprep.subr.mxu0 0.0
    %955 = vmatpush1.msra.mxu0 0.0
    %956 = vmatprep.subr.mxu0 0.0
    %957 = vmatpush1.msra.mxu0 0.0
    %958 = vmatprep.subr.mxu0 0.0
    %959 = vmatpush1.msra.mxu0 0.0
    %960 = vmatprep.subr.mxu0 0.0
    %961 = vmatpush1.msra.mxu0 0.0
    %962 = vmatprep.subr.mxu0 0.0
    %963 = vmatpush1.msra.mxu0 0.0
    %964 = vmatprep.subr.mxu0 0.0
    %965 = vmatpush1.msra.mxu0 0.0
    %966 = vmatprep.subr.mxu0 0.0
    %967 = vmatpush1.msra.mxu0 0.0
    %968 = vmatprep.mubr.f32.mxu0 0.0
    %969 = vmatmul.mubr.f32.gmra.mrb[0].mxu0 %v902
    %v970 = vpop.f32.mrb[0].mxu0
    %v971 = vadd.f32 0.0, %v970
    %v972 = vpop.f32.mrb[0].mxu0
    %973 = vdwg.mxu0
    %974 = vrot.lane.b32.xlu0 %v387, 48
    %v975 = vpop.permute.xlu0 %974
    %v978 = vsel %vm545, %v897, 0
    %980 = vmatprep.subr.mxu0 0.0
    %981 = vmatpush1.msra.mxu0 %v975
    %982 = vmatprep.subr.mxu0 0.0
    %983 = vmatpush1.msra.mxu0 0.0
    %984 = vmatprep.subr.mxu0 0.0
    %985 = vmatpush1.msra.mxu0 0.0
    %986 = vmatprep.subr.mxu0 0.0
    %987 = vmatpush1.msra.mxu0 0.0
    %988 = vmatprep.subr.mxu0 0.0
    %989 = vmatpush1.msra.mxu0 0.0
    %990 = vmatprep.subr.mxu0 0.0
    %991 = vmatpush1.msra.mxu0 0.0
    %992 = vmatprep.subr.mxu0 0.0
    %993 = vmatpush1.msra.mxu0 0.0
    %994 = vmatprep.subr.mxu0 0.0
    %995 = vmatpush1.msra.mxu0 0.0
    %996 = vmatprep.subr.mxu0 0.0
    %997 = vmatpush1.msra.mxu0 0.0
    %998 = vmatprep.subr.mxu0 0.0
    %999 = vmatpush1.msra.mxu0 0.0
    %1000 = vmatprep.subr.mxu0 0.0
    %1001 = vmatpush1.msra.mxu0 0.0
    %1002 = vmatprep.subr.mxu0 0.0
    %1003 = vmatpush1.msra.mxu0 0.0
    %1004 = vmatprep.subr.mxu0 0.0
    %1005 = vmatpush1.msra.mxu0 0.0
    %1006 = vmatprep.subr.mxu0 0.0
    %1007 = vmatpush1.msra.mxu0 0.0
    %1008 = vmatprep.subr.mxu0 0.0
    %1009 = vmatpush1.msra.mxu0 0.0
    %1010 = vmatprep.subr.mxu0 0.0
    %1011 = vmatpush1.msra.mxu0 0.0
    %1012 = vmatprep.subr.mxu0 0.0
    %1013 = vmatpush1.msra.mxu0 0.0
    %1014 = vmatprep.subr.mxu0 0.0
    %1015 = vmatpush1.msra.mxu0 0.0
    %1016 = vmatprep.subr.mxu0 0.0
    %1017 = vmatpush1.msra.mxu0 0.0
    %1018 = vmatprep.subr.mxu0 0.0
    %1019 = vmatpush1.msra.mxu0 0.0
    %1020 = vmatprep.subr.mxu0 0.0
    %1021 = vmatpush1.msra.mxu0 0.0
    %1022 = vmatprep.subr.mxu0 0.0
    %1023 = vmatpush1.msra.mxu0 0.0
    %1024 = vmatprep.subr.mxu0 0.0
    %1025 = vmatpush1.msra.mxu0 0.0
    %1026 = vmatprep.subr.mxu0 0.0
    %1027 = vmatpush1.msra.mxu0 0.0
    %1028 = vmatprep.subr.mxu0 0.0
    %1029 = vmatpush1.msra.mxu0 0.0
    %1030 = vmatprep.subr.mxu0 0.0
    %1031 = vmatpush1.msra.mxu0 0.0
    %1032 = vmatprep.subr.mxu0 0.0
    %1033 = vmatpush1.msra.mxu0 0.0
    %1034 = vmatprep.subr.mxu0 0.0
    %1035 = vmatpush1.msra.mxu0 0.0
    %1036 = vmatprep.subr.mxu0 0.0
    %1037 = vmatpush1.msra.mxu0 0.0
    %1038 = vmatprep.subr.mxu0 0.0
    %1039 = vmatpush1.msra.mxu0 0.0
    %1040 = vmatprep.subr.mxu0 0.0
    %1041 = vmatpush1.msra.mxu0 0.0
    %1042 = vmatprep.subr.mxu0 0.0
    %1043 = vmatpush1.msra.mxu0 0.0
    %1044 = vmatprep.mubr.f32.mxu0 0.0
    %1045 = vmatmul.mubr.f32.gmra.mrb[0].mxu0 %v978
    %v1046 = vpop.f32.mrb[0].mxu0
    %v1047 = vadd.f32 0.0, %v1046
    %v1048 = vpop.f32.mrb[0].mxu0
    %1049 = vdwg.mxu0
    %1052 = vrot.lane.b32.xlu0 %v971, 16
    %v1053 = vpop.permute.xlu0 %1052
    %1054 = vrot.lane.b32.xlu0 %v1047, 16
    %v1055 = vpop.permute.xlu0 %1054
    %v1058 = vsel %vm393, %v641, %v1053
    %v1059 = vsel %vm393, %v717, %v1055
    %v1060 = vld [vmem:[%s6] sm:$0xff]
    %v1061 = vld [vmem:[%s6 + $0x8] sm:$0xff]
    %v1062 = vld [vmem:[%s6 + $0x10] sm:$0xff]
    %v1063 = vld [vmem:[%s6 + $0x18] sm:$0xff]
    %v1064 = vld [vmem:[#allocation11] sm:$0x1]
    %v1066 = vlaneseq
    %v1067 = vshrl.u32 %v1066, 7
    %v1068 = vsub.s32 0, %v1067
    %v1069 = vrot.slane %v1064, %v1068
    %v1072 = vsel %vm254, %v1058, 0
    %v1075 = vsel %vm254, %v1059, 0
    %1077 = vmatprep.subr.mxu0 0.0
    %1078 = vmatpush1.msra.mxu0 %v1060
    %1079 = vmatprep.subr.mxu0 0.0
    %1080 = vmatpush1.msra.mxu0 %v1061
    %1081 = vmatprep.subr.mxu0 0.0
    %1082 = vmatpush1.msra.mxu0 %v1062
    %1083 = vmatprep.subr.mxu0 0.0
    %1084 = vmatpush1.msra.mxu0 %v1063
    %1085 = vmatprep.subr.mxu0 0.0
    %1086 = vmatpush1.msra.mxu0 0.0
    %1087 = vmatprep.subr.mxu0 0.0
    %1088 = vmatpush1.msra.mxu0 0.0
    %1089 = vmatprep.subr.mxu0 0.0
    %1090 = vmatpush1.msra.mxu0 0.0
    %1091 = vmatprep.subr.mxu0 0.0
    %1092 = vmatpush1.msra.mxu0 0.0
    %1093 = vmatprep.subr.mxu0 0.0
    %1094 = vmatpush1.msra.mxu0 0.0
    %1095 = vmatprep.subr.mxu0 0.0
    %1096 = vmatpush1.msra.mxu0 0.0
    %1097 = vmatprep.subr.mxu0 0.0
    %1098 = vmatpush1.msra.mxu0 0.0
    %1099 = vmatprep.subr.mxu0 0.0
    %1100 = vmatpush1.msra.mxu0 0.0
    %1101 = vmatprep.subr.mxu0 0.0
    %1102 = vmatpush1.msra.mxu0 0.0
    %1103 = vmatprep.subr.mxu0 0.0
    %1104 = vmatpush1.msra.mxu0 0.0
    %1105 = vmatprep.subr.mxu0 0.0
    %1106 = vmatpush1.msra.mxu0 0.0
    %1107 = vmatprep.subr.mxu0 0.0
    %1108 = vmatpush1.msra.mxu0 0.0
    %1109 = vmatprep.subr.mxu0 0.0
    %1110 = vmatpush1.msra.mxu0 0.0
    %1111 = vmatprep.subr.mxu0 0.0
    %1112 = vmatpush1.msra.mxu0 0.0
    %1113 = vmatprep.subr.mxu0 0.0
    %1114 = vmatpush1.msra.mxu0 0.0
    %1115 = vmatprep.subr.mxu0 0.0
    %1116 = vmatpush1.msra.mxu0 0.0
    %1117 = vmatprep.subr.mxu0 0.0
    %1118 = vmatpush1.msra.mxu0 0.0
    %1119 = vmatprep.subr.mxu0 0.0
    %1120 = vmatpush1.msra.mxu0 0.0
    %1121 = vmatprep.subr.mxu0 0.0
    %1122 = vmatpush1.msra.mxu0 0.0
    %1123 = vmatprep.subr.mxu0 0.0
    %1124 = vmatpush1.msra.mxu0 0.0
    %1125 = vmatprep.subr.mxu0 0.0
    %1126 = vmatpush1.msra.mxu0 0.0
    %1127 = vmatprep.subr.mxu0 0.0
    %1128 = vmatpush1.msra.mxu0 0.0
    %1129 = vmatprep.subr.mxu0 0.0
    %1130 = vmatpush1.msra.mxu0 0.0
    %1131 = vmatprep.subr.mxu0 0.0
    %1132 = vmatpush1.msra.mxu0 0.0
    %1133 = vmatprep.subr.mxu0 0.0
    %1134 = vmatpush1.msra.mxu0 0.0
    %1135 = vmatprep.subr.mxu0 0.0
    %1136 = vmatpush1.msra.mxu0 0.0
    %1137 = vmatprep.subr.mxu0 0.0
    %1138 = vmatpush1.msra.mxu0 0.0
    %1139 = vmatprep.subr.mxu0 0.0
    %1140 = vmatpush1.msra.mxu0 0.0
    %1141 = vmatprep.mubr.f32.mxu0 0.0
    %1142 = vmatmul.mubr.f32.gmra.mrb[0].mxu0 %v1072
    %v1143 = vpop.f32.mrb[0].mxu0
    %v1144 = vadd.f32 %v1069, %v1143
    %v1145 = vpop.f32.mrb[0].mxu0
    %1146 = vmatprep.mubr.f32.mxu0 0.0
    %1147 = vmatmul.mubr.f32.gmra.mrb[0].mxu0 %v1075
    %v1148 = vpop.f32.mrb[0].mxu0
    %v1149 = vadd.f32 %v1069, %v1148
    %v1150 = vpop.f32.mrb[0].mxu0
    %1151 = vdwg.mxu0
    %v1152 = vadd.f32 %v1144, %v296
    %v1153 = vadd.f32 %v1149, %v297
    %v1154 = vld [vmem:[#allocation13] sm:$0x1]
    %v1155 = vld [vmem:[#allocation14] sm:$0x1]
    %v1156 = vsel %vm254, %v1152, 0.0
    %1157 = vadd.xlane.f32.xlu0 %v1156
    %v1158 = vpop.xlane.xlu0 %1157
    %v1159 = vsel %vm254, %v1153, 0.0
    %1160 = vadd.xlane.f32.xlu0 %v1159
    %v1161 = vpop.xlane.xlu0 %1160
    %v1162 = vmul.f32 %v1158, %v261
    %v1163 = vmul.f32 %v1161, %v261
    %v1164 = vsub.f32 %v1152, %v1162
    %v1165 = vsub.f32 %v1153, %v1163
    %v1166 = vmul.f32 %v1164, %v1164
    %v1167 = vmul.f32 %v1165, %v1165
    %v1168 = vsel %vm254, %v1166, 0.0
    %1169 = vadd.xlane.f32.xlu0 %v1168
    %v1170 = vpop.xlane.xlu0 %1169
    %v1171 = vsel %vm254, %v1167, 0.0
    %1172 = vadd.xlane.f32.xlu0 %v1171
    %v1173 = vpop.xlane.xlu0 %1172
    %v1174 = vmul.f32 %v1170, %v261
    %v1175 = vmul.f32 %v1173, %v261
    %v1176 = vadd.f32 %v1174, 1e-12
    %v1177 = vadd.f32 %v1175, 1e-12
    %v1178 = vrsqrt.pop %v1176
    %v1179 = vrsqrt.pop %v1177
    %v1180 = vmul.f32 %v1164, %v1178
    %v1181 = vmul.f32 %v1165, %v1179
    %v1183 = vlaneseq
    %v1184 = vshrl.u32 %v1183, 7
    %v1185 = vsub.s32 0, %v1184
    %v1186 = vrot.slane %v1154, %v1185
    %v1188 = vmul.f32 %v1180, %v1186
    %v1189 = vmul.f32 %v1181, %v1186
    %v1191 = vlaneseq
    %v1192 = vshrl.u32 %v1191, 7
    %v1193 = vsub.s32 0, %v1192
    %v1194 = vrot.slane %v1155, %v1193
    %v1196 = vadd.f32 %v1188, %v1194
    %v1197 = vadd.f32 %v1189, %v1194
    %v1198 = vld [vmem:[%s10] sm:$0xff]
    %v1199 = vld [vmem:[%s10 + $0x8] sm:$0xff]
    %v1200 = vld [vmem:[%s10 + $0x10] sm:$0xff]
    %v1201 = vld [vmem:[%s10 + $0x18] sm:$0xff]
    %v1202 = vld [vmem:[#allocation16] sm:$0x1]
    %v1204 = vlaneseq
    %v1205 = vshrl.u32 %v1204, 7
    %v1206 = vsub.s32 0, %v1205
    %v1207 = vrot.slane %v1202, %v1206
    %v1210 = vsel %vm254, %v1196, 0
    %v1213 = vsel %vm254, %v1197, 0
    %1215 = vmatprep.subr.mxu0 0.0
    %1216 = vmatpush1.msra.mxu0 %v1198
    %1217 = vmatprep.subr.mxu0 0.0
    %1218 = vmatpush1.msra.mxu0 %v1199
    %1219 = vmatprep.subr.mxu0 0.0
    %1220 = vmatpush1.msra.mxu0 %v1200
    %1221 = vmatprep.subr.mxu0 0.0
    %1222 = vmatpush1.msra.mxu0 %v1201
    %1223 = vmatprep.subr.mxu0 0.0
    %1224 = vmatpush1.msra.mxu0 0.0
    %1225 = vmatprep.subr.mxu0 0.0
    %1226 = vmatpush1.msra.mxu0 0.0
    %1227 = vmatprep.subr.mxu0 0.0
    %1228 = vmatpush1.msra.mxu0 0.0
    %1229 = vmatprep.subr.mxu0 0.0
    %1230 = vmatpush1.msra.mxu0 0.0
    %1231 = vmatprep.subr.mxu0 0.0
    %1232 = vmatpush1.msra.mxu0 0.0
    %1233 = vmatprep.subr.mxu0 0.0
    %1234 = vmatpush1.msra.mxu0 0.0
    %1235 = vmatprep.subr.mxu0 0.0
    %1236 = vmatpush1.msra.mxu0 0.0
    %1237 = vmatprep.subr.mxu0 0.0
    %1238 = vmatpush1.msra.mxu0 0.0
    %1239 = vmatprep.subr.mxu0 0.0
    %1240 = vmatpush1.msra.mxu0 0.0
    %1241 = vmatprep.subr.mxu0 0.0
    %1242 = vmatpush1.msra.mxu0 0.0
    %1243 = vmatprep.subr.mxu0 0.0
    %1244 = vmatpush1.msra.mxu0 0.0
    %1245 = vmatprep.subr.mxu0 0.0
    %1246 = vmatpush1.msra.mxu0 0.0
    %1247 = vmatprep.subr.mxu0 0.0
    %1248 = vmatpush1.msra.mxu0 0.0
    %1249 = vmatprep.subr.mxu0 0.0
    %1250 = vmatpush1.msra.mxu0 0.0
    %1251 = vmatprep.subr.mxu0 0.0
    %1252 = vmatpush1.msra.mxu0 0.0
    %1253 = vmatprep.subr.mxu0 0.0
    %1254 = vmatpush1.msra.mxu0 0.0
    %1255 = vmatprep.subr.mxu0 0.0
    %1256 = vmatpush1.msra.mxu0 0.0
    %1257 = vmatprep.subr.mxu0 0.0
    %1258 = vmatpush1.msra.mxu0 0.0
    %1259 = vmatprep.subr.mxu0 0.0
    %1260 = vmatpush1.msra.mxu0 0.0
    %1261 = vmatprep.subr.mxu0 0.0
    %1262 = vmatpush1.msra.mxu0 0.0
    %1263 = vmatprep.subr.mxu0 0.0
    %1264 = vmatpush1.msra.mxu0 0.0
    %1265 = vmatprep.subr.mxu0 0.0
    %1266 = vmatpush1.msra.mxu0 0.0
    %1267 = vmatprep.subr.mxu0 0.0
    %1268 = vmatpush1.msra.mxu0 0.0
    %1269 = vmatprep.subr.mxu0 0.0
    %1270 = vmatpush1.msra.mxu0 0.0
    %1271 = vmatprep.subr.mxu0 0.0
    %1272 = vmatpush1.msra.mxu0 0.0
    %1273 = vmatprep.subr.mxu0 0.0
    %1274 = vmatpush1.msra.mxu0 0.0
    %1275 = vmatprep.subr.mxu0 0.0
    %1276 = vmatpush1.msra.mxu0 0.0
    %1277 = vmatprep.subr.mxu0 0.0
    %1278 = vmatpush1.msra.mxu0 0.0
    %1279 = vmatprep.mubr.f32.mxu0 0.0
    %1280 = vmatmul.mubr.f32.gmra.mrb[0].mxu0 %v1210
    %v1281 = vpop.f32.mrb[0].mxu0
    %v1282 = vadd.f32 %v1207, %v1281
    %v1283 = vpop.f32.mrb[0].mxu0
    %1284 = vmatprep.mubr.f32.mxu0 0.0
    %1285 = vmatmul.mubr.f32.gmra.mrb[0].mxu0 %v1213
    %v1286 = vpop.f32.mrb[0].mxu0
    %v1287 = vadd.f32 %v1207, %v1286
    %v1288 = vpop.f32.mrb[0].mxu0
    %1289 = vdwg.mxu0
    %v1290 = vmul.f32 %v1282, 0.5
    %v1291 = vmul.f32 %v1287, 0.5
    %v1292 = vmul.f32 %v1282, 0.70710677
    %v1293 = vmul.f32 %v1287, 0.70710677
    %v1294 = verf.f32.pop %v1292
    %v1295 = verf.f32.pop %v1293
    %v1296 = vadd.f32 %v1294, 1.0
    %v1297 = vadd.f32 %v1295, 1.0
    %v1298 = vmul.f32 %v1290, %v1296
    %v1299 = vmul.f32 %v1291, %v1297
    %v1300 = vld [vmem:[%s12] sm:$0xff]
    %v1301 = vld [vmem:[%s12 + $0x8] sm:$0xff]
    %v1302 = vld [vmem:[%s12 + $0x10] sm:$0xff]
    %v1303 = vld [vmem:[%s12 + $0x18] sm:$0xff]
    %v1304 = vld [vmem:[%s12 + $0x20] sm:$0xff]
    %v1305 = vld [vmem:[%s12 + $0x28] sm:$0xff]
    %v1306 = vld [vmem:[%s12 + $0x30] sm:$0xff]
    %v1307 = vld [vmem:[%s12 + $0x38] sm:$0xff]
    %v1308 = vld [vmem:[#allocation17] sm:$0x1]
    %v1310 = vlaneseq
    %v1311 = vshrl.u32 %v1310, 7
    %v1312 = vsub.s32 0, %v1311
    %v1313 = vrot.slane %v1308, %v1312
    %vm1315 = vcmask 523264
    %v1317 = vsel %vm1315, %v1298, 0
    %v1320 = vsel %vm1315, %v1299, 0
    %1322 = vmatprep.subr.mxu0 0.0
    %1323 = vmatpush1.msra.mxu0 %v1300
    %1324 = vmatprep.subr.mxu0 0.0
    %1325 = vmatpush1.msra.mxu0 %v1301
    %1326 = vmatprep.subr.mxu0 0.0
    %1327 = vmatpush1.msra.mxu0 %v1302
    %1328 = vmatprep.subr.mxu0 0.0
    %1329 = vmatpush1.msra.mxu0 %v1303
    %1330 = vmatprep.subr.mxu0 0.0
    %1331 = vmatpush1.msra.mxu0 %v1304
    %1332 = vmatprep.subr.mxu0 0.0
    %1333 = vmatpush1.msra.mxu0 %v1305
    %1334 = vmatprep.subr.mxu0 0.0
    %1335 = vmatpush1.msra.mxu0 %v1306
    %1336 = vmatprep.subr.mxu0 0.0
    %1337 = vmatpush1.msra.mxu0 %v1307
    %1338 = vmatprep.subr.mxu0 0.0
    %1339 = vmatpush1.msra.mxu0 0.0
    %1340 = vmatprep.subr.mxu0 0.0
    %1341 = vmatpush1.msra.mxu0 0.0
    %1342 = vmatprep.subr.mxu0 0.0
    %1343 = vmatpush1.msra.mxu0 0.0
    %1344 = vmatprep.subr.mxu0 0.0
    %1345 = vmatpush1.msra.mxu0 0.0
    %1346 = vmatprep.subr.mxu0 0.0
    %1347 = vmatpush1.msra.mxu0 0.0
    %1348 = vmatprep.subr.mxu0 0.0
    %1349 = vmatpush1.msra.mxu0 0.0
    %1350 = vmatprep.subr.mxu0 0.0
    %1351 = vmatpush1.msra.mxu0 0.0
    %1352 = vmatprep.subr.mxu0 0.0
    %1353 = vmatpush1.msra.mxu0 0.0
    %1354 = vmatprep.subr.mxu0 0.0
    %1355 = vmatpush1.msra.mxu0 0.0
    %1356 = vmatprep.subr.mxu0 0.0
    %1357 = vmatpush1.msra.mxu0 0.0
    %1358 = vmatprep.subr.mxu0 0.0
    %1359 = vmatpush1.msra.mxu0 0.0
    %1360 = vmatprep.subr.mxu0 0.0
    %1361 = vmatpush1.msra.mxu0 0.0
    %1362 = vmatprep.subr.mxu0 0.0
    %1363 = vmatpush1.msra.mxu0 0.0
    %1364 = vmatprep.subr.mxu0 0.0
    %1365 = vmatpush1.msra.mxu0 0.0
    %1366 = vmatprep.subr.mxu0 0.0
    %1367 = vmatpush1.msra.mxu0 0.0
    %1368 = vmatprep.subr.mxu0 0.0
    %1369 = vmatpush1.msra.mxu0 0.0
    %1370 = vmatprep.subr.mxu0 0.0
    %1371 = vmatpush1.msra.mxu0 0.0
    %1372 = vmatprep.subr.mxu0 0.0
    %1373 = vmatpush1.msra.mxu0 0.0
    %1374 = vmatprep.subr.mxu0 0.0
    %1375 = vmatpush1.msra.mxu0 0.0
    %1376 = vmatprep.subr.mxu0 0.0
    %1377 = vmatpush1.msra.mxu0 0.0
    %1378 = vmatprep.subr.mxu0 0.0
    %1379 = vmatpush1.msra.mxu0 0.0
    %1380 = vmatprep.subr.mxu0 0.0
    %1381 = vmatpush1.msra.mxu0 0.0
    %1382 = vmatprep.subr.mxu0 0.0
    %1383 = vmatpush1.msra.mxu0 0.0
    %1384 = vmatprep.subr.mxu0 0.0
    %1385 = vmatpush1.msra.mxu0 0.0
    %1386 = vmatprep.mubr.f32.mxu0 0.0
    %1387 = vmatmul.mubr.f32.gmra.mrb[0].mxu0 %v1317
    %v1388 = vpop.f32.mrb[0].mxu0
    %v1389 = vadd.f32 %v1313, %v1388
    %v1390 = vpop.f32.mrb[0].mxu0
    %1391 = vmatprep.mubr.f32.mxu0 0.0
    %1392 = vmatmul.mubr.f32.gmra.mrb[0].mxu0 %v1320
    %v1393 = vpop.f32.mrb[0].mxu0
    %v1394 = vadd.f32 %v1313, %v1393
    %v1395 = vpop.f32.mrb[0].mxu0
    %1396 = vdwg.mxu0
    %v1397 = vadd.f32 %v1389, %v1196
    %v1398 = vadd.f32 %v1394, %v1197
    %v1399 = vld [vmem:[#allocation19] sm:$0x1]
    %v1400 = vld [vmem:[#allocation20] sm:$0x1]
    %v1401 = vsel %vm254, %v1397, 0.0
    %1402 = vadd.xlane.f32.xlu0 %v1401
    %v1403 = vpop.xlane.xlu0 %1402
    %v1404 = vsel %vm254, %v1398, 0.0
    %1405 = vadd.xlane.f32.xlu0 %v1404
    %v1406 = vpop.xlane.xlu0 %1405
    %v1407 = vmul.f32 %v1403, %v261
    %v1408 = vmul.f32 %v1406, %v261
    %v1409 = vsub.f32 %v1397, %v1407
    %v1410 = vsub.f32 %v1398, %v1408
    %v1411 = vmul.f32 %v1409, %v1409
    %v1412 = vmul.f32 %v1410, %v1410
    %v1413 = vsel %vm254, %v1411, 0.0
    %1414 = vadd.xlane.f32.xlu0 %v1413
    %v1415 = vpop.xlane.xlu0 %1414
    %v1416 = vsel %vm254, %v1412, 0.0
    %1417 = vadd.xlane.f32.xlu0 %v1416
    %v1418 = vpop.xlane.xlu0 %1417
    %v1419 = vmul.f32 %v1415, %v261
    %v1420 = vmul.f32 %v1418, %v261
    %v1421 = vadd.f32 %v1419, 1e-12
    %v1422 = vadd.f32 %v1420, 1e-12
    %v1423 = vrsqrt.pop %v1421
    %v1424 = vrsqrt.pop %v1422
    %v1425 = vmul.f32 %v1409, %v1423
    %v1426 = vmul.f32 %v1410, %v1424
    %v1428 = vlaneseq
    %v1429 = vshrl.u32 %v1428, 7
    %v1430 = vsub.s32 0, %v1429
    %v1431 = vrot.slane %v1399, %v1430
    %v1433 = vmul.f32 %v1425, %v1431
    %v1434 = vmul.f32 %v1426, %v1431
    %v1436 = vlaneseq
    %v1437 = vshrl.u32 %v1436, 7
    %v1438 = vsub.s32 0, %v1437
    %v1439 = vrot.slane %v1400, %v1438
    %v1441 = vadd.f32 %v1433, %v1439
    %v1442 = vadd.f32 %v1434, %v1439
    %s1443 = scalar_lea.vmem %s4, 32
    %v1444 = vld [vmem:[%s1443] sm:$0xff]
    %v1445 = vld [vmem:[%s1443 + $0x8] sm:$0xff]
    %v1446 = vld [vmem:[%s1443 + $0x10] sm:$0xff]
    %v1447 = vld [vmem:[%s1443 + $0x18] sm:$0xff]
    %s1448 = scalar_lea.vmem [#allocation10], 1
    %v1449 = vld [vmem:[%s1448] sm:$0x1]
    %v1451 = vlaneseq
    %v1452 = vshrl.u32 %v1451, 7
    %v1453 = vsub.s32 0, %v1452
    %v1454 = vrot.slane %v1449, %v1453
    %v1457 = vsel %vm254, %v1441, 0
    %v1460 = vsel %vm254, %v1442, 0
    %1462 = vmatprep.subr.mxu0 0.0
    %1463 = vmatpush1.msra.mxu0 %v1444
    %1464 = vmatprep.subr.mxu0 0.0
    %1465 = vmatpush1.msra.mxu0 %v1445
    %1466 = vmatprep.subr.mxu0 0.0
    %1467 = vmatpush1.msra.mxu0 %v1446
    %1468 = vmatprep.subr.mxu0 0.0
    %1469 = vmatpush1.msra.mxu0 %v1447
    %1470 = vmatprep.subr.mxu0 0.0
    %1471 = vmatpush1.msra.mxu0 0.0
    %1472 = vmatprep.subr.mxu0 0.0
    %1473 = vmatpush1.msra.mxu0 0.0
    %1474 = vmatprep.subr.mxu0 0.0
    %1475 = vmatpush1.msra.mxu0 0.0
    %1476 = vmatprep.subr.mxu0 0.0
    %1477 = vmatpush1.msra.mxu0 0.0
    %1478 = vmatprep.subr.mxu0 0.0
    %1479 = vmatpush1.msra.mxu0 0.0
    %1480 = vmatprep.subr.mxu0 0.0
    %1481 = vmatpush1.msra.mxu0 0.0
    %1482 = vmatprep.subr.mxu0 0.0
    %1483 = vmatpush1.msra.mxu0 0.0
    %1484 = vmatprep.subr.mxu0 0.0
    %1485 = vmatpush1.msra.mxu0 0.0
    %1486 = vmatprep.subr.mxu0 0.0
    %1487 = vmatpush1.msra.mxu0 0.0
    %1488 = vmatprep.subr.mxu0 0.0
    %1489 = vmatpush1.msra.mxu0 0.0
    %1490 = vmatprep.subr.mxu0 0.0
    %1491 = vmatpush1.msra.mxu0 0.0
    %1492 = vmatprep.subr.mxu0 0.0
    %1493 = vmatpush1.msra.mxu0 0.0
    %1494 = vmatprep.subr.mxu0 0.0
    %1495 = vmatpush1.msra.mxu0 0.0
    %1496 = vmatprep.subr.mxu0 0.0
    %1497 = vmatpush1.msra.mxu0 0.0
    %1498 = vmatprep.subr.mxu0 0.0
    %1499 = vmatpush1.msra.mxu0 0.0
    %1500 = vmatprep.subr.mxu0 0.0
    %1501 = vmatpush1.msra.mxu0 0.0
    %1502 = vmatprep.subr.mxu0 0.0
    %1503 = vmatpush1.msra.mxu0 0.0
    %1504 = vmatprep.subr.mxu0 0.0
    %1505 = vmatpush1.msra.mxu0 0.0
    %1506 = vmatprep.subr.mxu0 0.0
    %1507 = vmatpush1.msra.mxu0 0.0
    %1508 = vmatprep.subr.mxu0 0.0
    %1509 = vmatpush1.msra.mxu0 0.0
    %1510 = vmatprep.subr.mxu0 0.0
    %1511 = vmatpush1.msra.mxu0 0.0
    %1512 = vmatprep.subr.mxu0 0.0
    %1513 = vmatpush1.msra.mxu0 0.0
    %1514 = vmatprep.subr.mxu0 0.0
    %1515 = vmatpush1.msra.mxu0 0.0
    %1516 = vmatprep.subr.mxu0 0.0
    %1517 = vmatpush1.msra.mxu0 0.0
    %1518 = vmatprep.subr.mxu0 0.0
    %1519 = vmatpush1.msra.mxu0 0.0
    %1520 = vmatprep.subr.mxu0 0.0
    %1521 = vmatpush1.msra.mxu0 0.0
    %1522 = vmatprep.subr.mxu0 0.0
    %1523 = vmatpush1.msra.mxu0 0.0
    %1524 = vmatprep.subr.mxu0 0.0
    %1525 = vmatpush1.msra.mxu0 0.0
    %1526 = vmatprep.mubr.f32.mxu0 0.0
    %1527 = vmatmul.mubr.f32.gmra.mrb[0].mxu0 %v1457
    %v1528 = vpop.f32.mrb[0].mxu0
    %v1529 = vadd.f32 %v1454, %v1528
    %v1530 = vpop.f32.mrb[0].mxu0
    %1531 = vmatprep.mubr.f32.mxu0 0.0
    %1532 = vmatmul.mubr.f32.gmra.mrb[0].mxu0 %v1460
    %v1533 = vpop.f32.mrb[0].mxu0
    %v1534 = vadd.f32 %v1454, %v1533
    %v1535 = vpop.f32.mrb[0].mxu0
    %1536 = vdwg.mxu0
    %1538 = vrot.lane.b32.xlu0 %v1529, 96
    %v1539 = vpop.permute.xlu0 %1538
    %v1540 = vsel %vm393, %v1529, 0
    %v1542 = vsel %vm393, %v1539, 0
    %1544 = vmatprep.subr.mxu0 0.0
    %1545 = vmatpush1.xpose.msra.mxu0 %v1542
    %1546 = vmatprep.subr.mxu0 0.0
    %1547 = vmatpush1.xpose.msra.mxu0 0.0
    %1548 = vmatprep.subr.mxu0 0.0
    %1549 = vmatpush1.xpose.msra.mxu0 0.0
    %1550 = vmatprep.subr.mxu0 0.0
    %1551 = vmatpush1.xpose.msra.mxu0 0.0
    %1552 = vmatprep.subr.mxu0 0.0
    %1553 = vmatpush1.xpose.msra.mxu0 0.0
    %1554 = vmatprep.subr.mxu0 0.0
    %1555 = vmatpush1.xpose.msra.mxu0 0.0
    %1556 = vmatprep.subr.mxu0 0.0
    %1557 = vmatpush1.xpose.msra.mxu0 0.0
    %1558 = vmatprep.subr.mxu0 0.0
    %1559 = vmatpush1.xpose.msra.mxu0 0.0
    %1560 = vmatprep.subr.mxu0 0.0
    %1561 = vmatpush1.xpose.msra.mxu0 0.0
    %1562 = vmatprep.subr.mxu0 0.0
    %1563 = vmatpush1.xpose.msra.mxu0 0.0
    %1564 = vmatprep.subr.mxu0 0.0
    %1565 = vmatpush1.xpose.msra.mxu0 0.0
    %1566 = vmatprep.subr.mxu0 0.0
    %1567 = vmatpush1.xpose.msra.mxu0 0.0
    %1568 = vmatprep.subr.mxu0 0.0
    %1569 = vmatpush1.xpose.msra.mxu0 0.0
    %1570 = vmatprep.subr.mxu0 0.0
    %1571 = vmatpush1.xpose.msra.mxu0 0.0
    %1572 = vmatprep.subr.mxu0 0.0
    %1573 = vmatpush1.xpose.msra.mxu0 0.0
    %1574 = vmatprep.subr.mxu0 0.0
    %1575 = vmatpush1.xpose.msra.mxu0 0.0
    %1576 = vmatprep.subr.mxu0 0.0
    %1577 = vmatpush1.xpose.msra.mxu0 0.0
    %1578 = vmatprep.subr.mxu0 0.0
    %1579 = vmatpush1.xpose.msra.mxu0 0.0
    %1580 = vmatprep.subr.mxu0 0.0
    %1581 = vmatpush1.xpose.msra.mxu0 0.0
    %1582 = vmatprep.subr.mxu0 0.0
    %1583 = vmatpush1.xpose.msra.mxu0 0.0
    %1584 = vmatprep.subr.mxu0 0.0
    %1585 = vmatpush1.xpose.msra.mxu0 0.0
    %1586 = vmatprep.subr.mxu0 0.0
    %1587 = vmatpush1.xpose.msra.mxu0 0.0
    %1588 = vmatprep.subr.mxu0 0.0
    %1589 = vmatpush1.xpose.msra.mxu0 0.0
    %1590 = vmatprep.subr.mxu0 0.0
    %1591 = vmatpush1.xpose.msra.mxu0 0.0
    %1592 = vmatprep.subr.mxu0 0.0
    %1593 = vmatpush1.xpose.msra.mxu0 0.0
    %1594 = vmatprep.subr.mxu0 0.0
    %1595 = vmatpush1.xpose.msra.mxu0 0.0
    %1596 = vmatprep.subr.mxu0 0.0
    %1597 = vmatpush1.xpose.msra.mxu0 0.0
    %1598 = vmatprep.subr.mxu0 0.0
    %1599 = vmatpush1.xpose.msra.mxu0 0.0
    %1600 = vmatprep.subr.mxu0 0.0
    %1601 = vmatpush1.xpose.msra.mxu0 0.0
    %1602 = vmatprep.subr.mxu0 0.0
    %1603 = vmatpush1.xpose.msra.mxu0 0.0
    %1604 = vmatprep.subr.mxu0 0.0
    %1605 = vmatpush1.xpose.msra.mxu0 0.0
    %1606 = vmatprep.subr.mxu0 0.0
    %1607 = vmatpush1.xpose.msra.mxu0 0.0
    %1608 = vmatprep.mubr.f32.mxu0 0.0
    %1609 = vmatmul.mubr.f32.gmra.mrb[0].mxu0 %v1540
    %v1610 = vpop.f32.mrb[0].mxu0
    %v1611 = vadd.f32 %v243, %v1610
    %v1612 = vpop.f32.mrb[0].mxu0
    %1613 = vdwg.mxu0
    %1615 = vrot.lane.b32.xlu0 %v1534, 96
    %v1616 = vpop.permute.xlu0 %1615
    %v1617 = vsel %vm393, %v1534, 0
    %v1619 = vsel %vm393, %v1616, 0
    %1621 = vmatprep.subr.mxu0 0.0
    %1622 = vmatpush1.xpose.msra.mxu0 %v1619
    %1623 = vmatprep.subr.mxu0 0.0
    %1624 = vmatpush1.xpose.msra.mxu0 0.0
    %1625 = vmatprep.subr.mxu0 0.0
    %1626 = vmatpush1.xpose.msra.mxu0 0.0
    %1627 = vmatprep.subr.mxu0 0.0
    %1628 = vmatpush1.xpose.msra.mxu0 0.0
    %1629 = vmatprep.subr.mxu0 0.0
    %1630 = vmatpush1.xpose.msra.mxu0 0.0
    %1631 = vmatprep.subr.mxu0 0.0
    %1632 = vmatpush1.xpose.msra.mxu0 0.0
    %1633 = vmatprep.subr.mxu0 0.0
    %1634 = vmatpush1.xpose.msra.mxu0 0.0
    %1635 = vmatprep.subr.mxu0 0.0
    %1636 = vmatpush1.xpose.msra.mxu0 0.0
    %1637 = vmatprep.subr.mxu0 0.0
    %1638 = vmatpush1.xpose.msra.mxu0 0.0
    %1639 = vmatprep.subr.mxu0 0.0
    %1640 = vmatpush1.xpose.msra.mxu0 0.0
    %1641 = vmatprep.subr.mxu0 0.0
    %1642 = vmatpush1.xpose.msra.mxu0 0.0
    %1643 = vmatprep.subr.mxu0 0.0
    %1644 = vmatpush1.xpose.msra.mxu0 0.0
    %1645 = vmatprep.subr.mxu0 0.0
    %1646 = vmatpush1.xpose.msra.mxu0 0.0
    %1647 = vmatprep.subr.mxu0 0.0
    %1648 = vmatpush1.xpose.msra.mxu0 0.0
    %1649 = vmatprep.subr.mxu0 0.0
    %1650 = vmatpush1.xpose.msra.mxu0 0.0
    %1651 = vmatprep.subr.mxu0 0.0
    %1652 = vmatpush1.xpose.msra.mxu0 0.0
    %1653 = vmatprep.subr.mxu0 0.0
    %1654 = vmatpush1.xpose.msra.mxu0 0.0
    %1655 = vmatprep.subr.mxu0 0.0
    %1656 = vmatpush1.xpose.msra.mxu0 0.0
    %1657 = vmatprep.subr.mxu0 0.0
    %1658 = vmatpush1.xpose.msra.mxu0 0.0
    %1659 = vmatprep.subr.mxu0 0.0
    %1660 = vmatpush1.xpose.msra.mxu0 0.0
    %1661 = vmatprep.subr.mxu0 0.0
    %1662 = vmatpush1.xpose.msra.mxu0 0.0
    %1663 = vmatprep.subr.mxu0 0.0
    %1664 = vmatpush1.xpose.msra.mxu0 0.0
    %1665 = vmatprep.subr.mxu0 0.0
    %1666 = vmatpush1.xpose.msra.mxu0 0.0
    %1667 = vmatprep.subr.mxu0 0.0
    %1668 = vmatpush1.xpose.msra.mxu0 0.0
    %1669 = vmatprep.subr.mxu0 0.0
    %1670 = vmatpush1.xpose.msra.mxu0 0.0
    %1671 = vmatprep.subr.mxu0 0.0
    %1672 = vmatpush1.xpose.msra.mxu0 0.0
    %1673 = vmatprep.subr.mxu0 0.0
    %1674 = vmatpush1.xpose.msra.mxu0 0.0
    %1675 = vmatprep.subr.mxu0 0.0
    %1676 = vmatpush1.xpose.msra.mxu0 0.0
    %1677 = vmatprep.subr.mxu0 0.0
    %1678 = vmatpush1.xpose.msra.mxu0 0.0
    %1679 = vmatprep.subr.mxu0 0.0
    %1680 = vmatpush1.xpose.msra.mxu0 0.0
    %1681 = vmatprep.subr.mxu0 0.0
    %1682 = vmatpush1.xpose.msra.mxu0 0.0
    %1683 = vmatprep.subr.mxu0 0.0
    %1684 = vmatpush1.xpose.msra.mxu0 0.0
    %1685 = vmatprep.mubr.f32.mxu0 0.0
    %1686 = vmatmul.mubr.f32.gmra.mrb[0].mxu0 %v1617
    %v1687 = vpop.f32.mrb[0].mxu0
    %v1688 = vadd.f32 %v247, %v1687
    %v1689 = vpop.f32.mrb[0].mxu0
    %1690 = vdwg.mxu0
    %v1691 = vsel %vm545, %v1611, -inf
    %1692 = vmax.xlane.f32.xlu0 %v1691
    %v1693 = vpop.xlane.xlu0 %1692
    %v1694 = vsel %vm545, %v1688, -inf
    %1695 = vmax.xlane.f32.xlu0 %v1694
    %v1696 = vpop.xlane.xlu0 %1695
    %v1697 = vsub.f32 %v1611, %v1693
    %v1698 = vsub.f32 %v1688, %v1696
    %v1699 = vmul.f32 %v1697, 1.442695
    %v1700 = vpow.pop %v1699
    %v1701 = vmul.f32 %v1698, 1.442695
    %v1702 = vpow.pop %v1701
    %v1703 = vsel %vm545, %v1700, 0.0
    %1704 = vadd.xlane.f32.xlu0 %v1703
    %v1705 = vpop.xlane.xlu0 %1704
    %v1706 = vsel %vm545, %v1702, 0.0
    %1707 = vadd.xlane.f32.xlu0 %v1706
    %v1708 = vpop.xlane.xlu0 %1707
    %v1709 = vrcp.pop %v1705
    %v1710 = vrcp.pop %v1708
    %v1711 = vmul.f32 %v1700, %v1709
    %v1712 = vmul.f32 %v1702, %v1710
    %1713 = vrot.lane.b32.xlu0 %v1529, 64
    %v1714 = vpop.permute.xlu0 %1713
    %v1717 = vsel %vm545, %v1711, 0
    %1719 = vmatprep.subr.mxu0 0.0
    %1720 = vmatpush1.msra.mxu0 %v1714
    %1721 = vmatprep.subr.mxu0 0.0
    %1722 = vmatpush1.msra.mxu0 0.0
    %1723 = vmatprep.subr.mxu0 0.0
    %1724 = vmatpush1.msra.mxu0 0.0
    %1725 = vmatprep.subr.mxu0 0.0
    %1726 = vmatpush1.msra.mxu0 0.0
    %1727 = vmatprep.subr.mxu0 0.0
    %1728 = vmatpush1.msra.mxu0 0.0
    %1729 = vmatprep.subr.mxu0 0.0
    %1730 = vmatpush1.msra.mxu0 0.0
    %1731 = vmatprep.subr.mxu0 0.0
    %1732 = vmatpush1.msra.mxu0 0.0
    %1733 = vmatprep.subr.mxu0 0.0
    %1734 = vmatpush1.msra.mxu0 0.0
    %1735 = vmatprep.subr.mxu0 0.0
    %1736 = vmatpush1.msra.mxu0 0.0
    %1737 = vmatprep.subr.mxu0 0.0
    %1738 = vmatpush1.msra.mxu0 0.0
    %1739 = vmatprep.subr.mxu0 0.0
    %1740 = vmatpush1.msra.mxu0 0.0
    %1741 = vmatprep.subr.mxu0 0.0
    %1742 = vmatpush1.msra.mxu0 0.0
    %1743 = vmatprep.subr.mxu0 0.0
    %1744 = vmatpush1.msra.mxu0 0.0
    %1745 = vmatprep.subr.mxu0 0.0
    %1746 = vmatpush1.msra.mxu0 0.0
    %1747 = vmatprep.subr.mxu0 0.0
    %1748 = vmatpush1.msra.mxu0 0.0
    %1749 = vmatprep.subr.mxu0 0.0
    %1750 = vmatpush1.msra.mxu0 0.0
    %1751 = vmatprep.subr.mxu0 0.0
    %1752 = vmatpush1.msra.mxu0 0.0
    %1753 = vmatprep.subr.mxu0 0.0
    %1754 = vmatpush1.msra.mxu0 0.0
    %1755 = vmatprep.subr.mxu0 0.0
    %1756 = vmatpush1.msra.mxu0 0.0
    %1757 = vmatprep.subr.mxu0 0.0
    %1758 = vmatpush1.msra.mxu0 0.0
    %1759 = vmatprep.subr.mxu0 0.0
    %1760 = vmatpush1.msra.mxu0 0.0
    %1761 = vmatprep.subr.mxu0 0.0
    %1762 = vmatpush1.msra.mxu0 0.0
    %1763 = vmatprep.subr.mxu0 0.0
    %1764 = vmatpush1.msra.mxu0 0.0
    %1765 = vmatprep.subr.mxu0 0.0
    %1766 = vmatpush1.msra.mxu0 0.0
    %1767 = vmatprep.subr.mxu0 0.0
    %1768 = vmatpush1.msra.mxu0 0.0
    %1769 = vmatprep.subr.mxu0 0.0
    %1770 = vmatpush1.msra.mxu0 0.0
    %1771 = vmatprep.subr.mxu0 0.0
    %1772 = vmatpush1.msra.mxu0 0.0
    %1773 = vmatprep.subr.mxu0 0.0
    %1774 = vmatpush1.msra.mxu0 0.0
    %1775 = vmatprep.subr.mxu0 0.0
    %1776 = vmatpush1.msra.mxu0 0.0
    %1777 = vmatprep.subr.mxu0 0.0
    %1778 = vmatpush1.msra.mxu0 0.0
    %1779 = vmatprep.subr.mxu0 0.0
    %1780 = vmatpush1.msra.mxu0 0.0
    %1781 = vmatprep.subr.mxu0 0.0
    %1782 = vmatpush1.msra.mxu0 0.0
    %1783 = vmatprep.mubr.f32.mxu0 0.0
    %1784 = vmatmul.mubr.f32.gmra.mrb[0].mxu0 %v1717
    %v1785 = vpop.f32.mrb[0].mxu0
    %v1786 = vadd.f32 0.0, %v1785
    %v1787 = vpop.f32.mrb[0].mxu0
    %1788 = vdwg.mxu0
    %1789 = vrot.lane.b32.xlu0 %v1534, 64
    %v1790 = vpop.permute.xlu0 %1789
    %v1793 = vsel %vm545, %v1712, 0
    %1795 = vmatprep.subr.mxu0 0.0
    %1796 = vmatpush1.msra.mxu0 %v1790
    %1797 = vmatprep.subr.mxu0 0.0
    %1798 = vmatpush1.msra.mxu0 0.0
    %1799 = vmatprep.subr.mxu0 0.0
    %1800 = vmatpush1.msra.mxu0 0.0
    %1801 = vmatprep.subr.mxu0 0.0
    %1802 = vmatpush1.msra.mxu0 0.0
    %1803 = vmatprep.subr.mxu0 0.0
    %1804 = vmatpush1.msra.mxu0 0.0
    %1805 = vmatprep.subr.mxu0 0.0
    %1806 = vmatpush1.msra.mxu0 0.0
    %1807 = vmatprep.subr.mxu0 0.0
    %1808 = vmatpush1.msra.mxu0 0.0
    %1809 = vmatprep.subr.mxu0 0.0
    %1810 = vmatpush1.msra.mxu0 0.0
    %1811 = vmatprep.subr.mxu0 0.0
    %1812 = vmatpush1.msra.mxu0 0.0
    %1813 = vmatprep.subr.mxu0 0.0
    %1814 = vmatpush1.msra.mxu0 0.0
    %1815 = vmatprep.subr.mxu0 0.0
    %1816 = vmatpush1.msra.mxu0 0.0
    %1817 = vmatprep.subr.mxu0 0.0
    %1818 = vmatpush1.msra.mxu0 0.0
    %1819 = vmatprep.subr.mxu0 0.0
    %1820 = vmatpush1.msra.mxu0 0.0
    %1821 = vmatprep.subr.mxu0 0.0
    %1822 = vmatpush1.msra.mxu0 0.0
    %1823 = vmatprep.subr.mxu0 0.0
    %1824 = vmatpush1.msra.mxu0 0.0
    %1825 = vmatprep.subr.mxu0 0.0
    %1826 = vmatpush1.msra.mxu0 0.0
    %1827 = vmatprep.subr.mxu0 0.0
    %1828 = vmatpush1.msra.mxu0 0.0
    %1829 = vmatprep.subr.mxu0 0.0
    %1830 = vmatpush1.msra.mxu0 0.0
    %1831 = vmatprep.subr.mxu0 0.0
    %1832 = vmatpush1.msra.mxu0 0.0
    %1833 = vmatprep.subr.mxu0 0.0
    %1834 = vmatpush1.msra.mxu0 0.0
    %1835 = vmatprep.subr.mxu0 0.0
    %1836 = vmatpush1.msra.mxu0 0.0
    %1837 = vmatprep.subr.mxu0 0.0
    %1838 = vmatpush1.msra.mxu0 0.0
    %1839 = vmatprep.subr.mxu0 0.0
    %1840 = vmatpush1.msra.mxu0 0.0
    %1841 = vmatprep.subr.mxu0 0.0
    %1842 = vmatpush1.msra.mxu0 0.0
    %1843 = vmatprep.subr.mxu0 0.0
    %1844 = vmatpush1.msra.mxu0 0.0
    %1845 = vmatprep.subr.mxu0 0.0
    %1846 = vmatpush1.msra.mxu0 0.0
    %1847 = vmatprep.subr.mxu0 0.0
    %1848 = vmatpush1.msra.mxu0 0.0
    %1849 = vmatprep.subr.mxu0 0.0
    %1850 = vmatpush1.msra.mxu0 0.0
    %1851 = vmatprep.subr.mxu0 0.0
    %1852 = vmatpush1.msra.mxu0 0.0
    %1853 = vmatprep.subr.mxu0 0.0
    %1854 = vmatpush1.msra.mxu0 0.0
    %1855 = vmatprep.subr.mxu0 0.0
    %1856 = vmatpush1.msra.mxu0 0.0
    %1857 = vmatprep.subr.mxu0 0.0
    %1858 = vmatpush1.msra.mxu0 0.0
    %1859 = vmatprep.mubr.f32.mxu0 0.0
    %1860 = vmatmul.mubr.f32.gmra.mrb[0].mxu0 %v1793
    %v1861 = vpop.f32.mrb[0].mxu0
    %v1862 = vadd.f32 0.0, %v1861
    %v1863 = vpop.f32.mrb[0].mxu0
    %1864 = vdwg.mxu0
    %1865 = vrot.lane.b32.xlu0 %v1529, 112
    %v1866 = vpop.permute.xlu0 %1865
    %1867 = vrot.lane.b32.xlu0 %v1529, 80
    %v1868 = vpop.permute.xlu0 %1867
    %v1869 = vsel %vm393, %v1866, 0
    %v1871 = vsel %vm393, %v1868, 0
    %1873 = vmatprep.subr.mxu0 0.0
    %1874 = vmatpush1.xpose.msra.mxu0 %v1871
    %1875 = vmatprep.subr.mxu0 0.0
    %1876 = vmatpush1.xpose.msra.mxu0 0.0
    %1877 = vmatprep.subr.mxu0 0.0
    %1878 = vmatpush1.xpose.msra.mxu0 0.0
    %1879 = vmatprep.subr.mxu0 0.0
    %1880 = vmatpush1.xpose.msra.mxu0 0.0
    %1881 = vmatprep.subr.mxu0 0.0
    %1882 = vmatpush1.xpose.msra.mxu0 0.0
    %1883 = vmatprep.subr.mxu0 0.0
    %1884 = vmatpush1.xpose.msra.mxu0 0.0
    %1885 = vmatprep.subr.mxu0 0.0
    %1886 = vmatpush1.xpose.msra.mxu0 0.0
    %1887 = vmatprep.subr.mxu0 0.0
    %1888 = vmatpush1.xpose.msra.mxu0 0.0
    %1889 = vmatprep.subr.mxu0 0.0
    %1890 = vmatpush1.xpose.msra.mxu0 0.0
    %1891 = vmatprep.subr.mxu0 0.0
    %1892 = vmatpush1.xpose.msra.mxu0 0.0
    %1893 = vmatprep.subr.mxu0 0.0
    %1894 = vmatpush1.xpose.msra.mxu0 0.0
    %1895 = vmatprep.subr.mxu0 0.0
    %1896 = vmatpush1.xpose.msra.mxu0 0.0
    %1897 = vmatprep.subr.mxu0 0.0
    %1898 = vmatpush1.xpose.msra.mxu0 0.0
    %1899 = vmatprep.subr.mxu0 0.0
    %1900 = vmatpush1.xpose.msra.mxu0 0.0
    %1901 = vmatprep.subr.mxu0 0.0
    %1902 = vmatpush1.xpose.msra.mxu0 0.0
    %1903 = vmatprep.subr.mxu0 0.0
    %1904 = vmatpush1.xpose.msra.mxu0 0.0
    %1905 = vmatprep.subr.mxu0 0.0
    %1906 = vmatpush1.xpose.msra.mxu0 0.0
    %1907 = vmatprep.subr.mxu0 0.0
    %1908 = vmatpush1.xpose.msra.mxu0 0.0
    %1909 = vmatprep.subr.mxu0 0.0
    %1910 = vmatpush1.xpose.msra.mxu0 0.0
    %1911 = vmatprep.subr.mxu0 0.0
    %1912 = vmatpush1.xpose.msra.mxu0 0.0
    %1913 = vmatprep.subr.mxu0 0.0
    %1914 = vmatpush1.xpose.msra.mxu0 0.0
    %1915 = vmatprep.subr.mxu0 0.0
    %1916 = vmatpush1.xpose.msra.mxu0 0.0
    %1917 = vmatprep.subr.mxu0 0.0
    %1918 = vmatpush1.xpose.msra.mxu0 0.0
    %1919 = vmatprep.subr.mxu0 0.0
    %1920 = vmatpush1.xpose.msra.mxu0 0.0
    %1921 = vmatprep.subr.mxu0 0.0
    %1922 = vmatpush1.xpose.msra.mxu0 0.0
    %1923 = vmatprep.subr.mxu0 0.0
    %1924 = vmatpush1.xpose.msra.mxu0 0.0
    %1925 = vmatprep.subr.mxu0 0.0
    %1926 = vmatpush1.xpose.msra.mxu0 0.0
    %1927 = vmatprep.subr.mxu0 0.0
    %1928 = vmatpush1.xpose.msra.mxu0 0.0
    %1929 = vmatprep.subr.mxu0 0.0
    %1930 = vmatpush1.xpose.msra.mxu0 0.0
    %1931 = vmatprep.subr.mxu0 0.0
    %1932 = vmatpush1.xpose.msra.mxu0 0.0
    %1933 = vmatprep.subr.mxu0 0.0
    %1934 = vmatpush1.xpose.msra.mxu0 0.0
    %1935 = vmatprep.subr.mxu0 0.0
    %1936 = vmatpush1.xpose.msra.mxu0 0.0
    %1937 = vmatprep.mubr.f32.mxu0 0.0
    %1938 = vmatmul.mubr.f32.gmra.mrb[0].mxu0 %v1869
    %v1939 = vpop.f32.mrb[0].mxu0
    %v1940 = vadd.f32 %v243, %v1939
    %v1941 = vpop.f32.mrb[0].mxu0
    %1942 = vdwg.mxu0
    %1943 = vrot.lane.b32.xlu0 %v1534, 112
    %v1944 = vpop.permute.xlu0 %1943
    %1945 = vrot.lane.b32.xlu0 %v1534, 80
    %v1946 = vpop.permute.xlu0 %1945
    %v1947 = vsel %vm393, %v1944, 0
    %v1949 = vsel %vm393, %v1946, 0
    %1951 = vmatprep.subr.mxu0 0.0
    %1952 = vmatpush1.xpose.msra.mxu0 %v1949
    %1953 = vmatprep.subr.mxu0 0.0
    %1954 = vmatpush1.xpose.msra.mxu0 0.0
    %1955 = vmatprep.subr.mxu0 0.0
    %1956 = vmatpush1.xpose.msra.mxu0 0.0
    %1957 = vmatprep.subr.mxu0 0.0
    %1958 = vmatpush1.xpose.msra.mxu0 0.0
    %1959 = vmatprep.subr.mxu0 0.0
    %1960 = vmatpush1.xpose.msra.mxu0 0.0
    %1961 = vmatprep.subr.mxu0 0.0
    %1962 = vmatpush1.xpose.msra.mxu0 0.0
    %1963 = vmatprep.subr.mxu0 0.0
    %1964 = vmatpush1.xpose.msra.mxu0 0.0
    %1965 = vmatprep.subr.mxu0 0.0
    %1966 = vmatpush1.xpose.msra.mxu0 0.0
    %1967 = vmatprep.subr.mxu0 0.0
    %1968 = vmatpush1.xpose.msra.mxu0 0.0
    %1969 = vmatprep.subr.mxu0 0.0
    %1970 = vmatpush1.xpose.msra.mxu0 0.0
    %1971 = vmatprep.subr.mxu0 0.0
    %1972 = vmatpush1.xpose.msra.mxu0 0.0
    %1973 = vmatprep.subr.mxu0 0.0
    %1974 = vmatpush1.xpose.msra.mxu0 0.0
    %1975 = vmatprep.subr.mxu0 0.0
    %1976 = vmatpush1.xpose.msra.mxu0 0.0
    %1977 = vmatprep.subr.mxu0 0.0
    %1978 = vmatpush1.xpose.msra.mxu0 0.0
    %1979 = vmatprep.subr.mxu0 0.0
    %1980 = vmatpush1.xpose.msra.mxu0 0.0
    %1981 = vmatprep.subr.mxu0 0.0
    %1982 = vmatpush1.xpose.msra.mxu0 0.0
    %1983 = vmatprep.subr.mxu0 0.0
    %1984 = vmatpush1.xpose.msra.mxu0 0.0
    %1985 = vmatprep.subr.mxu0 0.0
    %1986 = vmatpush1.xpose.msra.mxu0 0.0
    %1987 = vmatprep.subr.mxu0 0.0
    %1988 = vmatpush1.xpose.msra.mxu0 0.0
    %1989 = vmatprep.subr.mxu0 0.0
    %1990 = vmatpush1.xpose.msra.mxu0 0.0
    %1991 = vmatprep.subr.mxu0 0.0
    %1992 = vmatpush1.xpose.msra.mxu0 0.0
    %1993 = vmatprep.subr.mxu0 0.0
    %1994 = vmatpush1.xpose.msra.mxu0 0.0
    %1995 = vmatprep.subr.mxu0 0.0
    %1996 = vmatpush1.xpose.msra.mxu0 0.0
    %1997 = vmatprep.subr.mxu0 0.0
    %1998 = vmatpush1.xpose.msra.mxu0 0.0
    %1999 = vmatprep.subr.mxu0 0.0
    %2000 = vmatpush1.xpose.msra.mxu0 0.0
    %2001 = vmatprep.subr.mxu0 0.0
    %2002 = vmatpush1.xpose.msra.mxu0 0.0
    %2003 = vmatprep.subr.mxu0 0.0
    %2004 = vmatpush1.xpose.msra.mxu0 0.0
    %2005 = vmatprep.subr.mxu0 0.0
    %2006 = vmatpush1.xpose.msra.mxu0 0.0
    %2007 = vmatprep.subr.mxu0 0.0
    %2008 = vmatpush1.xpose.msra.mxu0 0.0
    %2009 = vmatprep.subr.mxu0 0.0
    %2010 = vmatpush1.xpose.msra.mxu0 0.0
    %2011 = vmatprep.subr.mxu0 0.0
    %2012 = vmatpush1.xpose.msra.mxu0 0.0
    %2013 = vmatprep.subr.mxu0 0.0
    %2014 = vmatpush1.xpose.msra.mxu0 0.0
    %2015 = vmatprep.mubr.f32.mxu0 0.0
    %2016 = vmatmul.mubr.f32.gmra.mrb[0].mxu0 %v1947
    %v2017 = vpop.f32.mrb[0].mxu0
    %v2018 = vadd.f32 %v247, %v2017
    %v2019 = vpop.f32.mrb[0].mxu0
    %2020 = vdwg.mxu0
    %v2021 = vsel %vm545, %v1940, -inf
    %2022 = vmax.xlane.f32.xlu0 %v2021
    %v2023 = vpop.xlane.xlu0 %2022
    %v2024 = vsel %vm545, %v2018, -inf
    %2025 = vmax.xlane.f32.xlu0 %v2024
    %v2026 = vpop.xlane.xlu0 %2025
    %v2027 = vsub.f32 %v1940, %v2023
    %v2028 = vsub.f32 %v2018, %v2026
    %v2029 = vmul.f32 %v2027, 1.442695
    %v2030 = vpow.pop %v2029
    %v2031 = vmul.f32 %v2028, 1.442695
    %v2032 = vpow.pop %v2031
    %v2033 = vsel %vm545, %v2030, 0.0
    %2034 = vadd.xlane.f32.xlu0 %v2033
    %v2035 = vpop.xlane.xlu0 %2034
    %v2036 = vsel %vm545, %v2032, 0.0
    %2037 = vadd.xlane.f32.xlu0 %v2036
    %v2038 = vpop.xlane.xlu0 %2037
    %v2039 = vrcp.pop %v2035
    %v2040 = vrcp.pop %v2038
    %v2041 = vmul.f32 %v2030, %v2039
    %v2042 = vmul.f32 %v2032, %v2040
    %2043 = vrot.lane.b32.xlu0 %v1529, 48
    %v2044 = vpop.permute.xlu0 %2043
    %v2047 = vsel %vm545, %v2041, 0
    %2049 = vmatprep.subr.mxu0 0.0
    %2050 = vmatpush1.msra.mxu0 %v2044
    %2051 = vmatprep.subr.mxu0 0.0
    %2052 = vmatpush1.msra.mxu0 0.0
    %2053 = vmatprep.subr.mxu0 0.0
    %2054 = vmatpush1.msra.mxu0 0.0
    %2055 = vmatprep.subr.mxu0 0.0
    %2056 = vmatpush1.msra.mxu0 0.0
    %2057 = vmatprep.subr.mxu0 0.0
    %2058 = vmatpush1.msra.mxu0 0.0
    %2059 = vmatprep.subr.mxu0 0.0
    %2060 = vmatpush1.msra.mxu0 0.0
    %2061 = vmatprep.subr.mxu0 0.0
    %2062 = vmatpush1.msra.mxu0 0.0
    %2063 = vmatprep.subr.mxu0 0.0
    %2064 = vmatpush1.msra.mxu0 0.0
    %2065 = vmatprep.subr.mxu0 0.0
    %2066 = vmatpush1.msra.mxu0 0.0
    %2067 = vmatprep.subr.mxu0 0.0
    %2068 = vmatpush1.msra.mxu0 0.0
    %2069 = vmatprep.subr.mxu0 0.0
    %2070 = vmatpush1.msra.mxu0 0.0
    %2071 = vmatprep.subr.mxu0 0.0
    %2072 = vmatpush1.msra.mxu0 0.0
    %2073 = vmatprep.subr.mxu0 0.0
    %2074 = vmatpush1.msra.mxu0 0.0
    %2075 = vmatprep.subr.mxu0 0.0
    %2076 = vmatpush1.msra.mxu0 0.0
    %2077 = vmatprep.subr.mxu0 0.0
    %2078 = vmatpush1.msra.mxu0 0.0
    %2079 = vmatprep.subr.mxu0 0.0
    %2080 = vmatpush1.msra.mxu0 0.0
    %2081 = vmatprep.subr.mxu0 0.0
    %2082 = vmatpush1.msra.mxu0 0.0
    %2083 = vmatprep.subr.mxu0 0.0
    %2084 = vmatpush1.msra.mxu0 0.0
    %2085 = vmatprep.subr.mxu0 0.0
    %2086 = vmatpush1.msra.mxu0 0.0
    %2087 = vmatprep.subr.mxu0 0.0
    %2088 = vmatpush1.msra.mxu0 0.0
    %2089 = vmatprep.subr.mxu0 0.0
    %2090 = vmatpush1.msra.mxu0 0.0
    %2091 = vmatprep.subr.mxu0 0.0
    %2092 = vmatpush1.msra.mxu0 0.0
    %2093 = vmatprep.subr.mxu0 0.0
    %2094 = vmatpush1.msra.mxu0 0.0
    %2095 = vmatprep.subr.mxu0 0.0
    %2096 = vmatpush1.msra.mxu0 0.0
    %2097 = vmatprep.subr.mxu0 0.0
    %2098 = vmatpush1.msra.mxu0 0.0
    %2099 = vmatprep.subr.mxu0 0.0
    %2100 = vmatpush1.msra.mxu0 0.0
    %2101 = vmatprep.subr.mxu0 0.0
    %2102 = vmatpush1.msra.mxu0 0.0
    %2103 = vmatprep.subr.mxu0 0.0
    %2104 = vmatpush1.msra.mxu0 0.0
    %2105 = vmatprep.subr.mxu0 0.0
    %2106 = vmatpush1.msra.mxu0 0.0
    %2107 = vmatprep.subr.mxu0 0.0
    %2108 = vmatpush1.msra.mxu0 0.0
    %2109 = vmatprep.subr.mxu0 0.0
    %2110 = vmatpush1.msra.mxu0 0.0
    %2111 = vmatprep.subr.mxu0 0.0
    %2112 = vmatpush1.msra.mxu0 0.0
    %2113 = vmatprep.mubr.f32.mxu0 0.0
    %2114 = vmatmul.mubr.f32.gmra.mrb[0].mxu0 %v2047
    %v2115 = vpop.f32.mrb[0].mxu0
    %v2116 = vadd.f32 0.0, %v2115
    %v2117 = vpop.f32.mrb[0].mxu0
    %2118 = vdwg.mxu0
    %2119 = vrot.lane.b32.xlu0 %v1534, 48
    %v2120 = vpop.permute.xlu0 %2119
    %v2123 = vsel %vm545, %v2042, 0
    %2125 = vmatprep.subr.mxu0 0.0
    %2126 = vmatpush1.msra.mxu0 %v2120
    %2127 = vmatprep.subr.mxu0 0.0
    %2128 = vmatpush1.msra.mxu0 0.0
    %2129 = vmatprep.subr.mxu0 0.0
    %2130 = vmatpush1.msra.mxu0 0.0
    %2131 = vmatprep.subr.mxu0 0.0
    %2132 = vmatpush1.msra.mxu0 0.0
    %2133 = vmatprep.subr.mxu0 0.0
    %2134 = vmatpush1.msra.mxu0 0.0
    %2135 = vmatprep.subr.mxu0 0.0
    %2136 = vmatpush1.msra.mxu0 0.0
    %2137 = vmatprep.subr.mxu0 0.0
    %2138 = vmatpush1.msra.mxu0 0.0
    %2139 = vmatprep.subr.mxu0 0.0
    %2140 = vmatpush1.msra.mxu0 0.0
    %2141 = vmatprep.subr.mxu0 0.0
    %2142 = vmatpush1.msra.mxu0 0.0
    %2143 = vmatprep.subr.mxu0 0.0
    %2144 = vmatpush1.msra.mxu0 0.0
    %2145 = vmatprep.subr.mxu0 0.0
    %2146 = vmatpush1.msra.mxu0 0.0
    %2147 = vmatprep.subr.mxu0 0.0
    %2148 = vmatpush1.msra.mxu0 0.0
    %2149 = vmatprep.subr.mxu0 0.0
    %2150 = vmatpush1.msra.mxu0 0.0
    %2151 = vmatprep.subr.mxu0 0.0
    %2152 = vmatpush1.msra.mxu0 0.0
    %2153 = vmatprep.subr.mxu0 0.0
    %2154 = vmatpush1.msra.mxu0 0.0
    %2155 = vmatprep.subr.mxu0 0.0
    %2156 = vmatpush1.msra.mxu0 0.0
    %2157 = vmatprep.subr.mxu0 0.0
    %2158 = vmatpush1.msra.mxu0 0.0
    %2159 = vmatprep.subr.mxu0 0.0
    %2160 = vmatpush1.msra.mxu0 0.0
    %2161 = vmatprep.subr.mxu0 0.0
    %2162 = vmatpush1.msra.mxu0 0.0
    %2163 = vmatprep.subr.mxu0 0.0
    %2164 = vmatpush1.msra.mxu0 0.0
    %2165 = vmatprep.subr.mxu0 0.0
    %2166 = vmatpush1.msra.mxu0 0.0
    %2167 = vmatprep.subr.mxu0 0.0
    %2168 = vmatpush1.msra.mxu0 0.0
    %2169 = vmatprep.subr.mxu0 0.0
    %2170 = vmatpush1.msra.mxu0 0.0
    %2171 = vmatprep.subr.mxu0 0.0
    %2172 = vmatpush1.msra.mxu0 0.0
    %2173 = vmatprep.subr.mxu0 0.0
    %2174 = vmatpush1.msra.mxu0 0.0
    %2175 = vmatprep.subr.mxu0 0.0
    %2176 = vmatpush1.msra.mxu0 0.0
    %2177 = vmatprep.subr.mxu0 0.0
    %2178 = vmatpush1.msra.mxu0 0.0
    %2179 = vmatprep.subr.mxu0 0.0
    %2180 = vmatpush1.msra.mxu0 0.0
    %2181 = vmatprep.subr.mxu0 0.0
    %2182 = vmatpush1.msra.mxu0 0.0
    %2183 = vmatprep.subr.mxu0 0.0
    %2184 = vmatpush1.msra.mxu0 0.0
    %2185 = vmatprep.subr.mxu0 0.0
    %2186 = vmatpush1.msra.mxu0 0.0
    %2187 = vmatprep.subr.mxu0 0.0
    %2188 = vmatpush1.msra.mxu0 0.0
    %2189 = vmatprep.mubr.f32.mxu0 0.0
    %2190 = vmatmul.mubr.f32.gmra.mrb[0].mxu0 %v2123
    %v2191 = vpop.f32.mrb[0].mxu0
    %v2192 = vadd.f32 0.0, %v2191
    %v2193 = vpop.f32.mrb[0].mxu0
    %2194 = vdwg.mxu0
    %2197 = vrot.lane.b32.xlu0 %v2116, 16
    %v2198 = vpop.permute.xlu0 %2197
    %2199 = vrot.lane.b32.xlu0 %v2192, 16
    %v2200 = vpop.permute.xlu0 %2199
    %v2203 = vsel %vm393, %v1786, %v2198
    %v2204 = vsel %vm393, %v1862, %v2200
    %s2205 = scalar_lea.vmem %s6, 32
    %v2206 = vld [vmem:[%s2205] sm:$0xff]
    %v2207 = vld [vmem:[%s2205 + $0x8] sm:$0xff]
    %v2208 = vld [vmem:[%s2205 + $0x10] sm:$0xff]
    %v2209 = vld [vmem:[%s2205 + $0x18] sm:$0xff]
    %s2210 = scalar_lea.vmem [#allocation11], 1
    %v2211 = vld [vmem:[%s2210] sm:$0x1]
    %v2213 = vlaneseq
    %v2214 = vshrl.u32 %v2213, 7
    %v2215 = vsub.s32 0, %v2214
    %v2216 = vrot.slane %v2211, %v2215
    %v2219 = vsel %vm254, %v2203, 0
    %v2222 = vsel %vm254, %v2204, 0
    %2224 = vmatprep.subr.mxu0 0.0
    %2225 = vmatpush1.msra.mxu0 %v2206
    %2226 = vmatprep.subr.mxu0 0.0
    %2227 = vmatpush1.msra.mxu0 %v2207
    %2228 = vmatprep.subr.mxu0 0.0
    %2229 = vmatpush1.msra.mxu0 %v2208
    %2230 = vmatprep.subr.mxu0 0.0
    %2231 = vmatpush1.msra.mxu0 %v2209
    %2232 = vmatprep.subr.mxu0 0.0
    %2233 = vmatpush1.msra.mxu0 0.0
    %2234 = vmatprep.subr.mxu0 0.0
    %2235 = vmatpush1.msra.mxu0 0.0
    %2236 = vmatprep.subr.mxu0 0.0
    %2237 = vmatpush1.msra.mxu0 0.0
    %2238 = vmatprep.subr.mxu0 0.0
    %2239 = vmatpush1.msra.mxu0 0.0
    %2240 = vmatprep.subr.mxu0 0.0
    %2241 = vmatpush1.msra.mxu0 0.0
    %2242 = vmatprep.subr.mxu0 0.0
    %2243 = vmatpush1.msra.mxu0 0.0
    %2244 = vmatprep.subr.mxu0 0.0
    %2245 = vmatpush1.msra.mxu0 0.0
    %2246 = vmatprep.subr.mxu0 0.0
    %2247 = vmatpush1.msra.mxu0 0.0
    %2248 = vmatprep.subr.mxu0 0.0
    %2249 = vmatpush1.msra.mxu0 0.0
    %2250 = vmatprep.subr.mxu0 0.0
    %2251 = vmatpush1.msra.mxu0 0.0
    %2252 = vmatprep.subr.mxu0 0.0
    %2253 = vmatpush1.msra.mxu0 0.0
    %2254 = vmatprep.subr.mxu0 0.0
    %2255 = vmatpush1.msra.mxu0 0.0
    %2256 = vmatprep.subr.mxu0 0.0
    %2257 = vmatpush1.msra.mxu0 0.0
    %2258 = vmatprep.subr.mxu0 0.0
    %2259 = vmatpush1.msra.mxu0 0.0
    %2260 = vmatprep.subr.mxu0 0.0
    %2261 = vmatpush1.msra.mxu0 0.0
    %2262 = vmatprep.subr.mxu0 0.0
    %2263 = vmatpush1.msra.mxu0 0.0
    %2264 = vmatprep.subr.mxu0 0.0
    %2265 = vmatpush1.msra.mxu0 0.0
    %2266 = vmatprep.subr.mxu0 0.0
    %2267 = vmatpush1.msra.mxu0 0.0
    %2268 = vmatprep.subr.mxu0 0.0
    %2269 = vmatpush1.msra.mxu0 0.0
    %2270 = vmatprep.subr.mxu0 0.0
    %2271 = vmatpush1.msra.mxu0 0.0
    %2272 = vmatprep.subr.mxu0 0.0
    %2273 = vmatpush1.msra.mxu0 0.0
    %2274 = vmatprep.subr.mxu0 0.0
    %2275 = vmatpush1.msra.mxu0 0.0
    %2276 = vmatprep.subr.mxu0 0.0
    %2277 = vmatpush1.msra.mxu0 0.0
    %2278 = vmatprep.subr.mxu0 0.0
    %2279 = vmatpush1.msra.mxu0 0.0
    %2280 = vmatprep.subr.mxu0 0.0
    %2281 = vmatpush1.msra.mxu0 0.0
    %2282 = vmatprep.subr.mxu0 0.0
    %2283 = vmatpush1.msra.mxu0 0.0
    %2284 = vmatprep.subr.mxu0 0.0
    %2285 = vmatpush1.msra.mxu0 0.0
    %2286 = vmatprep.subr.mxu0 0.0
    %2287 = vmatpush1.msra.mxu0 0.0
    %2288 = vmatprep.mubr.f32.mxu0 0.0
    %2289 = vmatmul.mubr.f32.gmra.mrb[0].mxu0 %v2219
    %v2290 = vpop.f32.mrb[0].mxu0
    %v2291 = vadd.f32 %v2216, %v2290
    %v2292 = vpop.f32.mrb[0].mxu0
    %2293 = vmatprep.mubr.f32.mxu0 0.0
    %2294 = vmatmul.mubr.f32.gmra.mrb[0].mxu0 %v2222
    %v2295 = vpop.f32.mrb[0].mxu0
    %v2296 = vadd.f32 %v2216, %v2295
    %v2297 = vpop.f32.mrb[0].mxu0
    %2298 = vdwg.mxu0
    %v2299 = vadd.f32 %v2291, %v1441
    %v2300 = vadd.f32 %v2296, %v1442
    %s2301 = scalar_lea.vmem [#allocation13], 1
    %v2302 = vld [vmem:[%s2301] sm:$0x1]
    %s2303 = scalar_lea.vmem [#allocation14], 1
    %v2304 = vld [vmem:[%s2303] sm:$0x1]
    %v2305 = vsel %vm254, %v2299, 0.0
    %2306 = vadd.xlane.f32.xlu0 %v2305
    %v2307 = vpop.xlane.xlu0 %2306
    %v2308 = vsel %vm254, %v2300, 0.0
    %2309 = vadd.xlane.f32.xlu0 %v2308
    %v2310 = vpop.xlane.xlu0 %2309
    %v2311 = vmul.f32 %v2307, %v261
    %v2312 = vmul.f32 %v2310, %v261
    %v2313 = vsub.f32 %v2299, %v2311
    %v2314 = vsub.f32 %v2300, %v2312
    %v2315 = vmul.f32 %v2313, %v2313
    %v2316 = vmul.f32 %v2314, %v2314
    %v2317 = vsel %vm254, %v2315, 0.0
    %2318 = vadd.xlane.f32.xlu0 %v2317
    %v2319 = vpop.xlane.xlu0 %2318
    %v2320 = vsel %vm254, %v2316, 0.0
    %2321 = vadd.xlane.f32.xlu0 %v2320
    %v2322 = vpop.xlane.xlu0 %2321
    %v2323 = vmul.f32 %v2319, %v261
    %v2324 = vmul.f32 %v2322, %v261
    %v2325 = vadd.f32 %v2323, 1e-12
    %v2326 = vadd.f32 %v2324, 1e-12
    %v2327 = vrsqrt.pop %v2325
    %v2328 = vrsqrt.pop %v2326
    %v2329 = vmul.f32 %v2313, %v2327
    %v2330 = vmul.f32 %v2314, %v2328
    %v2332 = vlaneseq
    %v2333 = vshrl.u32 %v2332, 7
    %v2334 = vsub.s32 0, %v2333
    %v2335 = vrot.slane %v2302, %v2334
    %v2337 = vmul.f32 %v2329, %v2335
    %v2338 = vmul.f32 %v2330, %v2335
    %v2340 = vlaneseq
    %v2341 = vshrl.u32 %v2340, 7
    %v2342 = vsub.s32 0, %v2341
    %v2343 = vrot.slane %v2304, %v2342
    %v2345 = vadd.f32 %v2337, %v2343
    %v2346 = vadd.f32 %v2338, %v2343
    %s2347 = scalar_lea.vmem %s10, 32
    %v2348 = vld [vmem:[%s2347] sm:$0xff]
    %v2349 = vld [vmem:[%s2347 + $0x8] sm:$0xff]
    %v2350 = vld [vmem:[%s2347 + $0x10] sm:$0xff]
    %v2351 = vld [vmem:[%s2347 + $0x18] sm:$0xff]
    %s2352 = scalar_lea.vmem [#allocation16], 1
    %v2353 = vld [vmem:[%s2352] sm:$0x1]
    %v2355 = vlaneseq
    %v2356 = vshrl.u32 %v2355, 7
    %v2357 = vsub.s32 0, %v2356
    %v2358 = vrot.slane %v2353, %v2357
    %v2361 = vsel %vm254, %v2345, 0
    %v2364 = vsel %vm254, %v2346, 0
    %2366 = vmatprep.subr.mxu0 0.0
    %2367 = vmatpush1.msra.mxu0 %v2348
    %2368 = vmatprep.subr.mxu0 0.0
    %2369 = vmatpush1.msra.mxu0 %v2349
    %2370 = vmatprep.subr.mxu0 0.0
    %2371 = vmatpush1.msra.mxu0 %v2350
    %2372 = vmatprep.subr.mxu0 0.0
    %2373 = vmatpush1.msra.mxu0 %v2351
    %2374 = vmatprep.subr.mxu0 0.0
    %2375 = vmatpush1.msra.mxu0 0.0
    %2376 = vmatprep.subr.mxu0 0.0
    %2377 = vmatpush1.msra.mxu0 0.0
    %2378 = vmatprep.subr.mxu0 0.0
    %2379 = vmatpush1.msra.mxu0 0.0
    %2380 = vmatprep.subr.mxu0 0.0
    %2381 = vmatpush1.msra.mxu0 0.0
    %2382 = vmatprep.subr.mxu0 0.0
    %2383 = vmatpush1.msra.mxu0 0.0
    %2384 = vmatprep.subr.mxu0 0.0
    %2385 = vmatpush1.msra.mxu0 0.0
    %2386 = vmatprep.subr.mxu0 0.0
    %2387 = vmatpush1.msra.mxu0 0.0
    %2388 = vmatprep.subr.mxu0 0.0
    %2389 = vmatpush1.msra.mxu0 0.0
    %2390 = vmatprep.subr.mxu0 0.0
    %2391 = vmatpush1.msra.mxu0 0.0
    %2392 = vmatprep.subr.mxu0 0.0
    %2393 = vmatpush1.msra.mxu0 0.0
    %2394 = vmatprep.subr.mxu0 0.0
    %2395 = vmatpush1.msra.mxu0 0.0
    %2396 = vmatprep.subr.mxu0 0.0
    %2397 = vmatpush1.msra.mxu0 0.0
    %2398 = vmatprep.subr.mxu0 0.0
    %2399 = vmatpush1.msra.mxu0 0.0
    %2400 = vmatprep.subr.mxu0 0.0
    %2401 = vmatpush1.msra.mxu0 0.0
    %2402 = vmatprep.subr.mxu0 0.0
    %2403 = vmatpush1.msra.mxu0 0.0
    %2404 = vmatprep.subr.mxu0 0.0
    %2405 = vmatpush1.msra.mxu0 0.0
    %2406 = vmatprep.subr.mxu0 0.0
    %2407 = vmatpush1.msra.mxu0 0.0
    %2408 = vmatprep.subr.mxu0 0.0
    %2409 = vmatpush1.msra.mxu0 0.0
    %2410 = vmatprep.subr.mxu0 0.0
    %2411 = vmatpush1.msra.mxu0 0.0
    %2412 = vmatprep.subr.mxu0 0.0
    %2413 = vmatpush1.msra.mxu0 0.0
    %2414 = vmatprep.subr.mxu0 0.0
    %2415 = vmatpush1.msra.mxu0 0.0
    %2416 = vmatprep.subr.mxu0 0.0
    %2417 = vmatpush1.msra.mxu0 0.0
    %2418 = vmatprep.subr.mxu0 0.0
    %2419 = vmatpush1.msra.mxu0 0.0
    %2420 = vmatprep.subr.mxu0 0.0
    %2421 = vmatpush1.msra.mxu0 0.0
    %2422 = vmatprep.subr.mxu0 0.0
    %2423 = vmatpush1.msra.mxu0 0.0
    %2424 = vmatprep.subr.mxu0 0.0
    %2425 = vmatpush1.msra.mxu0 0.0
    %2426 = vmatprep.subr.mxu0 0.0
    %2427 = vmatpush1.msra.mxu0 0.0
    %2428 = vmatprep.subr.mxu0 0.0
    %2429 = vmatpush1.msra.mxu0 0.0
    %2430 = vmatprep.mubr.f32.mxu0 0.0
    %2431 = vmatmul.mubr.f32.gmra.mrb[0].mxu0 %v2361
    %v2432 = vpop.f32.mrb[0].mxu0
    %v2433 = vadd.f32 %v2358, %v2432
    %v2434 = vpop.f32.mrb[0].mxu0
    %2435 = vmatprep.mubr.f32.mxu0 0.0
    %2436 = vmatmul.mubr.f32.gmra.mrb[0].mxu0 %v2364
    %v2437 = vpop.f32.mrb[0].mxu0
    %v2438 = vadd.f32 %v2358, %v2437
    %v2439 = vpop.f32.mrb[0].mxu0
    %2440 = vdwg.mxu0
    %v2441 = vmul.f32 %v2433, 0.5
    %v2442 = vmul.f32 %v2438, 0.5
    %v2443 = vmul.f32 %v2433, 0.70710677
    %v2444 = vmul.f32 %v2438, 0.70710677
    %v2445 = verf.f32.pop %v2443
    %v2446 = verf.f32.pop %v2444
    %v2447 = vadd.f32 %v2445, 1.0
    %v2448 = vadd.f32 %v2446, 1.0
    %v2449 = vmul.f32 %v2441, %v2447
    %v2450 = vmul.f32 %v2442, %v2448
    %s2451 = scalar_lea.vmem %s12, 64
    %v2452 = vld [vmem:[%s2451] sm:$0xff]
    %v2453 = vld [vmem:[%s2451 + $0x8] sm:$0xff]
    %v2454 = vld [vmem:[%s2451 + $0x10] sm:$0xff]
    %v2455 = vld [vmem:[%s2451 + $0x18] sm:$0xff]
    %v2456 = vld [vmem:[%s2451 + $0x20] sm:$0xff]
    %v2457 = vld [vmem:[%s2451 + $0x28] sm:$0xff]
    %v2458 = vld [vmem:[%s2451 + $0x30] sm:$0xff]
    %v2459 = vld [vmem:[%s2451 + $0x38] sm:$0xff]
    %s2460 = scalar_lea.vmem [#allocation17], 1
    %v2461 = vld [vmem:[%s2460] sm:$0x1]
    %v2463 = vlaneseq
    %v2464 = vshrl.u32 %v2463, 7
    %v2465 = vsub.s32 0, %v2464
    %v2466 = vrot.slane %v2461, %v2465
    %v2469 = vsel %vm1315, %v2449, 0
    %v2472 = vsel %vm1315, %v2450, 0
    %2474 = vmatprep.subr.mxu0 0.0
    %2475 = vmatpush1.msra.mxu0 %v2452
    %2476 = vmatprep.subr.mxu0 0.0
    %2477 = vmatpush1.msra.mxu0 %v2453
    %2478 = vmatprep.subr.mxu0 0.0
    %2479 = vmatpush1.msra.mxu0 %v2454
    %2480 = vmatprep.subr.mxu0 0.0
    %2481 = vmatpush1.msra.mxu0 %v2455
    %2482 = vmatprep.subr.mxu0 0.0
    %2483 = vmatpush1.msra.mxu0 %v2456
    %2484 = vmatprep.subr.mxu0 0.0
    %2485 = vmatpush1.msra.mxu0 %v2457
    %2486 = vmatprep.subr.mxu0 0.0
    %2487 = vmatpush1.msra.mxu0 %v2458
    %2488 = vmatprep.subr.mxu0 0.0
    %2489 = vmatpush1.msra.mxu0 %v2459
    %2490 = vmatprep.subr.mxu0 0.0
    %2491 = vmatpush1.msra.mxu0 0.0
    %2492 = vmatprep.subr.mxu0 0.0
    %2493 = vmatpush1.msra.mxu0 0.0
    %2494 = vmatprep.subr.mxu0 0.0
    %2495 = vmatpush1.msra.mxu0 0.0
    %2496 = vmatprep.subr.mxu0 0.0
    %2497 = vmatpush1.msra.mxu0 0.0
    %2498 = vmatprep.subr.mxu0 0.0
    %2499 = vmatpush1.msra.mxu0 0.0
    %2500 = vmatprep.subr.mxu0 0.0
    %2501 = vmatpush1.msra.mxu0 0.0
    %2502 = vmatprep.subr.mxu0 0.0
    %2503 = vmatpush1.msra.mxu0 0.0
    %2504 = vmatprep.subr.mxu0 0.0
    %2505 = vmatpush1.msra.mxu0 0.0
    %2506 = vmatprep.subr.mxu0 0.0
    %2507 = vmatpush1.msra.mxu0 0.0
    %2508 = vmatprep.subr.mxu0 0.0
    %2509 = vmatpush1.msra.mxu0 0.0
    %2510 = vmatprep.subr.mxu0 0.0
    %2511 = vmatpush1.msra.mxu0 0.0
    %2512 = vmatprep.subr.mxu0 0.0
    %2513 = vmatpush1.msra.mxu0 0.0
    %2514 = vmatprep.subr.mxu0 0.0
    %2515 = vmatpush1.msra.mxu0 0.0
    %2516 = vmatprep.subr.mxu0 0.0
    %2517 = vmatpush1.msra.mxu0 0.0
    %2518 = vmatprep.subr.mxu0 0.0
    %2519 = vmatpush1.msra.mxu0 0.0
    %2520 = vmatprep.subr.mxu0 0.0
    %2521 = vmatpush1.msra.mxu0 0.0
    %2522 = vmatprep.subr.mxu0 0.0
    %2523 = vmatpush1.msra.mxu0 0.0
    %2524 = vmatprep.subr.mxu0 0.0
    %2525 = vmatpush1.msra.mxu0 0.0
    %2526 = vmatprep.subr.mxu0 0.0
    %2527 = vmatpush1.msra.mxu0 0.0
    %2528 = vmatprep.subr.mxu0 0.0
    %2529 = vmatpush1.msra.mxu0 0.0
    %2530 = vmatprep.subr.mxu0 0.0
    %2531 = vmatpush1.msra.mxu0 0.0
    %2532 = vmatprep.subr.mxu0 0.0
    %2533 = vmatpush1.msra.mxu0 0.0
    %2534 = vmatprep.subr.mxu0 0.0
    %2535 = vmatpush1.msra.mxu0 0.0
    %2536 = vmatprep.subr.mxu0 0.0
    %2537 = vmatpush1.msra.mxu0 0.0
    %2538 = vmatprep.mubr.f32.mxu0 0.0
    %2539 = vmatmul.mubr.f32.gmra.mrb[0].mxu0 %v2469
    %v2540 = vpop.f32.mrb[0].mxu0
    %v2541 = vadd.f32 %v2466, %v2540
    %v2542 = vpop.f32.mrb[0].mxu0
    %2543 = vmatprep.mubr.f32.mxu0 0.0
    %2544 = vmatmul.mubr.f32.gmra.mrb[0].mxu0 %v2472
    %v2545 = vpop.f32.mrb[0].mxu0
    %v2546 = vadd.f32 %v2466, %v2545
    %v2547 = vpop.f32.mrb[0].mxu0
    %2548 = vdwg.mxu0
    %v2549 = vadd.f32 %v2541, %v2345
    %v2550 = vadd.f32 %v2546, %v2346
    %s2551 = scalar_lea.vmem [#allocation19], 1
    %v2552 = vld [vmem:[%s2551] sm:$0x1]
    %s2553 = scalar_lea.vmem [#allocation20], 1
    %v2554 = vld [vmem:[%s2553] sm:$0x1]
    %v2555 = vsel %vm254, %v2549, 0.0
    %2556 = vadd.xlane.f32.xlu0 %v2555
    %v2557 = vpop.xlane.xlu0 %2556
    %v2558 = vsel %vm254, %v2550, 0.0
    %2559 = vadd.xlane.f32.xlu0 %v2558
    %v2560 = vpop.xlane.xlu0 %2559
    %v2561 = vmul.f32 %v2557, %v261
    %v2562 = vmul.f32 %v2560, %v261
    %v2563 = vsub.f32 %v2549, %v2561
    %v2564 = vsub.f32 %v2550, %v2562
    %v2565 = vmul.f32 %v2563, %v2563
    %v2566 = vmul.f32 %v2564, %v2564
    %v2567 = vsel %vm254, %v2565, 0.0
    %2568 = vadd.xlane.f32.xlu0 %v2567
    %v2569 = vpop.xlane.xlu0 %2568
    %v2570 = vsel %vm254, %v2566, 0.0
    %2571 = vadd.xlane.f32.xlu0 %v2570
    %v2572 = vpop.xlane.xlu0 %2571
    %v2573 = vmul.f32 %v2569, %v261
    %v2574 = vmul.f32 %v2572, %v261
    %v2575 = vadd.f32 %v2573, 1e-12
    %v2576 = vadd.f32 %v2574, 1e-12
    %v2577 = vrsqrt.pop %v2575
    %v2578 = vrsqrt.pop %v2576
    %v2579 = vmul.f32 %v2563, %v2577
    %v2580 = vmul.f32 %v2564, %v2578
    %v2582 = vlaneseq
    %v2583 = vshrl.u32 %v2582, 7
    %v2584 = vsub.s32 0, %v2583
    %v2585 = vrot.slane %v2552, %v2584
    %v2587 = vmul.f32 %v2579, %v2585
    %v2588 = vmul.f32 %v2580, %v2585
    %v2590 = vlaneseq
    %v2591 = vshrl.u32 %v2590, 7
    %v2592 = vsub.s32 0, %v2591
    %v2593 = vrot.slane %v2554, %v2592
    %v2595 = vadd.f32 %v2587, %v2593
    %v2596 = vadd.f32 %v2588, %v2593
    %v2597 = vld [vmem:[%s16] sm:$0xff]
    %v2598 = vld [vmem:[%s16 + $0x8] sm:$0xff]
    %v2599 = vld [vmem:[%s16 + $0x10] sm:$0xff]
    %v2600 = vld [vmem:[%s16 + $0x18] sm:$0xff]
    %v2601 = vld [vmem:[#allocation22] sm:$0x1]
    %v2603 = vlaneseq
    %v2604 = vshrl.u32 %v2603, 7
    %v2605 = vsub.s32 0, %v2604
    %v2606 = vrot.slane %v2601, %v2605
    %v2610 = vrot.slane %v2596, 7
    %vm2611 = vcmask 1041409
    %v2612 = vsel %vm2611, %v2610, %v2595
    %v2613 = vsel %vm254, %v2612, 0
    %2615 = vmatprep.subr.mxu0 0.0
    %2616 = vmatpush1.msra.mxu0 %v2597
    %2617 = vmatprep.subr.mxu0 0.0
    %2618 = vmatpush1.msra.mxu0 %v2598
    %2619 = vmatprep.subr.mxu0 0.0
    %2620 = vmatpush1.msra.mxu0 %v2599
    %2621 = vmatprep.subr.mxu0 0.0
    %2622 = vmatpush1.msra.mxu0 %v2600
    %2623 = vmatprep.subr.mxu0 0.0
    %2624 = vmatpush1.msra.mxu0 0.0
    %2625 = vmatprep.subr.mxu0 0.0
    %2626 = vmatpush1.msra.mxu0 0.0
    %2627 = vmatprep.subr.mxu0 0.0
    %2628 = vmatpush1.msra.mxu0 0.0
    %2629 = vmatprep.subr.mxu0 0.0
    %2630 = vmatpush1.msra.mxu0 0.0
    %2631 = vmatprep.subr.mxu0 0.0
    %2632 = vmatpush1.msra.mxu0 0.0
    %2633 = vmatprep.subr.mxu0 0.0
    %2634 = vmatpush1.msra.mxu0 0.0
    %2635 = vmatprep.subr.mxu0 0.0
    %2636 = vmatpush1.msra.mxu0 0.0
    %2637 = vmatprep.subr.mxu0 0.0
    %2638 = vmatpush1.msra.mxu0 0.0
    %2639 = vmatprep.subr.mxu0 0.0
    %2640 = vmatpush1.msra.mxu0 0.0
    %2641 = vmatprep.subr.mxu0 0.0
    %2642 = vmatpush1.msra.mxu0 0.0
    %2643 = vmatprep.subr.mxu0 0.0
    %2644 = vmatpush1.msra.mxu0 0.0
    %2645 = vmatprep.subr.mxu0 0.0
    %2646 = vmatpush1.msra.mxu0 0.0
    %2647 = vmatprep.subr.mxu0 0.0
    %2648 = vmatpush1.msra.mxu0 0.0
    %2649 = vmatprep.subr.mxu0 0.0
    %2650 = vmatpush1.msra.mxu0 0.0
    %2651 = vmatprep.subr.mxu0 0.0
    %2652 = vmatpush1.msra.mxu0 0.0
    %2653 = vmatprep.subr.mxu0 0.0
    %2654 = vmatpush1.msra.mxu0 0.0
    %2655 = vmatprep.subr.mxu0 0.0
    %2656 = vmatpush1.msra.mxu0 0.0
    %2657 = vmatprep.subr.mxu0 0.0
    %2658 = vmatpush1.msra.mxu0 0.0
    %2659 = vmatprep.subr.mxu0 0.0
    %2660 = vmatpush1.msra.mxu0 0.0
    %2661 = vmatprep.subr.mxu0 0.0
    %2662 = vmatpush1.msra.mxu0 0.0
    %2663 = vmatprep.subr.mxu0 0.0
    %2664 = vmatpush1.msra.mxu0 0.0
    %2665 = vmatprep.subr.mxu0 0.0
    %2666 = vmatpush1.msra.mxu0 0.0
    %2667 = vmatprep.subr.mxu0 0.0
    %2668 = vmatpush1.msra.mxu0 0.0
    %2669 = vmatprep.subr.mxu0 0.0
    %2670 = vmatpush1.msra.mxu0 0.0
    %2671 = vmatprep.subr.mxu0 0.0
    %2672 = vmatpush1.msra.mxu0 0.0
    %2673 = vmatprep.subr.mxu0 0.0
    %2674 = vmatpush1.msra.mxu0 0.0
    %2675 = vmatprep.subr.mxu0 0.0
    %2676 = vmatpush1.msra.mxu0 0.0
    %2677 = vmatprep.subr.mxu0 0.0
    %2678 = vmatpush1.msra.mxu0 0.0
    %2679 = vmatprep.mubr.f32.mxu0 0.0
    %2680 = vmatmul.mubr.f32.gmra.mrb[0].mxu0 %v2613
    %v2681 = vpop.f32.mrb[0].mxu0
    %v2682 = vadd.f32 %v2606, %v2681
    %v2683 = vpop.f32.mrb[0].mxu0
    %2684 = vdwg.mxu0
    %v2685 = vtanh.pop %v2682
    %v2686 = vld [vmem:[%s18] sm:$0xff]
    %v2687 = vld [vmem:[%s18 + $0x8] sm:$0xff]
    %v2688 = vld [vmem:[%s18 + $0x10] sm:$0xff]
    %v2689 = vld [vmem:[%s18 + $0x18] sm:$0xff]
    %v2690 = vld [vmem:[%s19] sm:$0x1]
    %v2692 = vlaneseq
    %v2693 = vshrl.u32 %v2692, 7
    %v2694 = vsub.s32 0, %v2693
    %v2695 = vrot.slane %v2690, %v2694
    %v2698 = vsel %vm254, %v2685, 0
    %2700 = vmatprep.subr.mxu0 0.0
    %2701 = vmatpush1.msra.mxu0 %v2686
    %2702 = vmatprep.subr.mxu0 0.0
    %2703 = vmatpush1.msra.mxu0 %v2687
    %2704 = vmatprep.subr.mxu0 0.0
    %2705 = vmatpush1.msra.mxu0 %v2688
    %2706 = vmatprep.subr.mxu0 0.0
    %2707 = vmatpush1.msra.mxu0 %v2689
    %2708 = vmatprep.subr.mxu0 0.0
    %2709 = vmatpush1.msra.mxu0 0.0
    %2710 = vmatprep.subr.mxu0 0.0
    %2711 = vmatpush1.msra.mxu0 0.0
    %2712 = vmatprep.subr.mxu0 0.0
    %2713 = vmatpush1.msra.mxu0 0.0
    %2714 = vmatprep.subr.mxu0 0.0
    %2715 = vmatpush1.msra.mxu0 0.0
    %2716 = vmatprep.subr.mxu0 0.0
    %2717 = vmatpush1.msra.mxu0 0.0
    %2718 = vmatprep.subr.mxu0 0.0
    %2719 = vmatpush1.msra.mxu0 0.0
    %2720 = vmatprep.subr.mxu0 0.0
    %2721 = vmatpush1.msra.mxu0 0.0
    %2722 = vmatprep.subr.mxu0 0.0
    %2723 = vmatpush1.msra.mxu0 0.0
    %2724 = vmatprep.subr.mxu0 0.0
    %2725 = vmatpush1.msra.mxu0 0.0
    %2726 = vmatprep.subr.mxu0 0.0
    %2727 = vmatpush1.msra.mxu0 0.0
    %2728 = vmatprep.subr.mxu0 0.0
    %2729 = vmatpush1.msra.mxu0 0.0
    %2730 = vmatprep.subr.mxu0 0.0
    %2731 = vmatpush1.msra.mxu0 0.0
    %2732 = vmatprep.subr.mxu0 0.0
    %2733 = vmatpush1.msra.mxu0 0.0
    %2734 = vmatprep.subr.mxu0 0.0
    %2735 = vmatpush1.msra.mxu0 0.0
    %2736 = vmatprep.subr.mxu0 0.0
    %2737 = vmatpush1.msra.mxu0 0.0
    %2738 = vmatprep.subr.mxu0 0.0
    %2739 = vmatpush1.msra.mxu0 0.0
    %2740 = vmatprep.subr.mxu0 0.0
    %2741 = vmatpush1.msra.mxu0 0.0
    %2742 = vmatprep.subr.mxu0 0.0
    %2743 = vmatpush1.msra.mxu0 0.0
    %2744 = vmatprep.subr.mxu0 0.0
    %2745 = vmatpush1.msra.mxu0 0.0
    %2746 = vmatprep.subr.mxu0 0.0
    %2747 = vmatpush1.msra.mxu0 0.0
    %2748 = vmatprep.subr.mxu0 0.0
    %2749 = vmatpush1.msra.mxu0 0.0
    %2750 = vmatprep.subr.mxu0 0.0
    %2751 = vmatpush1.msra.mxu0 0.0
    %2752 = vmatprep.subr.mxu0 0.0
    %2753 = vmatpush1.msra.mxu0 0.0
    %2754 = vmatprep.subr.mxu0 0.0
    %2755 = vmatpush1.msra.mxu0 0.0
    %2756 = vmatprep.subr.mxu0 0.0
    %2757 = vmatpush1.msra.mxu0 0.0
    %2758 = vmatprep.subr.mxu0 0.0
    %2759 = vmatpush1.msra.mxu0 0.0
    %2760 = vmatprep.subr.mxu0 0.0
    %2761 = vmatpush1.msra.mxu0 0.0
    %2762 = vmatprep.subr.mxu0 0.0
    %2763 = vmatpush1.msra.mxu0 0.0
    %2764 = vmatprep.mubr.f32.mxu0 0.0
    %2765 = vmatmul.mubr.f32.gmra.mrb[0].mxu0 %v2698
    %v2766 = vpop.f32.mrb[0].mxu0
    %v2767 = vadd.f32 %v2695, %v2766
    %v2768 = vpop.f32.mrb[0].mxu0
    %2769 = vdwg.mxu0
    %vm2770 = vcmask 17408
    %v2771 = vsel %vm2770, %v2767, -inf
    %2772 = vmax.xlane.f32.xlu0 %v2771
    %v2773 = vpop.xlane.xlu0 %2772
    %v2774 = vsub.f32 %v2767, %v2773
    %v2775 = vmul.f32 %v2774, 1.442695
    %v2776 = vpow.pop %v2775
    %v2777 = vsel %vm2770, %v2776, 0.0
    %2778 = vadd.xlane.f32.xlu0 %v2777
    %v2779 = vpop.xlane.xlu0 %2778
    %v2780 = vrcp.pop %v2779
    %v2781 = vmul.f32 %v2776, %v2780
    %2782 = vst.msk [vmem:[#allocation23] sm:$0x3] %vm2770, %v2781
    // Predicated region
    $region134: #{tpu_custom_call.1} parent=1 // pred_check
      _
    $region135: #{tpu_custom_call.1} parent=1 // pred_check_branch
      %2784 = sbr.rel (0) target = $region137
    $region136: #{tpu_custom_call.1} parent=1 // pred_region
      %s2786 = ssub.s32 32, 32
      %2787 = vsyncadd [#allocation4], %s2786
      %s2789 = sshll.u32 [#allocation23], 4
      %s2790 = int_to_ptr.vmem [resolvable:$true] %s2789
      %2792 = dma.vmem_to_hbm [thread:$0]  %s2790, 32, %s20, [#allocation4]
    $region137: #{tpu_custom_call.1} parent=1 // pred_fallthru
      _
    // Predicated region
    $region138: #{tpu_custom_call.1} parent=1 // pred_check
      _
    $region139: #{tpu_custom_call.1} parent=1 // pred_check_branch
      %2794 = sbr.rel (0) target = $region141
    $region140: #{tpu_custom_call.1} parent=1 // pred_region
      %2795 = dma.done [#allocation4], 32
    $region141: #{tpu_custom_call.1} parent=1 // pred_fallthru
      _
    %2796 = vsyncpa [#allocation3], 1
    %2797 = vsyncpa [#allocation6], 1
    %2798 = vsyncpa [#allocation9], 1
    %2799 = vsyncpa [#allocation12], 1
    %2800 = vsyncpa [#allocation15], 1
    %2801 = vsyncpa [#allocation18], 1
    %2802 = vsyncpa [#allocation21], 1
    %2803 = vsyncpa [#allocation4], 1

</llo_original>
